<compile_context>
chip_gen: v5e
topology: v5e:2x2
jax: 0.10.0
libtpu: 0.0.40
codegen_flags: <defaults>
</compile_context>

<pallas_src>
import functools

import jax
import jax.numpy as jnp
from jax.experimental import pallas as pl
from jax.experimental.pallas import tpu as pltpu

EPS = 1e-5
_LANE = 128
_VMEM_LIMIT = 48 * 1024 * 1024


def _rup(n, m=_LANE):
    return ((n + m - 1) // m) * m


def _row_tile(hw, target=512):
    if hw <= target:
        return hw
    for t in range(target, 7, -8):
        if hw % t == 0:
            return t
    return hw


def _cp(*sems):
    return pltpu.CompilerParams(dimension_semantics=tuple(sems),
                                vmem_limit_bytes=_VMEM_LIMIT)


def _pad_to(a, shape):
    pads = [(0, s - d) for d, s in zip(a.shape, shape)]
    if all(p == (0, 0) for p in pads):
        return a
    return jnp.pad(a, pads)


# ----------------------------- Pallas kernels ------------------------------


def _conv1x1_kernel(x_ref, w_ref, o_ref, ssum_ref, ssq_ref):
    # 1x1 conv (matmul) on one row tile + per-channel raw sum / sumsq (f32).
    t = jnp.dot(x_ref[0], w_ref[...], preferred_element_type=jnp.float32)
    o_ref[0] = t.astype(o_ref.dtype)
    ssum_ref[0, 0] = jnp.sum(t, axis=0, keepdims=True)
    ssq_ref[0, 0] = jnp.sum(t * t, axis=0, keepdims=True)


def _bnrelu_conv1x1_kernel(x_ref, sc_ref, sh_ref, w_ref, o_ref, ssum_ref, ssq_ref):
    # (BN-affine + ReLU of previous stage, f32) -> 1x1 conv + raw stats.
    x = x_ref[0].astype(jnp.float32)
    xn = jnp.maximum(sc_ref[...] * x + sh_ref[...], 0.0)
    t = jnp.dot(xn.astype(w_ref.dtype), w_ref[...],
                preferred_element_type=jnp.float32)
    o_ref[0] = t.astype(o_ref.dtype)
    ssum_ref[0, 0] = jnp.sum(t, axis=0, keepdims=True)
    ssq_ref[0, 0] = jnp.sum(t * t, axis=0, keepdims=True)


def _bnrelu_conv3x3_kernel(wd, t_ref, sc_ref, sh_ref, w2_ref, m_ref,
                           o_ref, ssum_ref, ssq_ref):
    # (BN-affine + ReLU) -> 3x3 conv (pad=1, stride=1) on one whole image.
    # The spatial grid stays flattened [H*W, C]; tap (ky, kx) is a roll of the
    # activations by (ky-1)*W + (kx-1) plus a border mask, then a [C, C] matmul.
    # TODO(synk): for very large H*W, tile over row strips with halo DMA instead
    # of whole-image blocks.
    hw = t_ref.shape[1]
    co = w2_ref.shape[2]
    x = t_ref[0].astype(jnp.float32)
    xn = jnp.maximum(sc_ref[...] * x + sh_ref[...], 0.0)          # [HW, Ci] f32
    acc = jnp.zeros((hw, co), jnp.float32)
    for k in range(9):
        sy, sx = k // 3 - 1, k % 3 - 1
        d = sy * wd + sx
        src = xn if d == 0 else pltpu.roll(xn, shift=(-d) % hw, axis=0)
        src = src * m_ref[k]                                       # zero out-of-image taps
        acc = acc + jnp.dot(src.astype(w2_ref.dtype), w2_ref[k],
                            preferred_element_type=jnp.float32)
    o_ref[0] = acc.astype(o_ref.dtype)
    ssum_ref[0] = jnp.sum(acc, axis=0, keepdims=True)
    ssq_ref[0] = jnp.sum(acc * acc, axis=0, keepdims=True)


def _se_kernel(p_ref, sc_ref, sh_ref, fc1_ref, fc2_ref, o_ref):
    # SE gate from per-batch pooled *raw* conv3 sums (bn3 is a per-channel affine).
    y = sc_ref[...] * p_ref[...] + sh_ref[...]
    h = jnp.maximum(jnp.dot(y, fc1_ref[...], preferred_element_type=jnp.float32), 0.0)
    z = jnp.dot(h, fc2_ref[...], preferred_element_type=jnp.float32)
    o_ref[...] = 1.0 / (1.0 + jnp.exp(-z))


def _finalize_kernel(t_ref, r_ref, s_ref, sc_ref, sh_ref, o_ref):
    # bn3-normalize * SE-scale + residual + ReLU, streamed over row tiles.
    t = t_ref[0].astype(jnp.float32)
    y = (sc_ref[...] * t + sh_ref[...]) * s_ref[0]
    o_ref[0] = jnp.maximum(y + r_ref[0], 0.0)


# ------------------------------ pallas_call wrappers ------------------------


def _conv1x1(x, w, tr):
    b, hw, ci = x.shape
    co = w.shape[1]
    nj = hw // tr
    return pl.pallas_call(
        _conv1x1_kernel,
        out_shape=(jax.ShapeDtypeStruct((b, hw, co), x.dtype),
                   jax.ShapeDtypeStruct((b, nj, 1, co), jnp.float32),
                   jax.ShapeDtypeStruct((b, nj, 1, co), jnp.float32)),
        grid=(b, nj),
        in_specs=[pl.BlockSpec((1, tr, ci), lambda i, j: (i, j, 0)),
                  pl.BlockSpec((ci, co), lambda i, j: (0, 0))],
        out_specs=(pl.BlockSpec((1, tr, co), lambda i, j: (i, j, 0)),
                   pl.BlockSpec((1, 1, 1, co), lambda i, j: (i, j, 0, 0)),
                   pl.BlockSpec((1, 1, 1, co), lambda i, j: (i, j, 0, 0))),
        compiler_params=_cp("parallel", "parallel"),
    )(x, w)


def _bnrelu_conv1x1(x, sc, sh, w, tr):
    b, hw, ci = x.shape
    co = w.shape[1]
    nj = hw // tr
    return pl.pallas_call(
        _bnrelu_conv1x1_kernel,
        out_shape=(jax.ShapeDtypeStruct((b, hw, co), x.dtype),
                   jax.ShapeDtypeStruct((b, nj, 1, co), jnp.float32),
                   jax.ShapeDtypeStruct((b, nj, 1, co), jnp.float32)),
        grid=(b, nj),
        in_specs=[pl.BlockSpec((1, tr, ci), lambda i, j: (i, j, 0)),
                  pl.BlockSpec((1, ci), lambda i, j: (0, 0)),
                  pl.BlockSpec((1, ci), lambda i, j: (0, 0)),
                  pl.BlockSpec((ci, co), lambda i, j: (0, 0))],
        out_specs=(pl.BlockSpec((1, tr, co), lambda i, j: (i, j, 0)),
                   pl.BlockSpec((1, 1, 1, co), lambda i, j: (i, j, 0, 0)),
                   pl.BlockSpec((1, 1, 1, co), lambda i, j: (i, j, 0, 0))),
        compiler_params=_cp("parallel", "parallel"),
    )(x, sc, sh, w)


def _bnrelu_conv3x3(x, sc, sh, w2, masks, wd):
    b, hw, ci = x.shape
    co = w2.shape[2]
    return pl.pallas_call(
        functools.partial(_bnrelu_conv3x3_kernel, wd),
        out_shape=(jax.ShapeDtypeStruct((b, hw, co), x.dtype),
                   jax.ShapeDtypeStruct((b, 1, co), jnp.float32),
                   jax.ShapeDtypeStruct((b, 1, co), jnp.float32)),
        grid=(b,),
        in_specs=[pl.BlockSpec((1, hw, ci), lambda i: (i, 0, 0)),
                  pl.BlockSpec((1, ci), lambda i: (0, 0)),
                  pl.BlockSpec((1, ci), lambda i: (0, 0)),
                  pl.BlockSpec((9, ci, co), lambda i: (0, 0, 0)),
                  pl.BlockSpec((9, hw, 1), lambda i: (0, 0, 0))],
        out_specs=(pl.BlockSpec((1, hw, co), lambda i: (i, 0, 0)),
                   pl.BlockSpec((1, 1, co), lambda i: (i, 0, 0)),
                   pl.BlockSpec((1, 1, co), lambda i: (i, 0, 0))),
        compiler_params=_cp("parallel"),
    )(x, sc, sh, w2, masks)


def _se_scale(pooled, sc3, sh3, fc1, fc2):
    b, co = pooled.shape
    cr = fc1.shape[1]
    return pl.pallas_call(
        _se_kernel,
        out_shape=jax.ShapeDtypeStruct((b, co), jnp.float32),
        grid=(1,),
        in_specs=[pl.BlockSpec((b, co), lambda i: (0, 0)),
                  pl.BlockSpec((1, co), lambda i: (0, 0)),
                  pl.BlockSpec((1, co), lambda i: (0, 0)),
                  pl.BlockSpec((co, cr), lambda i: (0, 0)),
                  pl.BlockSpec((cr, co), lambda i: (0, 0))],
        out_specs=pl.BlockSpec((b, co), lambda i: (0, 0)),
        compiler_params=_cp("arbitrary"),
    )(pooled, sc3, sh3, fc1, fc2)


def _finalize(t, res, s_se, sc3, sh3, tr):
    b, hw, co = t.shape
    nj = hw // tr
    return pl.pallas_call(
        _finalize_kernel,
        out_shape=jax.ShapeDtypeStruct((b, hw, co), jnp.float32),
        grid=(b, nj),
        in_specs=[pl.BlockSpec((1, tr, co), lambda i, j: (i, j, 0)),
                  pl.BlockSpec((1, tr, co), lambda i, j: (i, j, 0)),
                  pl.BlockSpec((1, 1, co), lambda i, j: (i, 0, 0)),
                  pl.BlockSpec((1, co), lambda i, j: (0, 0)),
                  pl.BlockSpec((1, co), lambda i, j: (0, 0))],
        out_specs=pl.BlockSpec((1, tr, co), lambda i, j: (i, j, 0)),
        input_output_aliases={1: 0},   # write the result in place over the residual
        compiler_params=_cp("parallel", "parallel"),
    )(t, res, s_se, sc3, sh3)


# ------------------------------ JAX glue -------------------------------------


def _bn_affine(ssum, ssq, count, gamma, beta):
    # Fold training-mode BN (batch stats, biased var) into per-channel scale/shift.
    c = ssum.shape[-1]
    s = jnp.sum(ssum.reshape(-1, c), axis=0)
    q = jnp.sum(ssq.reshape(-1, c), axis=0)
    mean = s / count
    var = jnp.maximum(q / count - mean * mean, 0.0)
    scale = gamma * jax.lax.rsqrt(var + EPS)
    shift = beta - mean * scale
    return scale.reshape(1, c), shift.reshape(1, c)


@functools.partial(jax.jit, static_argnames=("compute_dtype",))
def new_bottleneck_forward(x_nchw, params, compute_dtype=jnp.bfloat16):
    cdt = jnp.dtype(compute_dtype)
    b, cin, h, wd = x_nchw.shape
    planes = params["w1"].shape[0]
    cout = 4 * planes
    assert cin == cout, "downsample=None requires inplanes == planes * expansion"
    hw = h * wd
    cip, cmid, cop = _rup(cin), _rup(planes), _rup(cout)
    crp = _rup(params["fc1"].shape[0])
    tr = _row_tile(hw)
    count = float(b * hw)

    # layout: NCHW -> [B, H*W, C], channels zero-padded to a lane multiple (128)
    x_flat = jnp.transpose(x_nchw, (0, 2, 3, 1)).astype(jnp.float32).reshape(b, hw, cin)
    x_res = _pad_to(x_flat, (b, hw, cop))          # f32 residual (aliased to output)
    x_c = x_res.astype(cdt)                        # conv1 input (cip == cop)

    # weights / BN params, transposed + padded once (zeros keep padded channels at 0)
    w1p = _pad_to(params["w1"].T, (cip, cmid)).astype(cdt)
    w2r = jnp.transpose(params["w2"], (2, 3, 1, 0)).reshape(9, planes, planes)
    w2p = _pad_to(w2r, (9, cmid, cmid)).astype(cdt)
    w3p = _pad_to(params["w3"].T, (cmid, cop)).astype(cdt)
    fc1p = _pad_to(params["fc1"].T, (cop, crp)).astype(jnp.float32)
    fc2p = _pad_to(params["fc2"].T, (crp, cop)).astype(jnp.float32)
    g1, b1 = _pad_to(params["g1"], (cmid,)), _pad_to(params["b1"], (cmid,))
    g21, b21 = _pad_to(params["g21"], (cmid,)), _pad_to(params["b21"], (cmid,))
    g22, b22 = _pad_to(params["g22"], (cmid,)), _pad_to(params["b22"], (cmid,))
    g3, b3 = _pad_to(params["g3"], (cop,)), _pad_to(params["b3"], (cop,))

    # border-validity masks for the 9 conv taps (constants, [9, HW, 1] f32)
    yy = jnp.repeat(jnp.arange(h), wd)
    xx = jnp.tile(jnp.arange(wd), h)
    mlist = []
    for k in range(9):
        sy, sx = k // 3 - 1, k % 3 - 1
        mlist.append((yy + sy >= 0) & (yy + sy < h) & (xx + sx >= 0) & (xx + sx < wd))
    masks = jnp.stack(mlist).astype(jnp.float32).reshape(9, hw, 1)

    # conv1 -> (bn1+relu) conv2 -> (bn21+relu) conv2 -> (bn22+relu) conv3
    raw1, s1, q1 = _conv1x1(x_c, w1p, tr)
    sc1, sh1 = _bn_affine(s1, q1, count, g1, b1)

    raw2, s2, q2 = _bnrelu_conv3x3(raw1, sc1, sh1, w2p, masks, wd)
    sc21, sh21 = _bn_affine(s2, q2, count, g21, b21)

    raw3, s3, q3 = _bnrelu_conv3x3(raw2, sc21, sh21, w2p, masks, wd)  # stride==1 branch
    sc22, sh22 = _bn_affine(s3, q3, count, g22, b22)

    raw4, s4, q4 = _bnrelu_conv1x1(raw3, sc22, sh22, w3p, tr)
    sc3, sh3 = _bn_affine(s4, q4, count, g3, b3)

    # SE gate from per-batch pooled raw sums (bn3 is per-channel affine)
    pooled = jnp.sum(s4, axis=(1, 2)) / float(hw)                     # [B, cop]
    s_se = _se_scale(pooled, sc3, sh3, fc1p, fc2p)                    # [B, cop]

    # bn3 * SE + residual + relu, streamed and aliased onto the residual buffer
    out = _finalize(raw4, x_res, s_se.reshape(b, 1, cop), sc3, sh3, tr)

    out = out[:, :, :cout].reshape(b, h, wd, cout)
    return jnp.transpose(out, (0, 3, 1, 2))


# --------------------------- pure-JAX reference ----------------------------


def reference_forward(x, p):
    def bn(t, g, bb):
        m = jnp.mean(t, axis=(0, 2, 3), keepdims=True)
        v = jnp.mean((t - m) ** 2, axis=(0, 2, 3), keepdims=True)
        return g[None, :, None, None] * (t - m) / jnp.sqrt(v + EPS) + bb[None, :, None, None]

    relu = lambda t: jnp.maximum(t, 0.0)
    conv2 = lambda t: jax.lax.conv_general_dilated(
        t, p["w2"], (1, 1), ((1, 1), (1, 1)),
        dimension_numbers=("NCHW", "OIHW", "NCHW"))

    out = jnp.einsum("bchw,oc->bohw", x, p["w1"])
    out = relu(bn(out, p["g1"], p["b1"]))
    out = relu(bn(conv2(out), p["g21"], p["b21"]))
    out = relu(bn(conv2(out), p["g22"], p["b22"]))   # stride==1 branch
    out = jnp.einsum("bchw,oc->bohw", out, p["w3"])
    out = bn(out, p["g3"], p["b3"])
    y = jnp.mean(out, axis=(2, 3))
    hh = relu(y @ p["fc1"].T)
    s = jax.nn.sigmoid(hh @ p["fc2"].T)
    out = out * s[:, :, None, None]
    return relu(out + x)


# --------------------------------- main -------------------------------------

if __name__ == "__main__":
    B, inplanes, planes, H, W = 2, 32, 8, 8, 8
    reduction = 16
    cout = planes * 4          # = inplanes so the residual add works (downsample=None)
    cr = cout // reduction

    key = jax.random.PRNGKey(0)
    ks = jax.random.split(key, 12)
    f32 = jnp.float32

    params = {
        "w1": 0.2 * jax.random.normal(ks[0], (planes, inplanes), f32),       # conv1 [O,I]
        "w2": 0.2 * jax.random.normal(ks[1], (planes, planes, 3, 3), f32),   # conv2 [O,I,3,3]
        "w3": 0.2 * jax.random.normal(ks[2], (cout, planes), f32),           # conv3 [O,I]
        "g1": 1.0 + 0.1 * jax.random.normal(ks[3], (planes,), f32),
        "b1": 0.1 * jax.random.normal(ks[4], (planes,), f32),
        "g21": 1.0 + 0.1 * jax.random.normal(ks[5], (planes,), f32),
        "b21": 0.1 * jax.random.normal(ks[6], (planes,), f32),
        "g22": 1.0 + 0.1 * jax.random.normal(ks[7], (planes,), f32),
        "b22": 0.1 * jax.random.normal(ks[8], (planes,), f32),
        "g3": 1.0 + 0.1 * jax.random.normal(ks[9], (cout,), f32),
        "b3": 0.1 * jax.random.normal(ks[10], (cout,), f32),
        # SE linear layers (PyTorch Linear weight layout [out, in], no bias)
        "fc1": 0.3 * jax.random.normal(ks[11], (cr, cout), f32),
        "fc2": 0.3 * jax.random.normal(jax.random.fold_in(key, 99), (cout, cr), f32),
    }

    x = jax.random.normal(jax.random.fold_in(key, 7), (B, inplanes, H, W), f32)

    ref = jax.block_until_ready(reference_forward(x, params))

    # f32 path: strict semantic check against the pure-JAX reference.
    out_f32 = jax.block_until_ready(
        new_bottleneck_forward(x, params, compute_dtype=jnp.float32))
    assert out_f32.shape == (B, cout, H, W), out_f32.shape
    assert jnp.allclose(out_f32, ref, atol=2e-3, rtol=2e-3), \
        float(jnp.max(jnp.abs(out_f32 - ref)))

    # bf16 MXU path (default): looser tolerance, error is only matmul-operand rounding.
    out_bf16 = jax.block_until_ready(
        new_bottleneck_forward(x, params, compute_dtype=jnp.bfloat16))
    assert out_bf16.shape == (B, cout, H, W), out_bf16.shape
    assert jnp.allclose(out_bf16, ref, atol=1.5e-1, rtol=1e-1), \
        float(jnp.max(jnp.abs(out_bf16 - ref)))

    print("KERNEL_OK")
</pallas_src>

<mosaic_0001>
module attributes {stable_mosaic.version = 11 : i64} {
  func.func @_conv1x1_kernel(%arg0: i32, %arg1: i32, %arg2: memref<1x64x128xf32, #tpu.memory_space<vmem>>, %arg3: memref<128x128xf32, #tpu.memory_space<vmem>>, %arg4: memref<1x64x128xf32, #tpu.memory_space<vmem>>, %arg5: memref<1x1x1x128xf32, #tpu.memory_space<vmem>>, %arg6: memref<1x1x1x128xf32, #tpu.memory_space<vmem>>) attributes {dimension_semantics = [#tpu.dimension_semantics<parallel>, #tpu.dimension_semantics<parallel>], iteration_bounds = array<i64: 2, 1>, scalar_prefetch = 0 : i64, scratch_operands = 0 : i64, tpu.core_type = #tpu.core_type<tc>, window_params = [{transform_indices = @transform_0, window_bounds = array<i64: 1, 64, 128>}, {pipeline_mode = #tpu.pipeline_mode<synchronous>, transform_indices = @transform_1, window_bounds = array<i64: 128, 128>}, {transform_indices = @transform_2, window_bounds = array<i64: 1, 64, 128>}, {transform_indices = @transform_3, window_bounds = array<i64: 1, 1, 1, 128>}, {transform_indices = @transform_4, window_bounds = array<i64: 1, 1, 1, 128>}]} {
    %c0 = arith.constant 0 : index
    %c0_0 = arith.constant 0 : index
    %c0_1 = arith.constant 0 : index
    %0 = vector.load %arg2[%c0, %c0_0, %c0_1] : memref<1x64x128xf32, #tpu.memory_space<vmem>>, vector<1x64x128xf32>
    %1 = vector.shape_cast %0 : vector<1x64x128xf32> to vector<64x128xf32>
    %c0_2 = arith.constant 0 : index
    %c0_3 = arith.constant 0 : index
    %2 = vector.load %arg3[%c0_2, %c0_3] : memref<128x128xf32, #tpu.memory_space<vmem>>, vector<128x128xf32>
    %cst = arith.constant dense<0.000000e+00> : vector<64x128xf32>
    %3 = tpu.matmul %1, %2, %cst {dimension_numbers = #tpu.dot_dimension_numbers<[1], [0], [0], [1], [0, 0, 1, 1], [], []>} : vector<64x128xf32>, vector<128x128xf32>, vector<64x128xf32> -> vector<64x128xf32>
    %c0_4 = arith.constant 0 : index
    %c0_5 = arith.constant 0 : index
    %c0_6 = arith.constant 0 : index
    %4 = vector.load %arg4[%c0_4, %c0_5, %c0_6] : memref<1x64x128xf32, #tpu.memory_space<vmem>>, vector<1x64x128xf32>
    %5 = vector.shape_cast %4 : vector<1x64x128xf32> to vector<64x128xf32>
    %6 = vector.shape_cast %3 : vector<64x128xf32> to vector<1x64x128xf32>
    tpu.vector_store %arg4[%c0_4, %c0_5, %c0_6], %6 {strides = array<i32>} : memref<1x64x128xf32, #tpu.memory_space<vmem>>, vector<1x64x128xf32>,
    %cst_7 = arith.constant dense<0.000000e+00> : vector<128xf32>
    %7 = vector.multi_reduction <add>, %3, %cst_7 [0] : vector<64x128xf32> to vector<128xf32>
    %8 = vector.shape_cast %7 : vector<128xf32> to vector<1x128xf32>
    %c0_8 = arith.constant 0 : index
    %c0_9 = arith.constant 0 : index
    %c0_10 = arith.constant 0 : index
    %c0_11 = arith.constant 0 : index
    %9 = vector.load %arg5[%c0_8, %c0_9, %c0_10, %c0_11] : memref<1x1x1x128xf32, #tpu.memory_space<vmem>>, vector<1x1x1x128xf32>
    %10 = vector.shape_cast %9 : vector<1x1x1x128xf32> to vector<1x128xf32>
    %11 = vector.shape_cast %8 : vector<1x128xf32> to vector<1x1x1x128xf32>
    tpu.vector_store %arg5[%c0_8, %c0_9, %c0_10, %c0_11], %11 {strides = array<i32>} : memref<1x1x1x128xf32, #tpu.memory_space<vmem>>, vector<1x1x1x128xf32>,
    %12 = arith.mulf %3, %3 : vector<64x128xf32>
    %cst_12 = arith.constant dense<0.000000e+00> : vector<128xf32>
    %13 = vector.multi_reduction <add>, %12, %cst_12 [0] : vector<64x128xf32> to vector<128xf32>
    %14 = vector.shape_cast %13 : vector<128xf32> to vector<1x128xf32>
    %c0_13 = arith.constant 0 : index
    %c0_14 = arith.constant 0 : index
    %c0_15 = arith.constant 0 : index
    %c0_16 = arith.constant 0 : index
    %15 = vector.load %arg6[%c0_13, %c0_14, %c0_15, %c0_16] : memref<1x1x1x128xf32, #tpu.memory_space<vmem>>, vector<1x1x1x128xf32>
    %16 = vector.shape_cast %15 : vector<1x1x1x128xf32> to vector<1x128xf32>
    %17 = vector.shape_cast %14 : vector<1x128xf32> to vector<1x1x1x128xf32>
    tpu.vector_store %arg6[%c0_13, %c0_14, %c0_15, %c0_16], %17 {strides = array<i32>} : memref<1x1x1x128xf32, #tpu.memory_space<vmem>>, vector<1x1x1x128xf32>,
    return
  }
  func.func @transform_0(%arg0: i32, %arg1: i32) -> (i32, i32, i32) {
    %c0_i32 = arith.constant 0 : i32
    %c0_i32_0 = arith.constant 0 : i32
    return %arg0, %arg1, %c0_i32 : i32, i32, i32
  }
  func.func @transform_1(%arg0: i32, %arg1: i32) -> (i32, i32) {
    %c0_i32 = arith.constant 0 : i32
    %c0_i32_0 = arith.constant 0 : i32
    %c0_i32_1 = arith.constant 0 : i32
    return %c0_i32, %c0_i32_0 : i32, i32
  }
  func.func @transform_2(%arg0: i32, %arg1: i32) -> (i32, i32, i32) {
    %c0_i32 = arith.constant 0 : i32
    %c0_i32_0 = arith.constant 0 : i32
    return %arg0, %arg1, %c0_i32 : i32, i32, i32
  }
  func.func @transform_3(%arg0: i32, %arg1: i32) -> (i32, i32, i32, i32) {
    %c0_i32 = arith.constant 0 : i32
    %c0_i32_0 = arith.constant 0 : i32
    %c0_i32_1 = arith.constant 0 : i32
    return %arg0, %arg1, %c0_i32, %c0_i32_0 : i32, i32, i32, i32
  }
  func.func @transform_4(%arg0: i32, %arg1: i32) -> (i32, i32, i32, i32) {
    %c0_i32 = arith.constant 0 : i32
    %c0_i32_0 = arith.constant 0 : i32
    %c0_i32_1 = arith.constant 0 : i32
    return %arg0, %arg1, %c0_i32, %c0_i32_0 : i32, i32, i32, i32
  }
}

module attributes {stable_mosaic.version = 11 : i64} {
  func.func @_bnrelu_conv3x3_kernel(%arg0: i32, %arg1: memref<1x64x128xf32, #tpu.memory_space<vmem>>, %arg2: memref<1x128xf32, #tpu.memory_space<vmem>>, %arg3: memref<1x128xf32, #tpu.memory_space<vmem>>, %arg4: memref<9x128x128xf32, #tpu.memory_space<vmem>>, %arg5: memref<9x64x1xf32, #tpu.memory_space<vmem>>, %arg6: memref<1x64x128xf32, #tpu.memory_space<vmem>>, %arg7: memref<1x1x128xf32, #tpu.memory_space<vmem>>, %arg8: memref<1x1x128xf32, #tpu.memory_space<vmem>>) attributes {dimension_semantics = [#tpu.dimension_semantics<parallel>], iteration_bounds = array<i64: 2>, scalar_prefetch = 0 : i64, scratch_operands = 0 : i64, tpu.core_type = #tpu.core_type<tc>, window_params = [{transform_indices = @transform_0, window_bounds = array<i64: 1, 64, 128>}, {pipeline_mode = #tpu.pipeline_mode<synchronous>, transform_indices = @transform_1, window_bounds = array<i64: 1, 128>}, {pipeline_mode = #tpu.pipeline_mode<synchronous>, transform_indices = @transform_2, window_bounds = array<i64: 1, 128>}, {pipeline_mode = #tpu.pipeline_mode<synchronous>, transform_indices = @transform_3, window_bounds = array<i64: 9, 128, 128>}, {pipeline_mode = #tpu.pipeline_mode<synchronous>, transform_indices = @transform_4, window_bounds = array<i64: 9, 64, 1>}, {transform_indices = @transform_5, window_bounds = array<i64: 1, 64, 128>}, {transform_indices = @transform_6, window_bounds = array<i64: 1, 1, 128>}, {transform_indices = @transform_7, window_bounds = array<i64: 1, 1, 128>}]} {
    %c0 = arith.constant 0 : index
    %c0_0 = arith.constant 0 : index
    %c0_1 = arith.constant 0 : index
    %0 = vector.load %arg1[%c0, %c0_0, %c0_1] : memref<1x64x128xf32, #tpu.memory_space<vmem>>, vector<1x64x128xf32>
    %1 = vector.shape_cast %0 : vector<1x64x128xf32> to vector<64x128xf32>
    %c0_2 = arith.constant 0 : index
    %c0_3 = arith.constant 0 : index
    %2 = vector.load %arg2[%c0_2, %c0_3] : memref<1x128xf32, #tpu.memory_space<vmem>>, vector<1x128xf32>
    %3 = vector.broadcast %2 : vector<1x128xf32> to vector<64x128xf32>
    %4 = arith.mulf %3, %1 : vector<64x128xf32>
    %c0_4 = arith.constant 0 : index
    %c0_5 = arith.constant 0 : index
    %5 = vector.load %arg3[%c0_4, %c0_5] : memref<1x128xf32, #tpu.memory_space<vmem>>, vector<1x128xf32>
    %6 = vector.broadcast %5 : vector<1x128xf32> to vector<64x128xf32>
    %7 = arith.addf %4, %6 : vector<64x128xf32>
    %cst = arith.constant 0.000000e+00 : f32
    %8 = vector.broadcast %cst : f32 to vector<64x128xf32>
    %9 = arith.maximumf %7, %8 : vector<64x128xf32>
    %cst_6 = arith.constant 0.000000e+00 : f32
    %10 = vector.broadcast %cst_6 : f32 to vector<64x128xf32>
    %c9_i32 = arith.constant 9 : i32
    %11 = tpu.dynamic_rotate %9 by %c9_i32 dim 0 : vector<64x128xf32>, i32 -> vector<64x128xf32>
    %c0_7 = arith.constant 0 : index
    %c0_8 = arith.constant 0 : index
    %c0_9 = arith.constant 0 : index
    %12 = vector.load %arg5[%c0_7, %c0_8, %c0_9] : memref<9x64x1xf32, #tpu.memory_space<vmem>>, vector<1x64x1xf32>
    %13 = vector.shape_cast %12 : vector<1x64x1xf32> to vector<64x1xf32>
    %14 = vector.broadcast %13 : vector<64x1xf32> to vector<64x128xf32>
    %15 = arith.mulf %11, %14 : vector<64x128xf32>
    %c0_10 = arith.constant 0 : index
    %c0_11 = arith.constant 0 : index
    %c0_12 = arith.constant 0 : index
    %16 = vector.load %arg4[%c0_10, %c0_11, %c0_12] : memref<9x128x128xf32, #tpu.memory_space<vmem>>, vector<1x128x128xf32>
    %17 = vector.shape_cast %16 : vector<1x128x128xf32> to vector<128x128xf32>
    %cst_13 = arith.constant dense<0.000000e+00> : vector<64x128xf32>
    %18 = tpu.matmul %15, %17, %cst_13 {dimension_numbers = #tpu.dot_dimension_numbers<[1], [0], [0], [1], [0, 0, 1, 1], [], []>} : vector<64x128xf32>, vector<128x128xf32>, vector<64x128xf32> -> vector<64x128xf32>
    %19 = arith.addf %10, %18 : vector<64x128xf32>
    %c8_i32 = arith.constant 8 : i32
    %20 = tpu.dynamic_rotate %9 by %c8_i32 dim 0 : vector<64x128xf32>, i32 -> vector<64x128xf32>
    %c1 = arith.constant 1 : index
    %c0_14 = arith.constant 0 : index
    %c0_15 = arith.constant 0 : index
    %21 = vector.load %arg5[%c1, %c0_14, %c0_15] : memref<9x64x1xf32, #tpu.memory_space<vmem>>, vector<1x64x1xf32>
    %22 = vector.shape_cast %21 : vector<1x64x1xf32> to vector<64x1xf32>
    %23 = vector.broadcast %22 : vector<64x1xf32> to vector<64x128xf32>
    %24 = arith.mulf %20, %23 : vector<64x128xf32>
    %c1_16 = arith.constant 1 : index
    %c0_17 = arith.constant 0 : index
    %c0_18 = arith.constant 0 : index
    %25 = vector.load %arg4[%c1_16, %c0_17, %c0_18] : memref<9x128x128xf32, #tpu.memory_space<vmem>>, vector<1x128x128xf32>
    %26 = vector.shape_cast %25 : vector<1x128x128xf32> to vector<128x128xf32>
    %cst_19 = arith.constant dense<0.000000e+00> : vector<64x128xf32>
    %27 = tpu.matmul %24, %26, %cst_19 {dimension_numbers = #tpu.dot_dimension_numbers<[1], [0], [0], [1], [0, 0, 1, 1], [], []>} : vector<64x128xf32>, vector<128x128xf32>, vector<64x128xf32> -> vector<64x128xf32>
    %28 = arith.addf %19, %27 : vector<64x128xf32>
    %c7_i32 = arith.constant 7 : i32
    %29 = tpu.dynamic_rotate %9 by %c7_i32 dim 0 : vector<64x128xf32>, i32 -> vector<64x128xf32>
    %c2 = arith.constant 2 : index
    %c0_20 = arith.constant 0 : index
    %c0_21 = arith.constant 0 : index
    %30 = vector.load %arg5[%c2, %c0_20, %c0_21] : memref<9x64x1xf32, #tpu.memory_space<vmem>>, vector<1x64x1xf32>
    %31 = vector.shape_cast %30 : vector<1x64x1xf32> to vector<64x1xf32>
    %32 = vector.broadcast %31 : vector<64x1xf32> to vector<64x128xf32>
    %33 = arith.mulf %29, %32 : vector<64x128xf32>
    %c2_22 = arith.constant 2 : index
    %c0_23 = arith.constant 0 : index
    %c0_24 = arith.constant 0 : index
    %34 = vector.load %arg4[%c2_22, %c0_23, %c0_24] : memref<9x128x128xf32, #tpu.memory_space<vmem>>, vector<1x128x128xf32>
    %35 = vector.shape_cast %34 : vector<1x128x128xf32> to vector<128x128xf32>
    %cst_25 = arith.constant dense<0.000000e+00> : vector<64x128xf32>
    %36 = tpu.matmul %33, %35, %cst_25 {dimension_numbers = #tpu.dot_dimension_numbers<[1], [0], [0], [1], [0, 0, 1, 1], [], []>} : vector<64x128xf32>, vector<128x128xf32>, vector<64x128xf32> -> vector<64x128xf32>
    %37 = arith.addf %28, %36 : vector<64x128xf32>
    %c1_i32 = arith.constant 1 : i32
    %38 = tpu.dynamic_rotate %9 by %c1_i32 dim 0 : vector<64x128xf32>, i32 -> vector<64x128xf32>
    %c3 = arith.constant 3 : index
    %c0_26 = arith.constant 0 : index
    %c0_27 = arith.constant 0 : index
    %39 = vector.load %arg5[%c3, %c0_26, %c0_27] : memref<9x64x1xf32, #tpu.memory_space<vmem>>, vector<1x64x1xf32>
    %40 = vector.shape_cast %39 : vector<1x64x1xf32> to vector<64x1xf32>
    %41 = vector.broadcast %40 : vector<64x1xf32> to vector<64x128xf32>
    %42 = arith.mulf %38, %41 : vector<64x128xf32>
    %c3_28 = arith.constant 3 : index
    %c0_29 = arith.constant 0 : index
    %c0_30 = arith.constant 0 : index
    %43 = vector.load %arg4[%c3_28, %c0_29, %c0_30] : memref<9x128x128xf32, #tpu.memory_space<vmem>>, vector<1x128x128xf32>
    %44 = vector.shape_cast %43 : vector<1x128x128xf32> to vector<128x128xf32>
    %cst_31 = arith.constant dense<0.000000e+00> : vector<64x128xf32>
    %45 = tpu.matmul %42, %44, %cst_31 {dimension_numbers = #tpu.dot_dimension_numbers<[1], [0], [0], [1], [0, 0, 1, 1], [], []>} : vector<64x128xf32>, vector<128x128xf32>, vector<64x128xf32> -> vector<64x128xf32>
    %46 = arith.addf %37, %45 : vector<64x128xf32>
    %c4 = arith.constant 4 : index
    %c0_32 = arith.constant 0 : index
    %c0_33 = arith.constant 0 : index
    %47 = vector.load %arg5[%c4, %c0_32, %c0_33] : memref<9x64x1xf32, #tpu.memory_space<vmem>>, vector<1x64x1xf32>
    %48 = vector.shape_cast %47 : vector<1x64x1xf32> to vector<64x1xf32>
    %49 = vector.broadcast %48 : vector<64x1xf32> to vector<64x128xf32>
    %50 = arith.mulf %9, %49 : vector<64x128xf32>
    %c4_34 = arith.constant 4 : index
    %c0_35 = arith.constant 0 : index
    %c0_36 = arith.constant 0 : index
    %51 = vector.load %arg4[%c4_34, %c0_35, %c0_36] : memref<9x128x128xf32, #tpu.memory_space<vmem>>, vector<1x128x128xf32>
    %52 = vector.shape_cast %51 : vector<1x128x128xf32> to vector<128x128xf32>
    %cst_37 = arith.constant dense<0.000000e+00> : vector<64x128xf32>
    %53 = tpu.matmul %50, %52, %cst_37 {dimension_numbers = #tpu.dot_dimension_numbers<[1], [0], [0], [1], [0, 0, 1, 1], [], []>} : vector<64x128xf32>, vector<128x128xf32>, vector<64x128xf32> -> vector<64x128xf32>
    %54 = arith.addf %46, %53 : vector<64x128xf32>
    %c63_i32 = arith.constant 63 : i32
    %55 = tpu.dynamic_rotate %9 by %c63_i32 dim 0 : vector<64x128xf32>, i32 -> vector<64x128xf32>
    %c5 = arith.constant 5 : index
    %c0_38 = arith.constant 0 : index
    %c0_39 = arith.constant 0 : index
    %56 = vector.load %arg5[%c5, %c0_38, %c0_39] : memref<9x64x1xf32, #tpu.memory_space<vmem>>, vector<1x64x1xf32>
    %57 = vector.shape_cast %56 : vector<1x64x1xf32> to vector<64x1xf32>
    %58 = vector.broadcast %57 : vector<64x1xf32> to vector<64x128xf32>
    %59 = arith.mulf %55, %58 : vector<64x128xf32>
    %c5_40 = arith.constant 5 : index
    %c0_41 = arith.constant 0 : index
    %c0_42 = arith.constant 0 : index
    %60 = vector.load %arg4[%c5_40, %c0_41, %c0_42] : memref<9x128x128xf32, #tpu.memory_space<vmem>>, vector<1x128x128xf32>
    %61 = vector.shape_cast %60 : vector<1x128x128xf32> to vector<128x128xf32>
    %cst_43 = arith.constant dense<0.000000e+00> : vector<64x128xf32>
    %62 = tpu.matmul %59, %61, %cst_43 {dimension_numbers = #tpu.dot_dimension_numbers<[1], [0], [0], [1], [0, 0, 1, 1], [], []>} : vector<64x128xf32>, vector<128x128xf32>, vector<64x128xf32> -> vector<64x128xf32>
    %63 = arith.addf %54, %62 : vector<64x128xf32>
    %c57_i32 = arith.constant 57 : i32
    %64 = tpu.dynamic_rotate %9 by %c57_i32 dim 0 : vector<64x128xf32>, i32 -> vector<64x128xf32>
    %c6 = arith.constant 6 : index
    %c0_44 = arith.constant 0 : index
    %c0_45 = arith.constant 0 : index
    %65 = vector.load %arg5[%c6, %c0_44, %c0_45] : memref<9x64x1xf32, #tpu.memory_space<vmem>>, vector<1x64x1xf32>
    %66 = vector.shape_cast %65 : vector<1x64x1xf32> to vector<64x1xf32>
    %67 = vector.broadcast %66 : vector<64x1xf32> to vector<64x128xf32>
    %68 = arith.mulf %64, %67 : vector<64x128xf32>
    %c6_46 = arith.constant 6 : index
    %c0_47 = arith.constant 0 : index
    %c0_48 = arith.constant 0 : index
    %69 = vector.load %arg4[%c6_46, %c0_47, %c0_48] : memref<9x128x128xf32, #tpu.memory_space<vmem>>, vector<1x128x128xf32>
    %70 = vector.shape_cast %69 : vector<1x128x128xf32> to vector<128x128xf32>
    %cst_49 = arith.constant dense<0.000000e+00> : vector<64x128xf32>
    %71 = tpu.matmul %68, %70, %cst_49 {dimension_numbers = #tpu.dot_dimension_numbers<[1], [0], [0], [1], [0, 0, 1, 1], [], []>} : vector<64x128xf32>, vector<128x128xf32>, vector<64x128xf32> -> vector<64x128xf32>
    %72 = arith.addf %63, %71 : vector<64x128xf32>
    %c56_i32 = arith.constant 56 : i32
    %73 = tpu.dynamic_rotate %9 by %c56_i32 dim 0 : vector<64x128xf32>, i32 -> vector<64x128xf32>
    %c7 = arith.constant 7 : index
    %c0_50 = arith.constant 0 : index
    %c0_51 = arith.constant 0 : index
    %74 = vector.load %arg5[%c7, %c0_50, %c0_51] : memref<9x64x1xf32, #tpu.memory_space<vmem>>, vector<1x64x1xf32>
    %75 = vector.shape_cast %74 : vector<1x64x1xf32> to vector<64x1xf32>
    %76 = vector.broadcast %75 : vector<64x1xf32> to vector<64x128xf32>
    %77 = arith.mulf %73, %76 : vector<64x128xf32>
    %c7_52 = arith.constant 7 : index
    %c0_53 = arith.constant 0 : index
    %c0_54 = arith.constant 0 : index
    %78 = vector.load %arg4[%c7_52, %c0_53, %c0_54] : memref<9x128x128xf32, #tpu.memory_space<vmem>>, vector<1x128x128xf32>
    %79 = vector.shape_cast %78 : vector<1x128x128xf32> to vector<128x128xf32>
    %cst_55 = arith.constant dense<0.000000e+00> : vector<64x128xf32>
    %80 = tpu.matmul %77, %79, %cst_55 {dimension_numbers = #tpu.dot_dimension_numbers<[1], [0], [0], [1], [0, 0, 1, 1], [], []>} : vector<64x128xf32>, vector<128x128xf32>, vector<64x128xf32> -> vector<64x128xf32>
    %81 = arith.addf %72, %80 : vector<64x128xf32>
    %c55_i32 = arith.constant 55 : i32
    %82 = tpu.dynamic_rotate %9 by %c55_i32 dim 0 : vector<64x128xf32>, i32 -> vector<64x128xf32>
    %c8 = arith.constant 8 : index
    %c0_56 = arith.constant 0 : index
    %c0_57 = arith.constant 0 : index
    %83 = vector.load %arg5[%c8, %c0_56, %c0_57] : memref<9x64x1xf32, #tpu.memory_space<vmem>>, vector<1x64x1xf32>
    %84 = vector.shape_cast %83 : vector<1x64x1xf32> to vector<64x1xf32>
    %85 = vector.broadcast %84 : vector<64x1xf32> to vector<64x128xf32>
    %86 = arith.mulf %82, %85 : vector<64x128xf32>
    %c8_58 = arith.constant 8 : index
    %c0_59 = arith.constant 0 : index
    %c0_60 = arith.constant 0 : index
    %87 = vector.load %arg4[%c8_58, %c0_59, %c0_60] : memref<9x128x128xf32, #tpu.memory_space<vmem>>, vector<1x128x128xf32>
    %88 = vector.shape_cast %87 : vector<1x128x128xf32> to vector<128x128xf32>
    %cst_61 = arith.constant dense<0.000000e+00> : vector<64x128xf32>
    %89 = tpu.matmul %86, %88, %cst_61 {dimension_numbers = #tpu.dot_dimension_numbers<[1], [0], [0], [1], [0, 0, 1, 1], [], []>} : vector<64x128xf32>, vector<128x128xf32>, vector<64x128xf32> -> vector<64x128xf32>
    %90 = arith.addf %81, %89 : vector<64x128xf32>
    %c0_62 = arith.constant 0 : index
    %c0_63 = arith.constant 0 : index
    %c0_64 = arith.constant 0 : index
    %91 = vector.load %arg6[%c0_62, %c0_63, %c0_64] : memref<1x64x128xf32, #tpu.memory_space<vmem>>, vector<1x64x128xf32>
    %92 = vector.shape_cast %91 : vector<1x64x128xf32> to vector<64x128xf32>
    %93 = vector.shape_cast %90 : vector<64x128xf32> to vector<1x64x128xf32>
    tpu.vector_store %arg6[%c0_62, %c0_63, %c0_64], %93 {strides = array<i32>} : memref<1x64x128xf32, #tpu.memory_space<vmem>>, vector<1x64x128xf32>,
    %cst_65 = arith.constant dense<0.000000e+00> : vector<128xf32>
    %94 = vector.multi_reduction <add>, %90, %cst_65 [0] : vector<64x128xf32> to vector<128xf32>
    %95 = vector.shape_cast %94 : vector<128xf32> to vector<1x128xf32>
    %c0_66 = arith.constant 0 : index
    %c0_67 = arith.constant 0 : index
    %c0_68 = arith.constant 0 : index
    %96 = vector.load %arg7[%c0_66, %c0_67, %c0_68] : memref<1x1x128xf32, #tpu.memory_space<vmem>>, vector<1x1x128xf32>
    %97 = vector.shape_cast %96 : vector<1x1x128xf32> to vector<1x128xf32>
    %98 = vector.shape_cast %95 : vector<1x128xf32> to vector<1x1x128xf32>
    tpu.vector_store %arg7[%c0_66, %c0_67, %c0_68], %98 {strides = array<i32>} : memref<1x1x128xf32, #tpu.memory_space<vmem>>, vector<1x1x128xf32>,
    %99 = arith.mulf %90, %90 : vector<64x128xf32>
    %cst_69 = arith.constant dense<0.000000e+00> : vector<128xf32>
    %100 = vector.multi_reduction <add>, %99, %cst_69 [0] : vector<64x128xf32> to vector<128xf32>
    %101 = vector.shape_cast %100 : vector<128xf32> to vector<1x128xf32>
    %c0_70 = arith.constant 0 : index
    %c0_71 = arith.constant 0 : index
    %c0_72 = arith.constant 0 : index
    %102 = vector.load %arg8[%c0_70, %c0_71, %c0_72] : memref<1x1x128xf32, #tpu.memory_space<vmem>>, vector<1x1x128xf32>
    %103 = vector.shape_cast %102 : vector<1x1x128xf32> to vector<1x128xf32>
    %104 = vector.shape_cast %101 : vector<1x128xf32> to vector<1x1x128xf32>
    tpu.vector_store %arg8[%c0_70, %c0_71, %c0_72], %104 {strides = array<i32>} : memref<1x1x128xf32, #tpu.memory_space<vmem>>, vector<1x1x128xf32>,
    return
  }
  func.func @transform_0(%arg0: i32) -> (i32, i32, i32) {
    %c0_i32 = arith.constant 0 : i32
    %c0_i32_0 = arith.constant 0 : i32
    %c0_i32_1 = arith.constant 0 : i32
    return %arg0, %c0_i32, %c0_i32_0 : i32, i32, i32
  }
  func.func @transform_1(%arg0: i32) -> (i32, i32) {
    %c0_i32 = arith.constant 0 : i32
    %c0_i32_0 = arith.constant 0 : i32
    %c0_i32_1 = arith.constant 0 : i32
    return %c0_i32, %c0_i32_0 : i32, i32
  }
  func.func @transform_2(%arg0: i32) -> (i32, i32) {
    %c0_i32 = arith.constant 0 : i32
    %c0_i32_0 = arith.constant 0 : i32
    %c0_i32_1 = arith.constant 0 : i32
    return %c0_i32, %c0_i32_0 : i32, i32
  }
  func.func @transform_3(%arg0: i32) -> (i32, i32, i32) {
    %c0_i32 = arith.constant 0 : i32
    %c0_i32_0 = arith.constant 0 : i32
    %c0_i32_1 = arith.constant 0 : i32
    %c0_i32_2 = arith.constant 0 : i32
    return %c0_i32, %c0_i32_0, %c0_i32_1 : i32, i32, i32
  }
  func.func @transform_4(%arg0: i32) -> (i32, i32, i32) {
    %c0_i32 = arith.constant 0 : i32
    %c0_i32_0 = arith.constant 0 : i32
    %c0_i32_1 = arith.constant 0 : i32
    %c0_i32_2 = arith.constant 0 : i32
    return %c0_i32, %c0_i32_0, %c0_i32_1 : i32, i32, i32
  }
  func.func @transform_5(%arg0: i32) -> (i32, i32, i32) {
    %c0_i32 = arith.constant 0 : i32
    %c0_i32_0 = arith.constant 0 : i32
    %c0_i32_1 = arith.constant 0 : i32
    return %arg0, %c0_i32, %c0_i32_0 : i32, i32, i32
  }
  func.func @transform_6(%arg0: i32) -> (i32, i32, i32) {
    %c0_i32 = arith.constant 0 : i32
    %c0_i32_0 = arith.constant 0 : i32
    %c0_i32_1 = arith.constant 0 : i32
    return %arg0, %c0_i32, %c0_i32_0 : i32, i32, i32
  }
  func.func @transform_7(%arg0: i32) -> (i32, i32, i32) {
    %c0_i32 = arith.constant 0 : i32
    %c0_i32_0 = arith.constant 0 : i32
    %c0_i32_1 = arith.constant 0 : i32
    return %arg0, %c0_i32, %c0_i32_0 : i32, i32, i32
  }
}

module attributes {stable_mosaic.version = 11 : i64} {
  func.func @_bnrelu_conv1x1_kernel(%arg0: i32, %arg1: i32, %arg2: memref<1x64x128xf32, #tpu.memory_space<vmem>>, %arg3: memref<1x128xf32, #tpu.memory_space<vmem>>, %arg4: memref<1x128xf32, #tpu.memory_space<vmem>>, %arg5: memref<128x128xf32, #tpu.memory_space<vmem>>, %arg6: memref<1x64x128xf32, #tpu.memory_space<vmem>>, %arg7: memref<1x1x1x128xf32, #tpu.memory_space<vmem>>, %arg8: memref<1x1x1x128xf32, #tpu.memory_space<vmem>>) attributes {dimension_semantics = [#tpu.dimension_semantics<parallel>, #tpu.dimension_semantics<parallel>], iteration_bounds = array<i64: 2, 1>, scalar_prefetch = 0 : i64, scratch_operands = 0 : i64, tpu.core_type = #tpu.core_type<tc>, window_params = [{transform_indices = @transform_0, window_bounds = array<i64: 1, 64, 128>}, {pipeline_mode = #tpu.pipeline_mode<synchronous>, transform_indices = @transform_1, window_bounds = array<i64: 1, 128>}, {pipeline_mode = #tpu.pipeline_mode<synchronous>, transform_indices = @transform_2, window_bounds = array<i64: 1, 128>}, {pipeline_mode = #tpu.pipeline_mode<synchronous>, transform_indices = @transform_3, window_bounds = array<i64: 128, 128>}, {transform_indices = @transform_4, window_bounds = array<i64: 1, 64, 128>}, {transform_indices = @transform_5, window_bounds = array<i64: 1, 1, 1, 128>}, {transform_indices = @transform_6, window_bounds = array<i64: 1, 1, 1, 128>}]} {
    %c0 = arith.constant 0 : index
    %c0_0 = arith.constant 0 : index
    %c0_1 = arith.constant 0 : index
    %0 = vector.load %arg2[%c0, %c0_0, %c0_1] : memref<1x64x128xf32, #tpu.memory_space<vmem>>, vector<1x64x128xf32>
    %1 = vector.shape_cast %0 : vector<1x64x128xf32> to vector<64x128xf32>
    %c0_2 = arith.constant 0 : index
    %c0_3 = arith.constant 0 : index
    %2 = vector.load %arg3[%c0_2, %c0_3] : memref<1x128xf32, #tpu.memory_space<vmem>>, vector<1x128xf32>
    %3 = vector.broadcast %2 : vector<1x128xf32> to vector<64x128xf32>
    %4 = arith.mulf %3, %1 : vector<64x128xf32>
    %c0_4 = arith.constant 0 : index
    %c0_5 = arith.constant 0 : index
    %5 = vector.load %arg4[%c0_4, %c0_5] : memref<1x128xf32, #tpu.memory_space<vmem>>, vector<1x128xf32>
    %6 = vector.broadcast %5 : vector<1x128xf32> to vector<64x128xf32>
    %7 = arith.addf %4, %6 : vector<64x128xf32>
    %cst = arith.constant 0.000000e+00 : f32
    %8 = vector.broadcast %cst : f32 to vector<64x128xf32>
    %9 = arith.maximumf %7, %8 : vector<64x128xf32>
    %c0_6 = arith.constant 0 : index
    %c0_7 = arith.constant 0 : index
    %10 = vector.load %arg5[%c0_6, %c0_7] : memref<128x128xf32, #tpu.memory_space<vmem>>, vector<128x128xf32>
    %cst_8 = arith.constant dense<0.000000e+00> : vector<64x128xf32>
    %11 = tpu.matmul %9, %10, %cst_8 {dimension_numbers = #tpu.dot_dimension_numbers<[1], [0], [0], [1], [0, 0, 1, 1], [], []>} : vector<64x128xf32>, vector<128x128xf32>, vector<64x128xf32> -> vector<64x128xf32>
    %c0_9 = arith.constant 0 : index
    %c0_10 = arith.constant 0 : index
    %c0_11 = arith.constant 0 : index
    %12 = vector.load %arg6[%c0_9, %c0_10, %c0_11] : memref<1x64x128xf32, #tpu.memory_space<vmem>>, vector<1x64x128xf32>
    %13 = vector.shape_cast %12 : vector<1x64x128xf32> to vector<64x128xf32>
    %14 = vector.shape_cast %11 : vector<64x128xf32> to vector<1x64x128xf32>
    tpu.vector_store %arg6[%c0_9, %c0_10, %c0_11], %14 {strides = array<i32>} : memref<1x64x128xf32, #tpu.memory_space<vmem>>, vector<1x64x128xf32>,
    %cst_12 = arith.constant dense<0.000000e+00> : vector<128xf32>
    %15 = vector.multi_reduction <add>, %11, %cst_12 [0] : vector<64x128xf32> to vector<128xf32>
    %16 = vector.shape_cast %15 : vector<128xf32> to vector<1x128xf32>
    %c0_13 = arith.constant 0 : index
    %c0_14 = arith.constant 0 : index
    %c0_15 = arith.constant 0 : index
    %c0_16 = arith.constant 0 : index
    %17 = vector.load %arg7[%c0_13, %c0_14, %c0_15, %c0_16] : memref<1x1x1x128xf32, #tpu.memory_space<vmem>>, vector<1x1x1x128xf32>
    %18 = vector.shape_cast %17 : vector<1x1x1x128xf32> to vector<1x128xf32>
    %19 = vector.shape_cast %16 : vector<1x128xf32> to vector<1x1x1x128xf32>
    tpu.vector_store %arg7[%c0_13, %c0_14, %c0_15, %c0_16], %19 {strides = array<i32>} : memref<1x1x1x128xf32, #tpu.memory_space<vmem>>, vector<1x1x1x128xf32>,
    %20 = arith.mulf %11, %11 : vector<64x128xf32>
    %cst_17 = arith.constant dense<0.000000e+00> : vector<128xf32>
    %21 = vector.multi_reduction <add>, %20, %cst_17 [0] : vector<64x128xf32> to vector<128xf32>
    %22 = vector.shape_cast %21 : vector<128xf32> to vector<1x128xf32>
    %c0_18 = arith.constant 0 : index
    %c0_19 = arith.constant 0 : index
    %c0_20 = arith.constant 0 : index
    %c0_21 = arith.constant 0 : index
    %23 = vector.load %arg8[%c0_18, %c0_19, %c0_20, %c0_21] : memref<1x1x1x128xf32, #tpu.memory_space<vmem>>, vector<1x1x1x128xf32>
    %24 = vector.shape_cast %23 : vector<1x1x1x128xf32> to vector<1x128xf32>
    %25 = vector.shape_cast %22 : vector<1x128xf32> to vector<1x1x1x128xf32>
    tpu.vector_store %arg8[%c0_18, %c0_19, %c0_20, %c0_21], %25 {strides = array<i32>} : memref<1x1x1x128xf32, #tpu.memory_space<vmem>>, vector<1x1x1x128xf32>,
    return
  }
  func.func @transform_0(%arg0: i32, %arg1: i32) -> (i32, i32, i32) {
    %c0_i32 = arith.constant 0 : i32
    %c0_i32_0 = arith.constant 0 : i32
    return %arg0, %arg1, %c0_i32 : i32, i32, i32
  }
  func.func @transform_1(%arg0: i32, %arg1: i32) -> (i32, i32) {
    %c0_i32 = arith.constant 0 : i32
    %c0_i32_0 = arith.constant 0 : i32
    %c0_i32_1 = arith.constant 0 : i32
    return %c0_i32, %c0_i32_0 : i32, i32
  }
  func.func @transform_2(%arg0: i32, %arg1: i32) -> (i32, i32) {
    %c0_i32 = arith.constant 0 : i32
    %c0_i32_0 = arith.constant 0 : i32
    %c0_i32_1 = arith.constant 0 : i32
    return %c0_i32, %c0_i32_0 : i32, i32
  }
  func.func @transform_3(%arg0: i32, %arg1: i32) -> (i32, i32) {
    %c0_i32 = arith.constant 0 : i32
    %c0_i32_0 = arith.constant 0 : i32
    %c0_i32_1 = arith.constant 0 : i32
    return %c0_i32, %c0_i32_0 : i32, i32
  }
  func.func @transform_4(%arg0: i32, %arg1: i32) -> (i32, i32, i32) {
    %c0_i32 = arith.constant 0 : i32
    %c0_i32_0 = arith.constant 0 : i32
    return %arg0, %arg1, %c0_i32 : i32, i32, i32
  }
  func.func @transform_5(%arg0: i32, %arg1: i32) -> (i32, i32, i32, i32) {
    %c0_i32 = arith.constant 0 : i32
    %c0_i32_0 = arith.constant 0 : i32
    %c0_i32_1 = arith.constant 0 : i32
    return %arg0, %arg1, %c0_i32, %c0_i32_0 : i32, i32, i32, i32
  }
  func.func @transform_6(%arg0: i32, %arg1: i32) -> (i32, i32, i32, i32) {
    %c0_i32 = arith.constant 0 : i32
    %c0_i32_0 = arith.constant 0 : i32
    %c0_i32_1 = arith.constant 0 : i32
    return %arg0, %arg1, %c0_i32, %c0_i32_0 : i32, i32, i32, i32
  }
}

module attributes {stable_mosaic.version = 11 : i64} {
  func.func @_se_kernel(%arg0: i32, %arg1: memref<2x128xf32, #tpu.memory_space<vmem>>, %arg2: memref<1x128xf32, #tpu.memory_space<vmem>>, %arg3: memref<1x128xf32, #tpu.memory_space<vmem>>, %arg4: memref<128x128xf32, #tpu.memory_space<vmem>>, %arg5: memref<128x128xf32, #tpu.memory_space<vmem>>, %arg6: memref<2x128xf32, #tpu.memory_space<vmem>>) attributes {dimension_semantics = [#tpu.dimension_semantics<arbitrary>], iteration_bounds = array<i64: 1>, scalar_prefetch = 0 : i64, scratch_operands = 0 : i64, tpu.core_type = #tpu.core_type<tc>, window_params = [{pipeline_mode = #tpu.pipeline_mode<synchronous>, transform_indices = @transform_0, window_bounds = array<i64: 2, 128>}, {pipeline_mode = #tpu.pipeline_mode<synchronous>, transform_indices = @transform_1, window_bounds = array<i64: 1, 128>}, {pipeline_mode = #tpu.pipeline_mode<synchronous>, transform_indices = @transform_2, window_bounds = array<i64: 1, 128>}, {pipeline_mode = #tpu.pipeline_mode<synchronous>, transform_indices = @transform_3, window_bounds = array<i64: 128, 128>}, {pipeline_mode = #tpu.pipeline_mode<synchronous>, transform_indices = @transform_4, window_bounds = array<i64: 128, 128>}, {pipeline_mode = #tpu.pipeline_mode<synchronous>, transform_indices = @transform_5, window_bounds = array<i64: 2, 128>}]} {
    %c0 = arith.constant 0 : index
    %c0_0 = arith.constant 0 : index
    %0 = vector.load %arg2[%c0, %c0_0] : memref<1x128xf32, #tpu.memory_space<vmem>>, vector<1x128xf32>
    %c0_1 = arith.constant 0 : index
    %c0_2 = arith.constant 0 : index
    %1 = vector.load %arg1[%c0_1, %c0_2] : memref<2x128xf32, #tpu.memory_space<vmem>>, vector<2x128xf32>
    %2 = vector.broadcast %0 : vector<1x128xf32> to vector<2x128xf32>
    %3 = arith.mulf %2, %1 : vector<2x128xf32>
    %c0_3 = arith.constant 0 : index
    %c0_4 = arith.constant 0 : index
    %4 = vector.load %arg3[%c0_3, %c0_4] : memref<1x128xf32, #tpu.memory_space<vmem>>, vector<1x128xf32>
    %5 = vector.broadcast %4 : vector<1x128xf32> to vector<2x128xf32>
    %6 = arith.addf %3, %5 : vector<2x128xf32>
    %c0_5 = arith.constant 0 : index
    %c0_6 = arith.constant 0 : index
    %7 = vector.load %arg4[%c0_5, %c0_6] : memref<128x128xf32, #tpu.memory_space<vmem>>, vector<128x128xf32>
    %cst = arith.constant dense<0.000000e+00> : vector<2x128xf32>
    %8 = tpu.matmul %6, %7, %cst {dimension_numbers = #tpu.dot_dimension_numbers<[1], [0], [0], [1], [0, 0, 1, 1], [], []>} : vector<2x128xf32>, vector<128x128xf32>, vector<2x128xf32> -> vector<2x128xf32>
    %cst_7 = arith.constant 0.000000e+00 : f32
    %9 = vector.broadcast %cst_7 : f32 to vector<2x128xf32>
    %10 = arith.maximumf %8, %9 : vector<2x128xf32>
    %c0_8 = arith.constant 0 : index
    %c0_9 = arith.constant 0 : index
    %11 = vector.load %arg5[%c0_8, %c0_9] : memref<128x128xf32, #tpu.memory_space<vmem>>, vector<128x128xf32>
    %cst_10 = arith.constant dense<0.000000e+00> : vector<2x128xf32>
    %12 = tpu.matmul %10, %11, %cst_10 {dimension_numbers = #tpu.dot_dimension_numbers<[1], [0], [0], [1], [0, 0, 1, 1], [], []>} : vector<2x128xf32>, vector<128x128xf32>, vector<2x128xf32> -> vector<2x128xf32>
    %cst_11 = arith.constant 0.000000e+00 : f32
    %13 = vector.broadcast %cst_11 : f32 to vector<2x128xf32>
    %14 = arith.subf %13, %12 : vector<2x128xf32>
    %15 = math.exp %14 : vector<2x128xf32>
    %cst_12 = arith.constant 1.000000e+00 : f32
    %16 = vector.broadcast %cst_12 : f32 to vector<2x128xf32>
    %17 = arith.addf %16, %15 : vector<2x128xf32>
    %cst_13 = arith.constant 1.000000e+00 : f32
    %18 = vector.broadcast %cst_13 : f32 to vector<2x128xf32>
    %19 = arith.divf %18, %17 : vector<2x128xf32>
    %c0_14 = arith.constant 0 : index
    %c0_15 = arith.constant 0 : index
    %20 = vector.load %arg6[%c0_14, %c0_15] : memref<2x128xf32, #tpu.memory_space<vmem>>, vector<2x128xf32>
    tpu.vector_store %arg6[%c0_14, %c0_15], %19 {strides = array<i32>} : memref<2x128xf32, #tpu.memory_space<vmem>>, vector<2x128xf32>,
    return
  }
  func.func @transform_0(%arg0: i32) -> (i32, i32) {
    %c0_i32 = arith.constant 0 : i32
    %c0_i32_0 = arith.constant 0 : i32
    %c0_i32_1 = arith.constant 0 : i32
    return %c0_i32, %c0_i32_0 : i32, i32
  }
  func.func @transform_1(%arg0: i32) -> (i32, i32) {
    %c0_i32 = arith.constant 0 : i32
    %c0_i32_0 = arith.constant 0 : i32
    %c0_i32_1 = arith.constant 0 : i32
    return %c0_i32, %c0_i32_0 : i32, i32
  }
  func.func @transform_2(%arg0: i32) -> (i32, i32) {
    %c0_i32 = arith.constant 0 : i32
    %c0_i32_0 = arith.constant 0 : i32
    %c0_i32_1 = arith.constant 0 : i32
    return %c0_i32, %c0_i32_0 : i32, i32
  }
  func.func @transform_3(%arg0: i32) -> (i32, i32) {
    %c0_i32 = arith.constant 0 : i32
    %c0_i32_0 = arith.constant 0 : i32
    %c0_i32_1 = arith.constant 0 : i32
    return %c0_i32, %c0_i32_0 : i32, i32
  }
  func.func @transform_4(%arg0: i32) -> (i32, i32) {
    %c0_i32 = arith.constant 0 : i32
    %c0_i32_0 = arith.constant 0 : i32
    %c0_i32_1 = arith.constant 0 : i32
    return %c0_i32, %c0_i32_0 : i32, i32
  }
  func.func @transform_5(%arg0: i32) -> (i32, i32) {
    %c0_i32 = arith.constant 0 : i32
    %c0_i32_0 = arith.constant 0 : i32
    %c0_i32_1 = arith.constant 0 : i32
    return %c0_i32, %c0_i32_0 : i32, i32
  }
}

module attributes {stable_mosaic.version = 11 : i64} {
  func.func @_finalize_kernel(%arg0: i32, %arg1: i32, %arg2: memref<1x64x128xf32, #tpu.memory_space<vmem>>, %arg3: memref<1x64x128xf32, #tpu.memory_space<vmem>>, %arg4: memref<1x1x128xf32, #tpu.memory_space<vmem>>, %arg5: memref<1x128xf32, #tpu.memory_space<vmem>>, %arg6: memref<1x128xf32, #tpu.memory_space<vmem>>, %arg7: memref<1x64x128xf32, #tpu.memory_space<vmem>>) attributes {dimension_semantics = [#tpu.dimension_semantics<parallel>, #tpu.dimension_semantics<parallel>], iteration_bounds = array<i64: 2, 1>, scalar_prefetch = 0 : i64, scratch_operands = 0 : i64, tpu.core_type = #tpu.core_type<tc>, window_params = [{transform_indices = @transform_0, window_bounds = array<i64: 1, 64, 128>}, {transform_indices = @transform_1, window_bounds = array<i64: 1, 64, 128>}, {transform_indices = @transform_2, window_bounds = array<i64: 1, 1, 128>}, {pipeline_mode = #tpu.pipeline_mode<synchronous>, transform_indices = @transform_3, window_bounds = array<i64: 1, 128>}, {pipeline_mode = #tpu.pipeline_mode<synchronous>, transform_indices = @transform_4, window_bounds = array<i64: 1, 128>}, {transform_indices = @transform_5, window_bounds = array<i64: 1, 64, 128>}]} {
    %c0 = arith.constant 0 : index
    %c0_0 = arith.constant 0 : index
    %c0_1 = arith.constant 0 : index
    %0 = vector.load %arg2[%c0, %c0_0, %c0_1] : memref<1x64x128xf32, #tpu.memory_space<vmem>>, vector<1x64x128xf32>
    %1 = vector.shape_cast %0 : vector<1x64x128xf32> to vector<64x128xf32>
    %c0_2 = arith.constant 0 : index
    %c0_3 = arith.constant 0 : index
    %2 = vector.load %arg5[%c0_2, %c0_3] : memref<1x128xf32, #tpu.memory_space<vmem>>, vector<1x128xf32>
    %3 = vector.broadcast %2 : vector<1x128xf32> to vector<64x128xf32>
    %4 = arith.mulf %3, %1 : vector<64x128xf32>
    %c0_4 = arith.constant 0 : index
    %c0_5 = arith.constant 0 : index
    %5 = vector.load %arg6[%c0_4, %c0_5] : memref<1x128xf32, #tpu.memory_space<vmem>>, vector<1x128xf32>
    %6 = vector.broadcast %5 : vector<1x128xf32> to vector<64x128xf32>
    %7 = arith.addf %4, %6 : vector<64x128xf32>
    %c0_6 = arith.constant 0 : index
    %c0_7 = arith.constant 0 : index
    %c0_8 = arith.constant 0 : index
    %8 = vector.load %arg4[%c0_6, %c0_7, %c0_8] : memref<1x1x128xf32, #tpu.memory_space<vmem>>, vector<1x1x128xf32>
    %9 = vector.shape_cast %8 : vector<1x1x128xf32> to vector<1x128xf32>
    %10 = vector.broadcast %9 : vector<1x128xf32> to vector<64x128xf32>
    %11 = arith.mulf %7, %10 : vector<64x128xf32>
    %c0_9 = arith.constant 0 : index
    %c0_10 = arith.constant 0 : index
    %c0_11 = arith.constant 0 : index
    %12 = vector.load %arg3[%c0_9, %c0_10, %c0_11] : memref<1x64x128xf32, #tpu.memory_space<vmem>>, vector<1x64x128xf32>
    %13 = vector.shape_cast %12 : vector<1x64x128xf32> to vector<64x128xf32>
    %14 = arith.addf %11, %13 : vector<64x128xf32>
    %cst = arith.constant 0.000000e+00 : f32
    %15 = vector.broadcast %cst : f32 to vector<64x128xf32>
    %16 = arith.maximumf %14, %15 : vector<64x128xf32>
    %c0_12 = arith.constant 0 : index
    %c0_13 = arith.constant 0 : index
    %c0_14 = arith.constant 0 : index
    %17 = vector.load %arg7[%c0_12, %c0_13, %c0_14] : memref<1x64x128xf32, #tpu.memory_space<vmem>>, vector<1x64x128xf32>
    %18 = vector.shape_cast %17 : vector<1x64x128xf32> to vector<64x128xf32>
    %19 = vector.shape_cast %16 : vector<64x128xf32> to vector<1x64x128xf32>
    tpu.vector_store %arg7[%c0_12, %c0_13, %c0_14], %19 {strides = array<i32>} : memref<1x64x128xf32, #tpu.memory_space<vmem>>, vector<1x64x128xf32>,
    return
  }
  func.func @transform_0(%arg0: i32, %arg1: i32) -> (i32, i32, i32) {
    %c0_i32 = arith.constant 0 : i32
    %c0_i32_0 = arith.constant 0 : i32
    return %arg0, %arg1, %c0_i32 : i32, i32, i32
  }
  func.func @transform_1(%arg0: i32, %arg1: i32) -> (i32, i32, i32) {
    %c0_i32 = arith.constant 0 : i32
    %c0_i32_0 = arith.constant 0 : i32
    return %arg0, %arg1, %c0_i32 : i32, i32, i32
  }
  func.func @transform_2(%arg0: i32, %arg1: i32) -> (i32, i32, i32) {
    %c0_i32 = arith.constant 0 : i32
    %c0_i32_0 = arith.constant 0 : i32
    %c0_i32_1 = arith.constant 0 : i32
    return %arg0, %c0_i32, %c0_i32_0 : i32, i32, i32
  }
  func.func @transform_3(%arg0: i32, %arg1: i32) -> (i32, i32) {
    %c0_i32 = arith.constant 0 : i32
    %c0_i32_0 = arith.constant 0 : i32
    %c0_i32_1 = arith.constant 0 : i32
    return %c0_i32, %c0_i32_0 : i32, i32
  }
  func.func @transform_4(%arg0: i32, %arg1: i32) -> (i32, i32) {
    %c0_i32 = arith.constant 0 : i32
    %c0_i32_0 = arith.constant 0 : i32
    %c0_i32_1 = arith.constant 0 : i32
    return %c0_i32, %c0_i32_0 : i32, i32
  }
  func.func @transform_5(%arg0: i32, %arg1: i32) -> (i32, i32, i32) {
    %c0_i32 = arith.constant 0 : i32
    %c0_i32_0 = arith.constant 0 : i32
    return %arg0, %arg1, %c0_i32 : i32, i32, i32
  }
}

</mosaic_0001>

<llo_original>
// kernel: new_bottleneck_forward.6
$region0: #{new_bottleneck_forward.6}
  #allocation0 [shape = 'u32[]', space=smem, size = 0x4, offset = 0x4, fixed_abs, tag = 'smem constant byte address 0x4 - core index']
  #allocation1 [shape = 'u32[72,128]{1,0:T(1,128)}', space=vmem, size = 0x9000, scoped, tag = 'internal scratch']
  %s0 = inlined_call_operand.vmem [shape: f32[2,64,128], index: 0, kind: input, shape index: {}]
  %s1 = inlined_call_operand.vmem [shape: f32[128,128], index: 1, kind: input, shape index: {}]
  %s2 = inlined_call_operand.vmem [shape: f32[2,64,128], index: 2, kind: output, shape index: {0}]
  %s3 = inlined_call_operand.vmem [shape: f32[2,1,1,128], index: 3, kind: output, shape index: {1}]
  %s4 = inlined_call_operand.vmem [shape: f32[2,1,1,128], index: 4, kind: output, shape index: {2}]
  %5 = xla_tuple %s2, %s3, %s4
  %s6 = sld [smem:[#allocation0]]
  $region57: #{new_bottleneck_forward.6} parent=0
    _
  %s8 = ssub.s32 1, %s6
  %s9 = scalar_select 0, %s8, %s6
  loop: start=0, step=1, limit=4
  $region2: #{new_bottleneck_forward.6} parent=0 // loop_pre_header
    _
  $region3: #{new_bottleneck_forward.6} parent=0 // loop_header
    %s11 = sphi 0, %s15
    %p12 = scmp.ge.s32.totalorder %s11, 4
    %s18 = sphi 0, %s30
    %s19 = sphi 0, %s26
    %s20 = sphi 0, %s18
    %s21 = sphi 0, %s19
    %s22 = sphi 0, %s20
    %s23 = sphi 0, %s21
    %s35 = sphi 0, %s37
    %s38 = sphi 0, %s35
    %s39 = sphi 0, %s38
    %s55 = sphi 0, %s39
    %s59 = sphi 0, %s59
    %s61 = sphi 0, %s59
    %s62 = sphi 0, %s61
    %s76 = sphi 0, %s62
    %s84 = sphi 0, %s86
    %s87 = sphi 0, %s84
    %s88 = sphi 0, %s87
    %s104 = sphi 0, %s88
    %s112 = sphi 0, %s114
    %s115 = sphi 0, %s112
    %s116 = sphi 0, %s115
    %s132 = sphi 0, %s116
    %s140 = sphi 0, %s142
    %s143 = sphi 0, %s140
    %s144 = sphi 0, %s143
    %s160 = sphi 0, %s144
  $region4: #{new_bottleneck_forward.6} parent=0 // loop_header_branch
    %14 = sbr.rel (%p12) target = $region8
  $region5: #{new_bottleneck_forward.6} parent=0 // loop_body
    %s16 = ssub.s32 %s11, 1
    %s17 = ssub.s32 %s11, 2
    %s24 = sadd.s32 1, %s19
    %p25 = scmp.ge.s32.totalorder %s24, 1
    %s26 = scalar_select %p25, 0, %s24
    %s27 = sadd.s32 1, %s18
    %s28 = scalar_select %p25, %s27, %s18
    %p29 = scmp.ge.s32.totalorder %s28, 2
    %s30 = scalar_select %p29, 0, %s28
    %s31 = ssub.s32 %s18, %s30
    %s32 = ssub.s32 %s19, %s26
    %s33 = sor.u32 %s31, %s32
    %p34 = scmp.eq.s32.totalorder %s33, 0
    %s36 = sadd.s32 %s35, 1
    %s37 = scalar_select %p34, %s35, %s36
    %p40 = pneg %p34
    %p41 = scmp.eq.s32.totalorder %s11, 1
    %p42 = por %p40, %p41
    %p43 = scmp.ne.s32.totalorder %s35, %s38
    %p44 = scmp.eq.s32.totalorder %s11, 0
    %p45 = por %p43, %p44
    %p46 = scmp.ne.s32.totalorder %s35, %s38
    %p47 = scmp.eq.s32.totalorder %s16, 1
    %p48 = por %p46, %p47
    %p49 = scmp.ne.s32.totalorder %s38, %s39
    %p50 = scmp.eq.s32.totalorder %s16, 0
    %p51 = por %p49, %p50
    %p52 = scmp.ne.s32.totalorder %s38, %s39
    %p53 = scmp.eq.s32.totalorder %s17, 1
    %p54 = por %p52, %p53
    %p56 = scmp.ne.s32.totalorder %s39, %s55
    %p57 = scmp.eq.s32.totalorder %s17, 0
    %p58 = por %p56, %p57
    %s60 = sadd.s32 %s59, 1
    %p63 = scmp.eq.s32.totalorder %s11, 1
    %p64 = scmp.ne.s32.totalorder %s59, %s61
    %p65 = scmp.eq.s32.totalorder %s11, 0
    %p66 = por %p64, %p65
    %p67 = scmp.ne.s32.totalorder %s59, %s61
    %p68 = scmp.eq.s32.totalorder %s16, 1
    %p69 = por %p67, %p68
    %p70 = scmp.ne.s32.totalorder %s61, %s62
    %p71 = scmp.eq.s32.totalorder %s16, 0
    %p72 = por %p70, %p71
    %p73 = scmp.ne.s32.totalorder %s61, %s62
    %p74 = scmp.eq.s32.totalorder %s17, 1
    %p75 = por %p73, %p74
    %p77 = scmp.ne.s32.totalorder %s62, %s76
    %p78 = scmp.eq.s32.totalorder %s17, 0
    %p79 = por %p77, %p78
    %s80 = ssub.s32 %s18, %s30
    %s81 = ssub.s32 %s19, %s26
    %s82 = sor.u32 %s80, %s81
    %p83 = scmp.eq.s32.totalorder %s82, 0
    %s85 = sadd.s32 %s84, 1
    %s86 = scalar_select %p83, %s84, %s85
    %p89 = pneg %p83
    %p90 = scmp.eq.s32.totalorder %s11, 1
    %p91 = por %p89, %p90
    %p92 = scmp.ne.s32.totalorder %s84, %s87
    %p93 = scmp.eq.s32.totalorder %s11, 0
    %p94 = por %p92, %p93
    %p95 = scmp.ne.s32.totalorder %s84, %s87
    %p96 = scmp.eq.s32.totalorder %s16, 1
    %p97 = por %p95, %p96
    %p98 = scmp.ne.s32.totalorder %s87, %s88
    %p99 = scmp.eq.s32.totalorder %s16, 0
    %p100 = por %p98, %p99
    %p101 = scmp.ne.s32.totalorder %s87, %s88
    %p102 = scmp.eq.s32.totalorder %s17, 1
    %p103 = por %p101, %p102
    %p105 = scmp.ne.s32.totalorder %s88, %s104
    %p106 = scmp.eq.s32.totalorder %s17, 0
    %p107 = por %p105, %p106
    %s108 = ssub.s32 %s18, %s30
    %s109 = ssub.s32 %s19, %s26
    %s110 = sor.u32 %s108, %s109
    %p111 = scmp.eq.s32.totalorder %s110, 0
    %s113 = sadd.s32 %s112, 1
    %s114 = scalar_select %p111, %s112, %s113
    %p117 = pneg %p111
    %p118 = scmp.eq.s32.totalorder %s11, 1
    %p119 = por %p117, %p118
    %p120 = scmp.ne.s32.totalorder %s112, %s115
    %p121 = scmp.eq.s32.totalorder %s11, 0
    %p122 = por %p120, %p121
    %p123 = scmp.ne.s32.totalorder %s112, %s115
    %p124 = scmp.eq.s32.totalorder %s16, 1
    %p125 = por %p123, %p124
    %p126 = scmp.ne.s32.totalorder %s115, %s116
    %p127 = scmp.eq.s32.totalorder %s16, 0
    %p128 = por %p126, %p127
    %p129 = scmp.ne.s32.totalorder %s115, %s116
    %p130 = scmp.eq.s32.totalorder %s17, 1
    %p131 = por %p129, %p130
    %p133 = scmp.ne.s32.totalorder %s116, %s132
    %p134 = scmp.eq.s32.totalorder %s17, 0
    %p135 = por %p133, %p134
    %s136 = ssub.s32 %s18, %s30
    %s137 = ssub.s32 %s19, %s26
    %s138 = sor.u32 %s136, %s137
    %p139 = scmp.eq.s32.totalorder %s138, 0
    %s141 = sadd.s32 %s140, 1
    %s142 = scalar_select %p139, %s140, %s141
    %p145 = pneg %p139
    %p146 = scmp.eq.s32.totalorder %s11, 1
    %p147 = por %p145, %p146
    %p148 = scmp.ne.s32.totalorder %s140, %s143
    %p149 = scmp.eq.s32.totalorder %s11, 0
    %p150 = por %p148, %p149
    %p151 = scmp.ne.s32.totalorder %s140, %s143
    %p152 = scmp.eq.s32.totalorder %s16, 1
    %p153 = por %p151, %p152
    %p154 = scmp.ne.s32.totalorder %s143, %s144
    %p155 = scmp.eq.s32.totalorder %s16, 0
    %p156 = por %p154, %p155
    %p157 = scmp.ne.s32.totalorder %s143, %s144
    %p158 = scmp.eq.s32.totalorder %s17, 1
    %p159 = por %p157, %p158
    %p161 = scmp.ne.s32.totalorder %s144, %s160
    %p162 = scmp.eq.s32.totalorder %s17, 0
    %p163 = por %p161, %p162
    %p164 = scmp.le.s32.totalorder 1, %s11
    %p165 = scmp.lt.s32.totalorder %s11, 3
    %p166 = pnand %p164, %p165
    %p167 = pneg %p166
    // Predicated region
    $region9: #{new_bottleneck_forward.6} parent=5 // pred_check
      _
    $region10: #{new_bottleneck_forward.6} parent=5 // pred_check_branch
      %169 = sbr.rel (%p166) target = $region12
    $region11: #{new_bottleneck_forward.6} parent=5 // pred_region
      %s170 = ssub.s32 %s11, 1
      // Predicated region
      $region13: #{new_bottleneck_forward.6} parent=11 // pred_check
        %p171 = pneg %p72
      $region14: #{new_bottleneck_forward.6} parent=11 // pred_check_branch
        %173 = sbr.rel (%p171) target = $region16
      $region15: #{new_bottleneck_forward.6} parent=11 // pred_region
        _
      $region16: #{new_bottleneck_forward.6} parent=11 // pred_fallthru
        _
    $region12: #{new_bottleneck_forward.6} parent=5 // pred_fallthru
      _
    %p174 = scmp.lt.s32.totalorder %s11, 2
    // Predicated region
    $region17: #{new_bottleneck_forward.6} parent=5 // pred_check
      %p175 = pneg %p174
    $region18: #{new_bottleneck_forward.6} parent=5 // pred_check_branch
      %177 = sbr.rel (%p175) target = $region20
    $region19: #{new_bottleneck_forward.6} parent=5 // pred_region
      // Predicated region
      $region21: #{new_bottleneck_forward.6} parent=19 // pred_check
        %p178 = pneg %p45
      $region22: #{new_bottleneck_forward.6} parent=19 // pred_check_branch
        %180 = sbr.rel (%p178) target = $region24
      $region23: #{new_bottleneck_forward.6} parent=19 // pred_region
        %s181 = smul.u32 8, %s19
        %p182 = scmp.lt.s32.totalorder %s18, 1
        %s183 = scalar_select %p182, %s18, 1
        %p184 = scmp.lt.s32.totalorder %s181, 7
        %s185 = scalar_select %p184, %s181, 7
        %s186 = smul.addr %s183, 8
        %s187 = sadd.s32 %s185, %s186
        %s188 = smul.addr %s187, 8
        %s189 = scalar_lea.vmem %s0, %s188
        %s190 = smul.u32 8, %s19
      $region24: #{new_bottleneck_forward.6} parent=19 // pred_fallthru
        _
    $region20: #{new_bottleneck_forward.6} parent=5 // pred_fallthru
      _
    %p191 = scmp.le.s32.totalorder 1, %s11
    %p192 = scmp.lt.s32.totalorder %s11, 3
    %p193 = pnand %p191, %p192
    %p194 = pneg %p193
    // Predicated region
    $region25: #{new_bottleneck_forward.6} parent=5 // pred_check
      _
    $region26: #{new_bottleneck_forward.6} parent=5 // pred_check_branch
      %196 = sbr.rel (%p193) target = $region28
    $region27: #{new_bottleneck_forward.6} parent=5 // pred_region
      %s197 = ssub.s32 %s11, 1
      %s198 = smul.u32 8, %s21
      %p199 = scmp.lt.s32.totalorder %s20, 1
      %s200 = scalar_select %p199, %s20, 1
      %p201 = scmp.lt.s32.totalorder %s198, 7
      %s202 = scalar_select %p201, %s198, 7
      %s203 = smul.addr %s200, 8
      %s204 = sadd.s32 %s202, %s203
      %s205 = smul.addr %s204, 8
      %s206 = scalar_lea.vmem %s0, %s205
      %p207 = pneg %p51
      %p208 = pneg %p48
      %p209 = pneg %p72
      %p210 = pneg %p69
      %p211 = pneg %p100
      %p212 = pneg %p97
      %s213 = smul.u32 8, %s21
      %p214 = scmp.lt.s32.totalorder %s20, 1
      %s215 = scalar_select %p214, %s20, 1
      %p216 = scmp.lt.s32.totalorder %s213, 7
      %s217 = scalar_select %p216, %s213, 7
      %s218 = smul.addr %s215, 8
      %s219 = sadd.s32 %s217, %s218
      %s220 = smul.addr %s219, 8
      %s221 = scalar_lea.vmem %s2, %s220
      %p222 = pneg %p128
      %p223 = pneg %p125
      %p224 = scmp.lt.s32.totalorder %s20, 1
      %s225 = scalar_select %p224, %s20, 1
      %p226 = scmp.lt.s32.totalorder %s21, 0
      %s227 = scalar_select %p226, %s21, 0
      %s228 = sadd.s32 %s227, %s225
      %s229 = scalar_lea.vmem %s3, %s228
      %p230 = pneg %p156
      %p231 = pneg %p153
      %p232 = scmp.lt.s32.totalorder %s20, 1
      %s233 = scalar_select %p232, %s20, 1
      %p234 = scmp.lt.s32.totalorder %s21, 0
      %s235 = scalar_select %p234, %s21, 0
      %s236 = sadd.s32 %s235, %s233
      %s237 = scalar_lea.vmem %s4, %s236
      %s238 = smul.u32 8, %s21
      %p239 = scmp.lt.s32.totalorder %s20, 1
      %s240 = scalar_select %p239, %s20, 1
      %p241 = scmp.lt.s32.totalorder %s238, 7
      %s242 = scalar_select %p241, %s238, 7
      %s243 = smul.addr %s240, 8
      %s244 = sadd.s32 %s242, %s243
      %s245 = smul.addr %s244, 8
      %s246 = scalar_lea.vmem %s0, %s245
      %s247 = smul.u32 8, %s21
      %s248 = smul.u32 8, %s21
      %p249 = scmp.lt.s32.totalorder %s20, 1
      %s250 = scalar_select %p249, %s20, 1
      %p251 = scmp.lt.s32.totalorder %s248, 7
      %s252 = scalar_select %p251, %s248, 7
      %s253 = smul.addr %s250, 8
      %s254 = sadd.s32 %s252, %s253
      %s255 = smul.addr %s254, 8
      %s256 = scalar_lea.vmem %s2, %s255
      %s257 = smul.u32 8, %s21
      %p258 = scmp.lt.s32.totalorder %s20, 1
      %s259 = scalar_select %p258, %s20, 1
      %p260 = scmp.lt.s32.totalorder %s21, 0
      %s261 = scalar_select %p260, %s21, 0
      %s262 = sadd.s32 %s261, %s259
      %s263 = scalar_lea.vmem %s3, %s262
      %p264 = scmp.lt.s32.totalorder %s20, 1
      %s265 = scalar_select %p264, %s20, 1
      %p266 = scmp.lt.s32.totalorder %s21, 0
      %s267 = scalar_select %p266, %s21, 0
      %s268 = sadd.s32 %s267, %s265
      %s269 = scalar_lea.vmem %s4, %s268
      %v270 = vld [vmem:[%s246] sm:$0xff]
      %v271 = vld [vmem:[%s246 + $0x8] sm:$0xff]
      %v272 = vld [vmem:[%s246 + $0x10] sm:$0xff]
      %v273 = vld [vmem:[%s246 + $0x18] sm:$0xff]
      %v274 = vld [vmem:[%s246 + $0x20] sm:$0xff]
      %v275 = vld [vmem:[%s246 + $0x28] sm:$0xff]
      %v276 = vld [vmem:[%s246 + $0x30] sm:$0xff]
      %v277 = vld [vmem:[%s246 + $0x38] sm:$0xff]
      %v278 = vld [vmem:[%s1] sm:$0xff]
      %v279 = vld [vmem:[%s1 + $0x8] sm:$0xff]
      %v280 = vld [vmem:[%s1 + $0x10] sm:$0xff]
      %v281 = vld [vmem:[%s1 + $0x18] sm:$0xff]
      %v282 = vld [vmem:[%s1 + $0x20] sm:$0xff]
      %v283 = vld [vmem:[%s1 + $0x28] sm:$0xff]
      %v284 = vld [vmem:[%s1 + $0x30] sm:$0xff]
      %v285 = vld [vmem:[%s1 + $0x38] sm:$0xff]
      %v286 = vld [vmem:[%s1 + $0x40] sm:$0xff]
      %v287 = vld [vmem:[%s1 + $0x48] sm:$0xff]
      %v288 = vld [vmem:[%s1 + $0x50] sm:$0xff]
      %v289 = vld [vmem:[%s1 + $0x58] sm:$0xff]
      %v290 = vld [vmem:[%s1 + $0x60] sm:$0xff]
      %v291 = vld [vmem:[%s1 + $0x68] sm:$0xff]
      %v292 = vld [vmem:[%s1 + $0x70] sm:$0xff]
      %v293 = vld [vmem:[%s1 + $0x78] sm:$0xff]
      %294 = vmatpush.msra.mxu0 %v293
      %295 = vmatpush.msra.mxu0 %v292
      %296 = vmatpush.msra.mxu0 %v291
      %297 = vmatpush.msra.mxu0 %v290
      %298 = vmatpush.msra.mxu0 %v289
      %299 = vmatpush.msra.mxu0 %v288
      %300 = vmatpush.msra.mxu0 %v287
      %301 = vmatpush.msra.mxu0 %v286
      %302 = vmatpush.msra.mxu0 %v285
      %303 = vmatpush.msra.mxu0 %v284
      %304 = vmatpush.msra.mxu0 %v283
      %305 = vmatpush.msra.mxu0 %v282
      %306 = vmatpush.msra.mxu0 %v281
      %307 = vmatpush.msra.mxu0 %v280
      %308 = vmatpush.msra.mxu0 %v279
      %309 = vmatpush.msra.mxu0 %v278
      %310 = vmatmul.f32.gmra.mxu0 %v270
      %v311 = vpop.f32.mrf.mxu0
      %v312 = vadd.f32 0.0, %v311
      %313 = vmatmul.f32.gmra.mxu0 %v271
      %v314 = vpop.f32.mrf.mxu0
      %v315 = vadd.f32 0.0, %v314
      %316 = vmatmul.f32.gmra.mxu0 %v272
      %v317 = vpop.f32.mrf.mxu0
      %v318 = vadd.f32 0.0, %v317
      %319 = vmatmul.f32.gmra.mxu0 %v273
      %v320 = vpop.f32.mrf.mxu0
      %v321 = vadd.f32 0.0, %v320
      %322 = vmatmul.f32.gmra.mxu0 %v274
      %v323 = vpop.f32.mrf.mxu0
      %v324 = vadd.f32 0.0, %v323
      %325 = vmatmul.f32.gmra.mxu0 %v275
      %v326 = vpop.f32.mrf.mxu0
      %v327 = vadd.f32 0.0, %v326
      %328 = vmatmul.f32.gmra.mxu0 %v276
      %v329 = vpop.f32.mrf.mxu0
      %v330 = vadd.f32 0.0, %v329
      %331 = vmatmul.f32.gmra.mxu0 %v277
      %v332 = vpop.f32.mrf.mxu0
      %v333 = vadd.f32 0.0, %v332
      %334 = vdwg.mxu0
      %335 = vst [vmem:[%s256] sm:$0xff] %v312
      %336 = vst [vmem:[%s256 + $0x8] sm:$0xff] %v315
      %337 = vst [vmem:[%s256 + $0x10] sm:$0xff] %v318
      %338 = vst [vmem:[%s256 + $0x18] sm:$0xff] %v321
      %339 = vst [vmem:[%s256 + $0x20] sm:$0xff] %v324
      %340 = vst [vmem:[%s256 + $0x28] sm:$0xff] %v327
      %341 = vst [vmem:[%s256 + $0x30] sm:$0xff] %v330
      %342 = vst [vmem:[%s256 + $0x38] sm:$0xff] %v333
      %v343 = vadd.f32 %v312, %v315
      %v344 = vadd.f32 %v343, %v318
      %v345 = vadd.f32 %v344, %v321
      %v346 = vadd.f32 %v345, %v324
      %v347 = vadd.f32 %v346, %v327
      %v348 = vadd.f32 %v347, %v330
      %v349 = vadd.f32 %v348, %v333
      %v350 = vrot.slane %v349, 4
      %v351 = vadd.f32 %v349, %v350
      %v352 = vrot.slane %v351, 2
      %v353 = vadd.f32 %v351, %v352
      %v354 = vrot.slane %v353, 1
      %v355 = vadd.f32 %v353, %v354
      %356 = vst [vmem:[%s263] sm:$0x1] %v355
      %v357 = vmul.f32 %v312, %v312
      %v358 = vmul.f32 %v315, %v315
      %v359 = vmul.f32 %v318, %v318
      %v360 = vmul.f32 %v321, %v321
      %v361 = vmul.f32 %v324, %v324
      %v362 = vmul.f32 %v327, %v327
      %v363 = vmul.f32 %v330, %v330
      %v364 = vmul.f32 %v333, %v333
      %v365 = vadd.f32 %v357, %v358
      %v366 = vadd.f32 %v365, %v359
      %v367 = vadd.f32 %v366, %v360
      %v368 = vadd.f32 %v367, %v361
      %v369 = vadd.f32 %v368, %v362
      %v370 = vadd.f32 %v369, %v363
      %v371 = vadd.f32 %v370, %v364
      %v372 = vrot.slane %v371, 4
      %v373 = vadd.f32 %v371, %v372
      %v374 = vrot.slane %v373, 2
      %v375 = vadd.f32 %v373, %v374
      %v376 = vrot.slane %v375, 1
      %v377 = vadd.f32 %v375, %v376
      %378 = vst [vmem:[%s269] sm:$0x1] %v377
      %s379 = smul.u32 8, %s21
      %p380 = scmp.lt.s32.totalorder %s20, 1
      %s381 = scalar_select %p380, %s20, 1
      %p382 = scmp.lt.s32.totalorder %s379, 7
      %s383 = scalar_select %p382, %s379, 7
      %s384 = smul.addr %s381, 8
      %s385 = sadd.s32 %s383, %s384
      %s386 = smul.addr %s385, 8
      %s387 = scalar_lea.vmem %s2, %s386
      %p388 = scmp.lt.s32.totalorder %s20, 1
      %s389 = scalar_select %p388, %s20, 1
      %p390 = scmp.lt.s32.totalorder %s21, 0
      %s391 = scalar_select %p390, %s21, 0
      %s392 = sadd.s32 %s391, %s389
      %s393 = scalar_lea.vmem %s3, %s392
      %p394 = scmp.lt.s32.totalorder %s20, 1
      %s395 = scalar_select %p394, %s20, 1
      %p396 = scmp.lt.s32.totalorder %s21, 0
      %s397 = scalar_select %p396, %s21, 0
      %s398 = sadd.s32 %s397, %s395
      %s399 = scalar_lea.vmem %s4, %s398
      // Predicated region
      $region29: #{new_bottleneck_forward.6} parent=27 // pred_check
        %p400 = pneg %p97
      $region30: #{new_bottleneck_forward.6} parent=27 // pred_check_branch
        %402 = sbr.rel (%p400) target = $region32
      $region31: #{new_bottleneck_forward.6} parent=27 // pred_region
        %s403 = smul.u32 8, %s21
      $region32: #{new_bottleneck_forward.6} parent=27 // pred_fallthru
        _
      // Predicated region
      $region33: #{new_bottleneck_forward.6} parent=27 // pred_check
        %p404 = pneg %p125
      $region34: #{new_bottleneck_forward.6} parent=27 // pred_check_branch
        %406 = sbr.rel (%p404) target = $region36
      $region35: #{new_bottleneck_forward.6} parent=27 // pred_region
        _
      $region36: #{new_bottleneck_forward.6} parent=27 // pred_fallthru
        _
      // Predicated region
      $region37: #{new_bottleneck_forward.6} parent=27 // pred_check
        %p407 = pneg %p153
      $region38: #{new_bottleneck_forward.6} parent=27 // pred_check_branch
        %409 = sbr.rel (%p407) target = $region40
      $region39: #{new_bottleneck_forward.6} parent=27 // pred_region
        _
      $region40: #{new_bottleneck_forward.6} parent=27 // pred_fallthru
        _
    $region28: #{new_bottleneck_forward.6} parent=5 // pred_fallthru
      _
    %p410 = scmp.le.s32.totalorder 2, %s11
    // Predicated region
    $region41: #{new_bottleneck_forward.6} parent=5 // pred_check
      %p411 = pneg %p410
    $region42: #{new_bottleneck_forward.6} parent=5 // pred_check_branch
      %413 = sbr.rel (%p411) target = $region44
    $region43: #{new_bottleneck_forward.6} parent=5 // pred_region
      %s414 = ssub.s32 %s11, 2
      // Predicated region
      $region45: #{new_bottleneck_forward.6} parent=43 // pred_check
        %p415 = pneg %p103
      $region46: #{new_bottleneck_forward.6} parent=43 // pred_check_branch
        %417 = sbr.rel (%p415) target = $region48
      $region47: #{new_bottleneck_forward.6} parent=43 // pred_region
        %s418 = smul.u32 8, %s23
        %p419 = scmp.lt.s32.totalorder %s22, 1
        %s420 = scalar_select %p419, %s22, 1
        %p421 = scmp.lt.s32.totalorder %s418, 7
        %s422 = scalar_select %p421, %s418, 7
        %s423 = smul.addr %s420, 8
        %s424 = sadd.s32 %s422, %s423
        %s425 = smul.addr %s424, 8
        %s426 = scalar_lea.vmem %s2, %s425
      $region48: #{new_bottleneck_forward.6} parent=43 // pred_fallthru
        _
      // Predicated region
      $region49: #{new_bottleneck_forward.6} parent=43 // pred_check
        %p427 = pneg %p131
      $region50: #{new_bottleneck_forward.6} parent=43 // pred_check_branch
        %429 = sbr.rel (%p427) target = $region52
      $region51: #{new_bottleneck_forward.6} parent=43 // pred_region
        %p430 = scmp.lt.s32.totalorder %s22, 1
        %s431 = scalar_select %p430, %s22, 1
        %p432 = scmp.lt.s32.totalorder %s23, 0
        %s433 = scalar_select %p432, %s23, 0
        %s434 = sadd.s32 %s433, %s431
        %s435 = scalar_lea.vmem %s3, %s434
      $region52: #{new_bottleneck_forward.6} parent=43 // pred_fallthru
        _
      // Predicated region
      $region53: #{new_bottleneck_forward.6} parent=43 // pred_check
        %p436 = pneg %p159
      $region54: #{new_bottleneck_forward.6} parent=43 // pred_check_branch
        %438 = sbr.rel (%p436) target = $region56
      $region55: #{new_bottleneck_forward.6} parent=43 // pred_region
        %p439 = scmp.lt.s32.totalorder %s22, 1
        %s440 = scalar_select %p439, %s22, 1
        %p441 = scmp.lt.s32.totalorder %s23, 0
        %s442 = scalar_select %p441, %s23, 0
        %s443 = sadd.s32 %s442, %s440
        %s444 = scalar_lea.vmem %s4, %s443
      $region56: #{new_bottleneck_forward.6} parent=43 // pred_fallthru
        _
    $region44: #{new_bottleneck_forward.6} parent=5 // pred_fallthru
      _
  $region6: #{new_bottleneck_forward.6} parent=0 // loop_footer
    %s15 = sadd.s32 1, %s11
  $region7: #{new_bottleneck_forward.6} parent=0 // loop_footer_branch
    %10 = sbr.rel target = $region3
  $region8: #{new_bottleneck_forward.6} parent=0 // loop_exit
    _

// kernel: new_bottleneck_forward.9
$region0: #{new_bottleneck_forward.9}
  #allocation0 [shape = 'u32[]', space=smem, size = 0x4, offset = 0x4, fixed_abs, tag = 'smem constant byte address 0x4 - core index']
  #allocation1 [shape = 'u32[72,128]{1,0:T(1,128)}', space=vmem, size = 0x9000, scoped, tag = 'internal scratch']
  %s0 = inlined_call_operand.vmem [shape: f32[2,64,128], index: 0, kind: input, shape index: {}]
  %s1 = inlined_call_operand.vmem [shape: f32[1,128], index: 1, kind: input, shape index: {}]
  %s2 = inlined_call_operand.vmem [shape: f32[1,128], index: 2, kind: input, shape index: {}]
  %s3 = inlined_call_operand.vmem [shape: f32[128,128], index: 3, kind: input, shape index: {}]
  %s4 = inlined_call_operand.vmem [shape: f32[2,64,128], index: 4, kind: output, shape index: {0}]
  %s5 = inlined_call_operand.vmem [shape: f32[2,1,1,128], index: 5, kind: output, shape index: {1}]
  %s6 = inlined_call_operand.vmem [shape: f32[2,1,1,128], index: 6, kind: output, shape index: {2}]
  %7 = xla_tuple %s4, %s5, %s6
  %s8 = sld [smem:[#allocation0]]
  $region65: #{new_bottleneck_forward.9} parent=0
    _
  %s10 = ssub.s32 1, %s8
  %s11 = scalar_select 0, %s10, %s8
  loop: start=0, step=1, limit=4
  $region2: #{new_bottleneck_forward.9} parent=0 // loop_pre_header
    _
  $region3: #{new_bottleneck_forward.9} parent=0 // loop_header
    %s13 = sphi 0, %s17
    %p14 = scmp.ge.s32.totalorder %s13, 4
    %s20 = sphi 0, %s32
    %s21 = sphi 0, %s28
    %s22 = sphi 0, %s20
    %s23 = sphi 0, %s21
    %s24 = sphi 0, %s22
    %s25 = sphi 0, %s23
    %s37 = sphi 0, %s39
    %s40 = sphi 0, %s37
    %s41 = sphi 0, %s40
    %s57 = sphi 0, %s41
    %s61 = sphi 0, %s61
    %s63 = sphi 0, %s61
    %s64 = sphi 0, %s63
    %s78 = sphi 0, %s64
    %s82 = sphi 0, %s82
    %s84 = sphi 0, %s82
    %s85 = sphi 0, %s84
    %s99 = sphi 0, %s85
    %s103 = sphi 0, %s103
    %s105 = sphi 0, %s103
    %s106 = sphi 0, %s105
    %s120 = sphi 0, %s106
    %s128 = sphi 0, %s130
    %s131 = sphi 0, %s128
    %s132 = sphi 0, %s131
    %s148 = sphi 0, %s132
    %s156 = sphi 0, %s158
    %s159 = sphi 0, %s156
    %s160 = sphi 0, %s159
    %s176 = sphi 0, %s160
    %s184 = sphi 0, %s186
    %s187 = sphi 0, %s184
    %s188 = sphi 0, %s187
    %s204 = sphi 0, %s188
  $region4: #{new_bottleneck_forward.9} parent=0 // loop_header_branch
    %16 = sbr.rel (%p14) target = $region8
  $region5: #{new_bottleneck_forward.9} parent=0 // loop_body
    %s18 = ssub.s32 %s13, 1
    %s19 = ssub.s32 %s13, 2
    %s26 = sadd.s32 1, %s21
    %p27 = scmp.ge.s32.totalorder %s26, 1
    %s28 = scalar_select %p27, 0, %s26
    %s29 = sadd.s32 1, %s20
    %s30 = scalar_select %p27, %s29, %s20
    %p31 = scmp.ge.s32.totalorder %s30, 2
    %s32 = scalar_select %p31, 0, %s30
    %s33 = ssub.s32 %s20, %s32
    %s34 = ssub.s32 %s21, %s28
    %s35 = sor.u32 %s33, %s34
    %p36 = scmp.eq.s32.totalorder %s35, 0
    %s38 = sadd.s32 %s37, 1
    %s39 = scalar_select %p36, %s37, %s38
    %p42 = pneg %p36
    %p43 = scmp.eq.s32.totalorder %s13, 1
    %p44 = por %p42, %p43
    %p45 = scmp.ne.s32.totalorder %s37, %s40
    %p46 = scmp.eq.s32.totalorder %s13, 0
    %p47 = por %p45, %p46
    %p48 = scmp.ne.s32.totalorder %s37, %s40
    %p49 = scmp.eq.s32.totalorder %s18, 1
    %p50 = por %p48, %p49
    %p51 = scmp.ne.s32.totalorder %s40, %s41
    %p52 = scmp.eq.s32.totalorder %s18, 0
    %p53 = por %p51, %p52
    %p54 = scmp.ne.s32.totalorder %s40, %s41
    %p55 = scmp.eq.s32.totalorder %s19, 1
    %p56 = por %p54, %p55
    %p58 = scmp.ne.s32.totalorder %s41, %s57
    %p59 = scmp.eq.s32.totalorder %s19, 0
    %p60 = por %p58, %p59
    %s62 = sadd.s32 %s61, 1
    %p65 = scmp.eq.s32.totalorder %s13, 1
    %p66 = scmp.ne.s32.totalorder %s61, %s63
    %p67 = scmp.eq.s32.totalorder %s13, 0
    %p68 = por %p66, %p67
    %p69 = scmp.ne.s32.totalorder %s61, %s63
    %p70 = scmp.eq.s32.totalorder %s18, 1
    %p71 = por %p69, %p70
    %p72 = scmp.ne.s32.totalorder %s63, %s64
    %p73 = scmp.eq.s32.totalorder %s18, 0
    %p74 = por %p72, %p73
    %p75 = scmp.ne.s32.totalorder %s63, %s64
    %p76 = scmp.eq.s32.totalorder %s19, 1
    %p77 = por %p75, %p76
    %p79 = scmp.ne.s32.totalorder %s64, %s78
    %p80 = scmp.eq.s32.totalorder %s19, 0
    %p81 = por %p79, %p80
    %s83 = sadd.s32 %s82, 1
    %p86 = scmp.eq.s32.totalorder %s13, 1
    %p87 = scmp.ne.s32.totalorder %s82, %s84
    %p88 = scmp.eq.s32.totalorder %s13, 0
    %p89 = por %p87, %p88
    %p90 = scmp.ne.s32.totalorder %s82, %s84
    %p91 = scmp.eq.s32.totalorder %s18, 1
    %p92 = por %p90, %p91
    %p93 = scmp.ne.s32.totalorder %s84, %s85
    %p94 = scmp.eq.s32.totalorder %s18, 0
    %p95 = por %p93, %p94
    %p96 = scmp.ne.s32.totalorder %s84, %s85
    %p97 = scmp.eq.s32.totalorder %s19, 1
    %p98 = por %p96, %p97
    %p100 = scmp.ne.s32.totalorder %s85, %s99
    %p101 = scmp.eq.s32.totalorder %s19, 0
    %p102 = por %p100, %p101
    %s104 = sadd.s32 %s103, 1
    %p107 = scmp.eq.s32.totalorder %s13, 1
    %p108 = scmp.ne.s32.totalorder %s103, %s105
    %p109 = scmp.eq.s32.totalorder %s13, 0
    %p110 = por %p108, %p109
    %p111 = scmp.ne.s32.totalorder %s103, %s105
    %p112 = scmp.eq.s32.totalorder %s18, 1
    %p113 = por %p111, %p112
    %p114 = scmp.ne.s32.totalorder %s105, %s106
    %p115 = scmp.eq.s32.totalorder %s18, 0
    %p116 = por %p114, %p115
    %p117 = scmp.ne.s32.totalorder %s105, %s106
    %p118 = scmp.eq.s32.totalorder %s19, 1
    %p119 = por %p117, %p118
    %p121 = scmp.ne.s32.totalorder %s106, %s120
    %p122 = scmp.eq.s32.totalorder %s19, 0
    %p123 = por %p121, %p122
    %s124 = ssub.s32 %s20, %s32
    %s125 = ssub.s32 %s21, %s28
    %s126 = sor.u32 %s124, %s125
    %p127 = scmp.eq.s32.totalorder %s126, 0
    %s129 = sadd.s32 %s128, 1
    %s130 = scalar_select %p127, %s128, %s129
    %p133 = pneg %p127
    %p134 = scmp.eq.s32.totalorder %s13, 1
    %p135 = por %p133, %p134
    %p136 = scmp.ne.s32.totalorder %s128, %s131
    %p137 = scmp.eq.s32.totalorder %s13, 0
    %p138 = por %p136, %p137
    %p139 = scmp.ne.s32.totalorder %s128, %s131
    %p140 = scmp.eq.s32.totalorder %s18, 1
    %p141 = por %p139, %p140
    %p142 = scmp.ne.s32.totalorder %s131, %s132
    %p143 = scmp.eq.s32.totalorder %s18, 0
    %p144 = por %p142, %p143
    %p145 = scmp.ne.s32.totalorder %s131, %s132
    %p146 = scmp.eq.s32.totalorder %s19, 1
    %p147 = por %p145, %p146
    %p149 = scmp.ne.s32.totalorder %s132, %s148
    %p150 = scmp.eq.s32.totalorder %s19, 0
    %p151 = por %p149, %p150
    %s152 = ssub.s32 %s20, %s32
    %s153 = ssub.s32 %s21, %s28
    %s154 = sor.u32 %s152, %s153
    %p155 = scmp.eq.s32.totalorder %s154, 0
    %s157 = sadd.s32 %s156, 1
    %s158 = scalar_select %p155, %s156, %s157
    %p161 = pneg %p155
    %p162 = scmp.eq.s32.totalorder %s13, 1
    %p163 = por %p161, %p162
    %p164 = scmp.ne.s32.totalorder %s156, %s159
    %p165 = scmp.eq.s32.totalorder %s13, 0
    %p166 = por %p164, %p165
    %p167 = scmp.ne.s32.totalorder %s156, %s159
    %p168 = scmp.eq.s32.totalorder %s18, 1
    %p169 = por %p167, %p168
    %p170 = scmp.ne.s32.totalorder %s159, %s160
    %p171 = scmp.eq.s32.totalorder %s18, 0
    %p172 = por %p170, %p171
    %p173 = scmp.ne.s32.totalorder %s159, %s160
    %p174 = scmp.eq.s32.totalorder %s19, 1
    %p175 = por %p173, %p174
    %p177 = scmp.ne.s32.totalorder %s160, %s176
    %p178 = scmp.eq.s32.totalorder %s19, 0
    %p179 = por %p177, %p178
    %s180 = ssub.s32 %s20, %s32
    %s181 = ssub.s32 %s21, %s28
    %s182 = sor.u32 %s180, %s181
    %p183 = scmp.eq.s32.totalorder %s182, 0
    %s185 = sadd.s32 %s184, 1
    %s186 = scalar_select %p183, %s184, %s185
    %p189 = pneg %p183
    %p190 = scmp.eq.s32.totalorder %s13, 1
    %p191 = por %p189, %p190
    %p192 = scmp.ne.s32.totalorder %s184, %s187
    %p193 = scmp.eq.s32.totalorder %s13, 0
    %p194 = por %p192, %p193
    %p195 = scmp.ne.s32.totalorder %s184, %s187
    %p196 = scmp.eq.s32.totalorder %s18, 1
    %p197 = por %p195, %p196
    %p198 = scmp.ne.s32.totalorder %s187, %s188
    %p199 = scmp.eq.s32.totalorder %s18, 0
    %p200 = por %p198, %p199
    %p201 = scmp.ne.s32.totalorder %s187, %s188
    %p202 = scmp.eq.s32.totalorder %s19, 1
    %p203 = por %p201, %p202
    %p205 = scmp.ne.s32.totalorder %s188, %s204
    %p206 = scmp.eq.s32.totalorder %s19, 0
    %p207 = por %p205, %p206
    %p208 = scmp.le.s32.totalorder 1, %s13
    %p209 = scmp.lt.s32.totalorder %s13, 3
    %p210 = pnand %p208, %p209
    %p211 = pneg %p210
    // Predicated region
    $region9: #{new_bottleneck_forward.9} parent=5 // pred_check
      _
    $region10: #{new_bottleneck_forward.9} parent=5 // pred_check_branch
      %213 = sbr.rel (%p210) target = $region12
    $region11: #{new_bottleneck_forward.9} parent=5 // pred_region
      %s214 = ssub.s32 %s13, 1
      // Predicated region
      $region13: #{new_bottleneck_forward.9} parent=11 // pred_check
        %p215 = pneg %p74
      $region14: #{new_bottleneck_forward.9} parent=11 // pred_check_branch
        %217 = sbr.rel (%p215) target = $region16
      $region15: #{new_bottleneck_forward.9} parent=11 // pred_region
        _
      $region16: #{new_bottleneck_forward.9} parent=11 // pred_fallthru
        _
      // Predicated region
      $region17: #{new_bottleneck_forward.9} parent=11 // pred_check
        %p218 = pneg %p95
      $region18: #{new_bottleneck_forward.9} parent=11 // pred_check_branch
        %220 = sbr.rel (%p218) target = $region20
      $region19: #{new_bottleneck_forward.9} parent=11 // pred_region
        _
      $region20: #{new_bottleneck_forward.9} parent=11 // pred_fallthru
        _
      // Predicated region
      $region21: #{new_bottleneck_forward.9} parent=11 // pred_check
        %p221 = pneg %p116
      $region22: #{new_bottleneck_forward.9} parent=11 // pred_check_branch
        %223 = sbr.rel (%p221) target = $region24
      $region23: #{new_bottleneck_forward.9} parent=11 // pred_region
        _
      $region24: #{new_bottleneck_forward.9} parent=11 // pred_fallthru
        _
    $region12: #{new_bottleneck_forward.9} parent=5 // pred_fallthru
      _
    %p224 = scmp.lt.s32.totalorder %s13, 2
    // Predicated region
    $region25: #{new_bottleneck_forward.9} parent=5 // pred_check
      %p225 = pneg %p224
    $region26: #{new_bottleneck_forward.9} parent=5 // pred_check_branch
      %227 = sbr.rel (%p225) target = $region28
    $region27: #{new_bottleneck_forward.9} parent=5 // pred_region
      // Predicated region
      $region29: #{new_bottleneck_forward.9} parent=27 // pred_check
        %p228 = pneg %p47
      $region30: #{new_bottleneck_forward.9} parent=27 // pred_check_branch
        %230 = sbr.rel (%p228) target = $region32
      $region31: #{new_bottleneck_forward.9} parent=27 // pred_region
        %s231 = smul.u32 8, %s21
        %p232 = scmp.lt.s32.totalorder %s20, 1
        %s233 = scalar_select %p232, %s20, 1
        %p234 = scmp.lt.s32.totalorder %s231, 7
        %s235 = scalar_select %p234, %s231, 7
        %s236 = smul.addr %s233, 8
        %s237 = sadd.s32 %s235, %s236
        %s238 = smul.addr %s237, 8
        %s239 = scalar_lea.vmem %s0, %s238
        %s240 = smul.u32 8, %s21
      $region32: #{new_bottleneck_forward.9} parent=27 // pred_fallthru
        _
    $region28: #{new_bottleneck_forward.9} parent=5 // pred_fallthru
      _
    %p241 = scmp.le.s32.totalorder 1, %s13
    %p242 = scmp.lt.s32.totalorder %s13, 3
    %p243 = pnand %p241, %p242
    %p244 = pneg %p243
    // Predicated region
    $region33: #{new_bottleneck_forward.9} parent=5 // pred_check
      _
    $region34: #{new_bottleneck_forward.9} parent=5 // pred_check_branch
      %246 = sbr.rel (%p243) target = $region36
    $region35: #{new_bottleneck_forward.9} parent=5 // pred_region
      %s247 = ssub.s32 %s13, 1
      %s248 = smul.u32 8, %s23
      %p249 = scmp.lt.s32.totalorder %s22, 1
      %s250 = scalar_select %p249, %s22, 1
      %p251 = scmp.lt.s32.totalorder %s248, 7
      %s252 = scalar_select %p251, %s248, 7
      %s253 = smul.addr %s250, 8
      %s254 = sadd.s32 %s252, %s253
      %s255 = smul.addr %s254, 8
      %s256 = scalar_lea.vmem %s0, %s255
      %p257 = pneg %p53
      %p258 = pneg %p50
      %p259 = pneg %p74
      %p260 = pneg %p71
      %p261 = pneg %p95
      %p262 = pneg %p92
      %p263 = pneg %p116
      %p264 = pneg %p113
      %p265 = pneg %p144
      %p266 = pneg %p141
      %s267 = smul.u32 8, %s23
      %p268 = scmp.lt.s32.totalorder %s22, 1
      %s269 = scalar_select %p268, %s22, 1
      %p270 = scmp.lt.s32.totalorder %s267, 7
      %s271 = scalar_select %p270, %s267, 7
      %s272 = smul.addr %s269, 8
      %s273 = sadd.s32 %s271, %s272
      %s274 = smul.addr %s273, 8
      %s275 = scalar_lea.vmem %s4, %s274
      %p276 = pneg %p172
      %p277 = pneg %p169
      %p278 = scmp.lt.s32.totalorder %s22, 1
      %s279 = scalar_select %p278, %s22, 1
      %p280 = scmp.lt.s32.totalorder %s23, 0
      %s281 = scalar_select %p280, %s23, 0
      %s282 = sadd.s32 %s281, %s279
      %s283 = scalar_lea.vmem %s5, %s282
      %p284 = pneg %p200
      %p285 = pneg %p197
      %p286 = scmp.lt.s32.totalorder %s22, 1
      %s287 = scalar_select %p286, %s22, 1
      %p288 = scmp.lt.s32.totalorder %s23, 0
      %s289 = scalar_select %p288, %s23, 0
      %s290 = sadd.s32 %s289, %s287
      %s291 = scalar_lea.vmem %s6, %s290
      %s292 = smul.u32 8, %s23
      %p293 = scmp.lt.s32.totalorder %s22, 1
      %s294 = scalar_select %p293, %s22, 1
      %p295 = scmp.lt.s32.totalorder %s292, 7
      %s296 = scalar_select %p295, %s292, 7
      %s297 = smul.addr %s294, 8
      %s298 = sadd.s32 %s296, %s297
      %s299 = smul.addr %s298, 8
      %s300 = scalar_lea.vmem %s0, %s299
      %s301 = smul.u32 8, %s23
      %s302 = smul.u32 8, %s23
      %p303 = scmp.lt.s32.totalorder %s22, 1
      %s304 = scalar_select %p303, %s22, 1
      %p305 = scmp.lt.s32.totalorder %s302, 7
      %s306 = scalar_select %p305, %s302, 7
      %s307 = smul.addr %s304, 8
      %s308 = sadd.s32 %s306, %s307
      %s309 = smul.addr %s308, 8
      %s310 = scalar_lea.vmem %s4, %s309
      %s311 = smul.u32 8, %s23
      %p312 = scmp.lt.s32.totalorder %s22, 1
      %s313 = scalar_select %p312, %s22, 1
      %p314 = scmp.lt.s32.totalorder %s23, 0
      %s315 = scalar_select %p314, %s23, 0
      %s316 = sadd.s32 %s315, %s313
      %s317 = scalar_lea.vmem %s5, %s316
      %p318 = scmp.lt.s32.totalorder %s22, 1
      %s319 = scalar_select %p318, %s22, 1
      %p320 = scmp.lt.s32.totalorder %s23, 0
      %s321 = scalar_select %p320, %s23, 0
      %s322 = sadd.s32 %s321, %s319
      %s323 = scalar_lea.vmem %s6, %s322
      %v324 = vld [vmem:[%s300] sm:$0xff]
      %v325 = vld [vmem:[%s300 + $0x8] sm:$0xff]
      %v326 = vld [vmem:[%s300 + $0x10] sm:$0xff]
      %v327 = vld [vmem:[%s300 + $0x18] sm:$0xff]
      %v328 = vld [vmem:[%s300 + $0x20] sm:$0xff]
      %v329 = vld [vmem:[%s300 + $0x28] sm:$0xff]
      %v330 = vld [vmem:[%s300 + $0x30] sm:$0xff]
      %v331 = vld [vmem:[%s300 + $0x38] sm:$0xff]
      %v332 = vld [vmem:[%s1] sm:$0x1]
      %v334 = vperm.slane %v332, 0
      %v336 = vmul.f32 %v334, %v324
      %v337 = vmul.f32 %v334, %v325
      %v338 = vmul.f32 %v334, %v326
      %v339 = vmul.f32 %v334, %v327
      %v340 = vmul.f32 %v334, %v328
      %v341 = vmul.f32 %v334, %v329
      %v342 = vmul.f32 %v334, %v330
      %v343 = vmul.f32 %v334, %v331
      %v344 = vld [vmem:[%s2] sm:$0x1]
      %v346 = vperm.slane %v344, 0
      %v348 = vadd.f32 %v336, %v346
      %v349 = vadd.f32 %v337, %v346
      %v350 = vadd.f32 %v338, %v346
      %v351 = vadd.f32 %v339, %v346
      %v352 = vadd.f32 %v340, %v346
      %v353 = vadd.f32 %v341, %v346
      %v354 = vadd.f32 %v342, %v346
      %v355 = vadd.f32 %v343, %v346
      %v356 = vmax.f32 %v348, 0.0
      %v357 = vmax.f32 %v349, 0.0
      %v358 = vmax.f32 %v350, 0.0
      %v359 = vmax.f32 %v351, 0.0
      %v360 = vmax.f32 %v352, 0.0
      %v361 = vmax.f32 %v353, 0.0
      %v362 = vmax.f32 %v354, 0.0
      %v363 = vmax.f32 %v355, 0.0
      %v364 = vld [vmem:[%s3] sm:$0xff]
      %v365 = vld [vmem:[%s3 + $0x8] sm:$0xff]
      %v366 = vld [vmem:[%s3 + $0x10] sm:$0xff]
      %v367 = vld [vmem:[%s3 + $0x18] sm:$0xff]
      %v368 = vld [vmem:[%s3 + $0x20] sm:$0xff]
      %v369 = vld [vmem:[%s3 + $0x28] sm:$0xff]
      %v370 = vld [vmem:[%s3 + $0x30] sm:$0xff]
      %v371 = vld [vmem:[%s3 + $0x38] sm:$0xff]
      %v372 = vld [vmem:[%s3 + $0x40] sm:$0xff]
      %v373 = vld [vmem:[%s3 + $0x48] sm:$0xff]
      %v374 = vld [vmem:[%s3 + $0x50] sm:$0xff]
      %v375 = vld [vmem:[%s3 + $0x58] sm:$0xff]
      %v376 = vld [vmem:[%s3 + $0x60] sm:$0xff]
      %v377 = vld [vmem:[%s3 + $0x68] sm:$0xff]
      %v378 = vld [vmem:[%s3 + $0x70] sm:$0xff]
      %v379 = vld [vmem:[%s3 + $0x78] sm:$0xff]
      %380 = vmatpush.msra.mxu0 %v379
      %381 = vmatpush.msra.mxu0 %v378
      %382 = vmatpush.msra.mxu0 %v377
      %383 = vmatpush.msra.mxu0 %v376
      %384 = vmatpush.msra.mxu0 %v375
      %385 = vmatpush.msra.mxu0 %v374
      %386 = vmatpush.msra.mxu0 %v373
      %387 = vmatpush.msra.mxu0 %v372
      %388 = vmatpush.msra.mxu0 %v371
      %389 = vmatpush.msra.mxu0 %v370
      %390 = vmatpush.msra.mxu0 %v369
      %391 = vmatpush.msra.mxu0 %v368
      %392 = vmatpush.msra.mxu0 %v367
      %393 = vmatpush.msra.mxu0 %v366
      %394 = vmatpush.msra.mxu0 %v365
      %395 = vmatpush.msra.mxu0 %v364
      %396 = vmatmul.f32.gmra.mxu0 %v356
      %v397 = vpop.f32.mrf.mxu0
      %v398 = vadd.f32 0.0, %v397
      %399 = vmatmul.f32.gmra.mxu0 %v357
      %v400 = vpop.f32.mrf.mxu0
      %v401 = vadd.f32 0.0, %v400
      %402 = vmatmul.f32.gmra.mxu0 %v358
      %v403 = vpop.f32.mrf.mxu0
      %v404 = vadd.f32 0.0, %v403
      %405 = vmatmul.f32.gmra.mxu0 %v359
      %v406 = vpop.f32.mrf.mxu0
      %v407 = vadd.f32 0.0, %v406
      %408 = vmatmul.f32.gmra.mxu0 %v360
      %v409 = vpop.f32.mrf.mxu0
      %v410 = vadd.f32 0.0, %v409
      %411 = vmatmul.f32.gmra.mxu0 %v361
      %v412 = vpop.f32.mrf.mxu0
      %v413 = vadd.f32 0.0, %v412
      %414 = vmatmul.f32.gmra.mxu0 %v362
      %v415 = vpop.f32.mrf.mxu0
      %v416 = vadd.f32 0.0, %v415
      %417 = vmatmul.f32.gmra.mxu0 %v363
      %v418 = vpop.f32.mrf.mxu0
      %v419 = vadd.f32 0.0, %v418
      %420 = vdwg.mxu0
      %421 = vst [vmem:[%s310] sm:$0xff] %v398
      %422 = vst [vmem:[%s310 + $0x8] sm:$0xff] %v401
      %423 = vst [vmem:[%s310 + $0x10] sm:$0xff] %v404
      %424 = vst [vmem:[%s310 + $0x18] sm:$0xff] %v407
      %425 = vst [vmem:[%s310 + $0x20] sm:$0xff] %v410
      %426 = vst [vmem:[%s310 + $0x28] sm:$0xff] %v413
      %427 = vst [vmem:[%s310 + $0x30] sm:$0xff] %v416
      %428 = vst [vmem:[%s310 + $0x38] sm:$0xff] %v419
      %v429 = vadd.f32 %v398, %v401
      %v430 = vadd.f32 %v429, %v404
      %v431 = vadd.f32 %v430, %v407
      %v432 = vadd.f32 %v431, %v410
      %v433 = vadd.f32 %v432, %v413
      %v434 = vadd.f32 %v433, %v416
      %v435 = vadd.f32 %v434, %v419
      %v436 = vrot.slane %v435, 4
      %v437 = vadd.f32 %v435, %v436
      %v438 = vrot.slane %v437, 2
      %v439 = vadd.f32 %v437, %v438
      %v440 = vrot.slane %v439, 1
      %v441 = vadd.f32 %v439, %v440
      %442 = vst [vmem:[%s317] sm:$0x1] %v441
      %v443 = vmul.f32 %v398, %v398
      %v444 = vmul.f32 %v401, %v401
      %v445 = vmul.f32 %v404, %v404
      %v446 = vmul.f32 %v407, %v407
      %v447 = vmul.f32 %v410, %v410
      %v448 = vmul.f32 %v413, %v413
      %v449 = vmul.f32 %v416, %v416
      %v450 = vmul.f32 %v419, %v419
      %v451 = vadd.f32 %v443, %v444
      %v452 = vadd.f32 %v451, %v445
      %v453 = vadd.f32 %v452, %v446
      %v454 = vadd.f32 %v453, %v447
      %v455 = vadd.f32 %v454, %v448
      %v456 = vadd.f32 %v455, %v449
      %v457 = vadd.f32 %v456, %v450
      %v458 = vrot.slane %v457, 4
      %v459 = vadd.f32 %v457, %v458
      %v460 = vrot.slane %v459, 2
      %v461 = vadd.f32 %v459, %v460
      %v462 = vrot.slane %v461, 1
      %v463 = vadd.f32 %v461, %v462
      %464 = vst [vmem:[%s323] sm:$0x1] %v463
      %s465 = smul.u32 8, %s23
      %p466 = scmp.lt.s32.totalorder %s22, 1
      %s467 = scalar_select %p466, %s22, 1
      %p468 = scmp.lt.s32.totalorder %s465, 7
      %s469 = scalar_select %p468, %s465, 7
      %s470 = smul.addr %s467, 8
      %s471 = sadd.s32 %s469, %s470
      %s472 = smul.addr %s471, 8
      %s473 = scalar_lea.vmem %s4, %s472
      %p474 = scmp.lt.s32.totalorder %s22, 1
      %s475 = scalar_select %p474, %s22, 1
      %p476 = scmp.lt.s32.totalorder %s23, 0
      %s477 = scalar_select %p476, %s23, 0
      %s478 = sadd.s32 %s477, %s475
      %s479 = scalar_lea.vmem %s5, %s478
      %p480 = scmp.lt.s32.totalorder %s22, 1
      %s481 = scalar_select %p480, %s22, 1
      %p482 = scmp.lt.s32.totalorder %s23, 0
      %s483 = scalar_select %p482, %s23, 0
      %s484 = sadd.s32 %s483, %s481
      %s485 = scalar_lea.vmem %s6, %s484
      // Predicated region
      $region37: #{new_bottleneck_forward.9} parent=35 // pred_check
        %p486 = pneg %p141
      $region38: #{new_bottleneck_forward.9} parent=35 // pred_check_branch
        %488 = sbr.rel (%p486) target = $region40
      $region39: #{new_bottleneck_forward.9} parent=35 // pred_region
        %s489 = smul.u32 8, %s23
      $region40: #{new_bottleneck_forward.9} parent=35 // pred_fallthru
        _
      // Predicated region
      $region41: #{new_bottleneck_forward.9} parent=35 // pred_check
        %p490 = pneg %p169
      $region42: #{new_bottleneck_forward.9} parent=35 // pred_check_branch
        %492 = sbr.rel (%p490) target = $region44
      $region43: #{new_bottleneck_forward.9} parent=35 // pred_region
        _
      $region44: #{new_bottleneck_forward.9} parent=35 // pred_fallthru
        _
      // Predicated region
      $region45: #{new_bottleneck_forward.9} parent=35 // pred_check
        %p493 = pneg %p197
      $region46: #{new_bottleneck_forward.9} parent=35 // pred_check_branch
        %495 = sbr.rel (%p493) target = $region48
      $region47: #{new_bottleneck_forward.9} parent=35 // pred_region
        _
      $region48: #{new_bottleneck_forward.9} parent=35 // pred_fallthru
        _
    $region36: #{new_bottleneck_forward.9} parent=5 // pred_fallthru
      _
    %p496 = scmp.le.s32.totalorder 2, %s13
    // Predicated region
    $region49: #{new_bottleneck_forward.9} parent=5 // pred_check
      %p497 = pneg %p496
    $region50: #{new_bottleneck_forward.9} parent=5 // pred_check_branch
      %499 = sbr.rel (%p497) target = $region52
    $region51: #{new_bottleneck_forward.9} parent=5 // pred_region
      %s500 = ssub.s32 %s13, 2
      // Predicated region
      $region53: #{new_bottleneck_forward.9} parent=51 // pred_check
        %p501 = pneg %p147
      $region54: #{new_bottleneck_forward.9} parent=51 // pred_check_branch
        %503 = sbr.rel (%p501) target = $region56
      $region55: #{new_bottleneck_forward.9} parent=51 // pred_region
        %s504 = smul.u32 8, %s25
        %p505 = scmp.lt.s32.totalorder %s24, 1
        %s506 = scalar_select %p505, %s24, 1
        %p507 = scmp.lt.s32.totalorder %s504, 7
        %s508 = scalar_select %p507, %s504, 7
        %s509 = smul.addr %s506, 8
        %s510 = sadd.s32 %s508, %s509
        %s511 = smul.addr %s510, 8
        %s512 = scalar_lea.vmem %s4, %s511
      $region56: #{new_bottleneck_forward.9} parent=51 // pred_fallthru
        _
      // Predicated region
      $region57: #{new_bottleneck_forward.9} parent=51 // pred_check
        %p513 = pneg %p175
      $region58: #{new_bottleneck_forward.9} parent=51 // pred_check_branch
        %515 = sbr.rel (%p513) target = $region60
      $region59: #{new_bottleneck_forward.9} parent=51 // pred_region
        %p516 = scmp.lt.s32.totalorder %s24, 1
        %s517 = scalar_select %p516, %s24, 1
        %p518 = scmp.lt.s32.totalorder %s25, 0
        %s519 = scalar_select %p518, %s25, 0
        %s520 = sadd.s32 %s519, %s517
        %s521 = scalar_lea.vmem %s5, %s520
      $region60: #{new_bottleneck_forward.9} parent=51 // pred_fallthru
        _
      // Predicated region
      $region61: #{new_bottleneck_forward.9} parent=51 // pred_check
        %p522 = pneg %p203
      $region62: #{new_bottleneck_forward.9} parent=51 // pred_check_branch
        %524 = sbr.rel (%p522) target = $region64
      $region63: #{new_bottleneck_forward.9} parent=51 // pred_region
        %p525 = scmp.lt.s32.totalorder %s24, 1
        %s526 = scalar_select %p525, %s24, 1
        %p527 = scmp.lt.s32.totalorder %s25, 0
        %s528 = scalar_select %p527, %s25, 0
        %s529 = sadd.s32 %s528, %s526
        %s530 = scalar_lea.vmem %s6, %s529
      $region64: #{new_bottleneck_forward.9} parent=51 // pred_fallthru
        _
    $region52: #{new_bottleneck_forward.9} parent=5 // pred_fallthru
      _
  $region6: #{new_bottleneck_forward.9} parent=0 // loop_footer
    %s17 = sadd.s32 1, %s13
  $region7: #{new_bottleneck_forward.9} parent=0 // loop_footer_branch
    %12 = sbr.rel target = $region3
  $region8: #{new_bottleneck_forward.9} parent=0 // loop_exit
    _

// kernel: new_bottleneck_forward.10
$region0: #{new_bottleneck_forward.10}
  #allocation0 [shape = 'u32[]', space=smem, size = 0x4, offset = 0x4, fixed_abs, tag = 'smem constant byte address 0x4 - core index']
  #allocation1 [shape = 'u32[72,128]{1,0:T(1,128)}', space=vmem, size = 0x9000, scoped, tag = 'internal scratch']
  %s0 = inlined_call_operand.vmem [shape: f32[2,128], index: 0, kind: input, shape index: {}]
  %s1 = inlined_call_operand.vmem [shape: f32[1,128], index: 1, kind: input, shape index: {}]
  %s2 = inlined_call_operand.vmem [shape: f32[1,128], index: 2, kind: input, shape index: {}]
  %s3 = inlined_call_operand.vmem [shape: f32[128,128], index: 3, kind: input, shape index: {}]
  %s4 = inlined_call_operand.vmem [shape: f32[128,128], index: 4, kind: input, shape index: {}]
  %s5 = inlined_call_operand.vmem [shape: f32[2,128], index: 5, kind: output, shape index: {}]
  %s6 = sld [smem:[#allocation0]]
  $region30: #{new_bottleneck_forward.10} parent=0
    _
  %s8 = ssub.s32 1, %s6
  %s9 = scalar_select 0, %s8, %s6
  // Predicated region
  $region2: #{new_bottleneck_forward.10} parent=0 // pred_check
    _
  $region3: #{new_bottleneck_forward.10} parent=0 // pred_check_branch
    %11 = sbr.rel (0) target = $region5
  $region4: #{new_bottleneck_forward.10} parent=0 // pred_region
    _
  $region5: #{new_bottleneck_forward.10} parent=0 // pred_fallthru
    _
  // Predicated region
  $region6: #{new_bottleneck_forward.10} parent=0 // pred_check
    _
  $region7: #{new_bottleneck_forward.10} parent=0 // pred_check_branch
    %13 = sbr.rel (0) target = $region9
  $region8: #{new_bottleneck_forward.10} parent=0 // pred_region
    _
  $region9: #{new_bottleneck_forward.10} parent=0 // pred_fallthru
    _
  // Predicated region
  $region10: #{new_bottleneck_forward.10} parent=0 // pred_check
    _
  $region11: #{new_bottleneck_forward.10} parent=0 // pred_check_branch
    %15 = sbr.rel (0) target = $region13
  $region12: #{new_bottleneck_forward.10} parent=0 // pred_region
    _
  $region13: #{new_bottleneck_forward.10} parent=0 // pred_fallthru
    _
  // Predicated region
  $region14: #{new_bottleneck_forward.10} parent=0 // pred_check
    _
  $region15: #{new_bottleneck_forward.10} parent=0 // pred_check_branch
    %17 = sbr.rel (0) target = $region17
  $region16: #{new_bottleneck_forward.10} parent=0 // pred_region
    _
  $region17: #{new_bottleneck_forward.10} parent=0 // pred_fallthru
    _
  // Predicated region
  $region18: #{new_bottleneck_forward.10} parent=0 // pred_check
    _
  $region19: #{new_bottleneck_forward.10} parent=0 // pred_check_branch
    %19 = sbr.rel (0) target = $region21
  $region20: #{new_bottleneck_forward.10} parent=0 // pred_region
    _
  $region21: #{new_bottleneck_forward.10} parent=0 // pred_fallthru
    _
  %v20 = vld [vmem:[%s1] sm:$0x1]
  %v21 = vld [vmem:[%s0] sm:$0x3]
  %v23 = vperm.slane %v20, 0
  %v25 = vmul.f32 %v23, %v21
  %v26 = vld [vmem:[%s2] sm:$0x1]
  %v28 = vperm.slane %v26, 0
  %v30 = vadd.f32 %v25, %v28
  %v31 = vld [vmem:[%s3] sm:$0xff]
  %v32 = vld [vmem:[%s3 + $0x8] sm:$0xff]
  %v33 = vld [vmem:[%s3 + $0x10] sm:$0xff]
  %v34 = vld [vmem:[%s3 + $0x18] sm:$0xff]
  %v35 = vld [vmem:[%s3 + $0x20] sm:$0xff]
  %v36 = vld [vmem:[%s3 + $0x28] sm:$0xff]
  %v37 = vld [vmem:[%s3 + $0x30] sm:$0xff]
  %v38 = vld [vmem:[%s3 + $0x38] sm:$0xff]
  %v39 = vld [vmem:[%s3 + $0x40] sm:$0xff]
  %v40 = vld [vmem:[%s3 + $0x48] sm:$0xff]
  %v41 = vld [vmem:[%s3 + $0x50] sm:$0xff]
  %v42 = vld [vmem:[%s3 + $0x58] sm:$0xff]
  %v43 = vld [vmem:[%s3 + $0x60] sm:$0xff]
  %v44 = vld [vmem:[%s3 + $0x68] sm:$0xff]
  %v45 = vld [vmem:[%s3 + $0x70] sm:$0xff]
  %v46 = vld [vmem:[%s3 + $0x78] sm:$0xff]
  %47 = vmatpush.msra.mxu0 %v46
  %48 = vmatpush.msra.mxu0 %v45
  %49 = vmatpush.msra.mxu0 %v44
  %50 = vmatpush.msra.mxu0 %v43
  %51 = vmatpush.msra.mxu0 %v42
  %52 = vmatpush.msra.mxu0 %v41
  %53 = vmatpush.msra.mxu0 %v40
  %54 = vmatpush.msra.mxu0 %v39
  %55 = vmatpush.msra.mxu0 %v38
  %56 = vmatpush.msra.mxu0 %v37
  %57 = vmatpush.msra.mxu0 %v36
  %58 = vmatpush.msra.mxu0 %v35
  %59 = vmatpush.msra.mxu0 %v34
  %60 = vmatpush.msra.mxu0 %v33
  %61 = vmatpush.msra.mxu0 %v32
  %62 = vmatpush.msra.mxu0 %v31
  %63 = vmatmul.f32.gmra.mxu0 %v30
  %v64 = vpop.f32.mrf.mxu0
  %v65 = vadd.f32 0.0, %v64
  %66 = vdwg.mxu0
  %v67 = vmax.f32 %v65, 0.0
  %v68 = vld [vmem:[%s4] sm:$0xff]
  %v69 = vld [vmem:[%s4 + $0x8] sm:$0xff]
  %v70 = vld [vmem:[%s4 + $0x10] sm:$0xff]
  %v71 = vld [vmem:[%s4 + $0x18] sm:$0xff]
  %v72 = vld [vmem:[%s4 + $0x20] sm:$0xff]
  %v73 = vld [vmem:[%s4 + $0x28] sm:$0xff]
  %v74 = vld [vmem:[%s4 + $0x30] sm:$0xff]
  %v75 = vld [vmem:[%s4 + $0x38] sm:$0xff]
  %v76 = vld [vmem:[%s4 + $0x40] sm:$0xff]
  %v77 = vld [vmem:[%s4 + $0x48] sm:$0xff]
  %v78 = vld [vmem:[%s4 + $0x50] sm:$0xff]
  %v79 = vld [vmem:[%s4 + $0x58] sm:$0xff]
  %v80 = vld [vmem:[%s4 + $0x60] sm:$0xff]
  %v81 = vld [vmem:[%s4 + $0x68] sm:$0xff]
  %v82 = vld [vmem:[%s4 + $0x70] sm:$0xff]
  %v83 = vld [vmem:[%s4 + $0x78] sm:$0xff]
  %84 = vmatpush.msra.mxu0 %v83
  %85 = vmatpush.msra.mxu0 %v82
  %86 = vmatpush.msra.mxu0 %v81
  %87 = vmatpush.msra.mxu0 %v80
  %88 = vmatpush.msra.mxu0 %v79
  %89 = vmatpush.msra.mxu0 %v78
  %90 = vmatpush.msra.mxu0 %v77
  %91 = vmatpush.msra.mxu0 %v76
  %92 = vmatpush.msra.mxu0 %v75
  %93 = vmatpush.msra.mxu0 %v74
  %94 = vmatpush.msra.mxu0 %v73
  %95 = vmatpush.msra.mxu0 %v72
  %96 = vmatpush.msra.mxu0 %v71
  %97 = vmatpush.msra.mxu0 %v70
  %98 = vmatpush.msra.mxu0 %v69
  %99 = vmatpush.msra.mxu0 %v68
  %100 = vmatmul.f32.gmra.mxu0 %v67
  %v101 = vpop.f32.mrf.mxu0
  %v102 = vadd.f32 0.0, %v101
  %103 = vdwg.mxu0
  %v104 = vsub.f32 0.0, %v102
  %v105 = vmul.f32 %v104, 1.442695
  %v106 = vpow.pop %v105
  %v107 = vadd.f32 %v106, 1.0
  %v108 = vrcp.pop %v107
  %v109 = vmul.f32 %v107, %v108
  %v110 = vsub.f32 1.0, %v109
  %v111 = vmul.f32 %v108, %v110
  %v112 = vadd.f32 %v108, %v111
  %vm113 = vweird.f32 %v107
  %vm114 = vweird.f32 %v108
  %vm115 = vmor %vm113, %vm114
  %v116 = vsel %vm115, %v108, %v112
  %v117 = vand.u32 2147483647, %v107
  %vm118 = vcmp.eq.f32.partialorder %v117, 8.507059e+37
  %v119 = vand.u32 %v107, 2147483648
  %v120 = vor.u32 1.1754944e-38, %v119
  %v121 = vsel %vm118, %v120, %v116
  %v122 = vmul.f32 1.0, %v121
  %123 = vst [vmem:[%s5] sm:$0x3] %v122
  // Predicated region
  $region22: #{new_bottleneck_forward.10} parent=0 // pred_check
    _
  $region23: #{new_bottleneck_forward.10} parent=0 // pred_check_branch
    %125 = sbr.rel (0) target = $region25
  $region24: #{new_bottleneck_forward.10} parent=0 // pred_region
    _
  $region25: #{new_bottleneck_forward.10} parent=0 // pred_fallthru
    _
  // Predicated region
  $region26: #{new_bottleneck_forward.10} parent=0 // pred_check
    _
  $region27: #{new_bottleneck_forward.10} parent=0 // pred_check_branch
    %127 = sbr.rel (0) target = $region29
  $region28: #{new_bottleneck_forward.10} parent=0 // pred_region
    _
  $region29: #{new_bottleneck_forward.10} parent=0 // pred_fallthru
    _

// kernel: new_bottleneck_forward.11
$region0: #{new_bottleneck_forward.11}
  #allocation0 [shape = 'u32[]', space=smem, size = 0x4, offset = 0x4, fixed_abs, tag = 'smem constant byte address 0x4 - core index']
  #allocation1 [shape = 'u32[72,128]{1,0:T(1,128)}', space=vmem, size = 0x9000, scoped, tag = 'internal scratch']
  %s0 = inlined_call_operand.vmem [shape: f32[2,64,128], index: 0, kind: input, shape index: {}]
  %s1 = inlined_call_operand.vmem [shape: f32[2,64,128], index: 1, kind: input, shape index: {}, may-alias: {1,5}]
  %s2 = inlined_call_operand.vmem [shape: f32[2,1,128], index: 2, kind: input, shape index: {}]
  %s3 = inlined_call_operand.vmem [shape: f32[1,128], index: 3, kind: input, shape index: {}]
  %s4 = inlined_call_operand.vmem [shape: f32[1,128], index: 4, kind: input, shape index: {}]
  %s5 = inlined_call_operand.vmem [shape: f32[2,64,128], index: 5, kind: output, shape index: {}, may-alias: {1,5}]
  %s6 = sld [smem:[#allocation0]]
  $region53: #{new_bottleneck_forward.11} parent=0
    _
  %s8 = ssub.s32 1, %s6
  %s9 = scalar_select 0, %s8, %s6
  loop: start=0, step=1, limit=4
  $region2: #{new_bottleneck_forward.11} parent=0 // loop_pre_header
    _
  $region3: #{new_bottleneck_forward.11} parent=0 // loop_header
    %s11 = sphi 0, %s15
    %p12 = scmp.ge.s32.totalorder %s11, 4
    %s18 = sphi 0, %s30
    %s19 = sphi 0, %s26
    %s20 = sphi 0, %s18
    %s21 = sphi 0, %s19
    %s22 = sphi 0, %s20
    %s23 = sphi 0, %s21
    %s35 = sphi 0, %s37
    %s38 = sphi 0, %s35
    %s39 = sphi 0, %s38
    %s55 = sphi 0, %s39
    %s63 = sphi 0, %s65
    %s66 = sphi 0, %s63
    %s67 = sphi 0, %s66
    %s83 = sphi 0, %s67
    %s89 = sphi 0, %s91
    %s92 = sphi 0, %s89
    %s93 = sphi 0, %s92
    %s109 = sphi 0, %s93
    %s113 = sphi 0, %s113
    %s115 = sphi 0, %s113
    %s116 = sphi 0, %s115
    %s130 = sphi 0, %s116
    %s134 = sphi 0, %s134
    %s136 = sphi 0, %s134
    %s137 = sphi 0, %s136
    %s151 = sphi 0, %s137
    %s159 = sphi 0, %s161
    %s162 = sphi 0, %s159
    %s163 = sphi 0, %s162
    %s179 = sphi 0, %s163
  $region4: #{new_bottleneck_forward.11} parent=0 // loop_header_branch
    %14 = sbr.rel (%p12) target = $region8
  $region5: #{new_bottleneck_forward.11} parent=0 // loop_body
    %s16 = ssub.s32 %s11, 1
    %s17 = ssub.s32 %s11, 2
    %s24 = sadd.s32 1, %s19
    %p25 = scmp.ge.s32.totalorder %s24, 1
    %s26 = scalar_select %p25, 0, %s24
    %s27 = sadd.s32 1, %s18
    %s28 = scalar_select %p25, %s27, %s18
    %p29 = scmp.ge.s32.totalorder %s28, 2
    %s30 = scalar_select %p29, 0, %s28
    %s31 = ssub.s32 %s18, %s30
    %s32 = ssub.s32 %s19, %s26
    %s33 = sor.u32 %s31, %s32
    %p34 = scmp.eq.s32.totalorder %s33, 0
    %s36 = sadd.s32 %s35, 1
    %s37 = scalar_select %p34, %s35, %s36
    %p40 = pneg %p34
    %p41 = scmp.eq.s32.totalorder %s11, 1
    %p42 = por %p40, %p41
    %p43 = scmp.ne.s32.totalorder %s35, %s38
    %p44 = scmp.eq.s32.totalorder %s11, 0
    %p45 = por %p43, %p44
    %p46 = scmp.ne.s32.totalorder %s35, %s38
    %p47 = scmp.eq.s32.totalorder %s16, 1
    %p48 = por %p46, %p47
    %p49 = scmp.ne.s32.totalorder %s38, %s39
    %p50 = scmp.eq.s32.totalorder %s16, 0
    %p51 = por %p49, %p50
    %p52 = scmp.ne.s32.totalorder %s38, %s39
    %p53 = scmp.eq.s32.totalorder %s17, 1
    %p54 = por %p52, %p53
    %p56 = scmp.ne.s32.totalorder %s39, %s55
    %p57 = scmp.eq.s32.totalorder %s17, 0
    %p58 = por %p56, %p57
    %s59 = ssub.s32 %s18, %s30
    %s60 = ssub.s32 %s19, %s26
    %s61 = sor.u32 %s59, %s60
    %p62 = scmp.eq.s32.totalorder %s61, 0
    %s64 = sadd.s32 %s63, 1
    %s65 = scalar_select %p62, %s63, %s64
    %p68 = pneg %p62
    %p69 = scmp.eq.s32.totalorder %s11, 1
    %p70 = por %p68, %p69
    %p71 = scmp.ne.s32.totalorder %s63, %s66
    %p72 = scmp.eq.s32.totalorder %s11, 0
    %p73 = por %p71, %p72
    %p74 = scmp.ne.s32.totalorder %s63, %s66
    %p75 = scmp.eq.s32.totalorder %s16, 1
    %p76 = por %p74, %p75
    %p77 = scmp.ne.s32.totalorder %s66, %s67
    %p78 = scmp.eq.s32.totalorder %s16, 0
    %p79 = por %p77, %p78
    %p80 = scmp.ne.s32.totalorder %s66, %s67
    %p81 = scmp.eq.s32.totalorder %s17, 1
    %p82 = por %p80, %p81
    %p84 = scmp.ne.s32.totalorder %s67, %s83
    %p85 = scmp.eq.s32.totalorder %s17, 0
    %p86 = por %p84, %p85
    %s87 = ssub.s32 %s18, %s30
    %p88 = scmp.eq.s32.totalorder %s87, 0
    %s90 = sadd.s32 %s89, 1
    %s91 = scalar_select %p88, %s89, %s90
    %p94 = pneg %p88
    %p95 = scmp.eq.s32.totalorder %s11, 1
    %p96 = por %p94, %p95
    %p97 = scmp.ne.s32.totalorder %s89, %s92
    %p98 = scmp.eq.s32.totalorder %s11, 0
    %p99 = por %p97, %p98
    %p100 = scmp.ne.s32.totalorder %s89, %s92
    %p101 = scmp.eq.s32.totalorder %s16, 1
    %p102 = por %p100, %p101
    %p103 = scmp.ne.s32.totalorder %s92, %s93
    %p104 = scmp.eq.s32.totalorder %s16, 0
    %p105 = por %p103, %p104
    %p106 = scmp.ne.s32.totalorder %s92, %s93
    %p107 = scmp.eq.s32.totalorder %s17, 1
    %p108 = por %p106, %p107
    %p110 = scmp.ne.s32.totalorder %s93, %s109
    %p111 = scmp.eq.s32.totalorder %s17, 0
    %p112 = por %p110, %p111
    %s114 = sadd.s32 %s113, 1
    %p117 = scmp.eq.s32.totalorder %s11, 1
    %p118 = scmp.ne.s32.totalorder %s113, %s115
    %p119 = scmp.eq.s32.totalorder %s11, 0
    %p120 = por %p118, %p119
    %p121 = scmp.ne.s32.totalorder %s113, %s115
    %p122 = scmp.eq.s32.totalorder %s16, 1
    %p123 = por %p121, %p122
    %p124 = scmp.ne.s32.totalorder %s115, %s116
    %p125 = scmp.eq.s32.totalorder %s16, 0
    %p126 = por %p124, %p125
    %p127 = scmp.ne.s32.totalorder %s115, %s116
    %p128 = scmp.eq.s32.totalorder %s17, 1
    %p129 = por %p127, %p128
    %p131 = scmp.ne.s32.totalorder %s116, %s130
    %p132 = scmp.eq.s32.totalorder %s17, 0
    %p133 = por %p131, %p132
    %s135 = sadd.s32 %s134, 1
    %p138 = scmp.eq.s32.totalorder %s11, 1
    %p139 = scmp.ne.s32.totalorder %s134, %s136
    %p140 = scmp.eq.s32.totalorder %s11, 0
    %p141 = por %p139, %p140
    %p142 = scmp.ne.s32.totalorder %s134, %s136
    %p143 = scmp.eq.s32.totalorder %s16, 1
    %p144 = por %p142, %p143
    %p145 = scmp.ne.s32.totalorder %s136, %s137
    %p146 = scmp.eq.s32.totalorder %s16, 0
    %p147 = por %p145, %p146
    %p148 = scmp.ne.s32.totalorder %s136, %s137
    %p149 = scmp.eq.s32.totalorder %s17, 1
    %p150 = por %p148, %p149
    %p152 = scmp.ne.s32.totalorder %s137, %s151
    %p153 = scmp.eq.s32.totalorder %s17, 0
    %p154 = por %p152, %p153
    %s155 = ssub.s32 %s18, %s30
    %s156 = ssub.s32 %s19, %s26
    %s157 = sor.u32 %s155, %s156
    %p158 = scmp.eq.s32.totalorder %s157, 0
    %s160 = sadd.s32 %s159, 1
    %s161 = scalar_select %p158, %s159, %s160
    %p164 = pneg %p158
    %p165 = scmp.eq.s32.totalorder %s11, 1
    %p166 = por %p164, %p165
    %p167 = scmp.ne.s32.totalorder %s159, %s162
    %p168 = scmp.eq.s32.totalorder %s11, 0
    %p169 = por %p167, %p168
    %p170 = scmp.ne.s32.totalorder %s159, %s162
    %p171 = scmp.eq.s32.totalorder %s16, 1
    %p172 = por %p170, %p171
    %p173 = scmp.ne.s32.totalorder %s162, %s163
    %p174 = scmp.eq.s32.totalorder %s16, 0
    %p175 = por %p173, %p174
    %p176 = scmp.ne.s32.totalorder %s162, %s163
    %p177 = scmp.eq.s32.totalorder %s17, 1
    %p178 = por %p176, %p177
    %p180 = scmp.ne.s32.totalorder %s163, %s179
    %p181 = scmp.eq.s32.totalorder %s17, 0
    %p182 = por %p180, %p181
    %p183 = scmp.le.s32.totalorder 1, %s11
    %p184 = scmp.lt.s32.totalorder %s11, 3
    %p185 = pnand %p183, %p184
    %p186 = pneg %p185
    // Predicated region
    $region9: #{new_bottleneck_forward.11} parent=5 // pred_check
      _
    $region10: #{new_bottleneck_forward.11} parent=5 // pred_check_branch
      %188 = sbr.rel (%p185) target = $region12
    $region11: #{new_bottleneck_forward.11} parent=5 // pred_region
      %s189 = ssub.s32 %s11, 1
      // Predicated region
      $region13: #{new_bottleneck_forward.11} parent=11 // pred_check
        %p190 = pneg %p126
      $region14: #{new_bottleneck_forward.11} parent=11 // pred_check_branch
        %192 = sbr.rel (%p190) target = $region16
      $region15: #{new_bottleneck_forward.11} parent=11 // pred_region
        _
      $region16: #{new_bottleneck_forward.11} parent=11 // pred_fallthru
        _
      // Predicated region
      $region17: #{new_bottleneck_forward.11} parent=11 // pred_check
        %p193 = pneg %p147
      $region18: #{new_bottleneck_forward.11} parent=11 // pred_check_branch
        %195 = sbr.rel (%p193) target = $region20
      $region19: #{new_bottleneck_forward.11} parent=11 // pred_region
        _
      $region20: #{new_bottleneck_forward.11} parent=11 // pred_fallthru
        _
    $region12: #{new_bottleneck_forward.11} parent=5 // pred_fallthru
      _
    %p196 = scmp.lt.s32.totalorder %s11, 2
    // Predicated region
    $region21: #{new_bottleneck_forward.11} parent=5 // pred_check
      %p197 = pneg %p196
    $region22: #{new_bottleneck_forward.11} parent=5 // pred_check_branch
      %199 = sbr.rel (%p197) target = $region24
    $region23: #{new_bottleneck_forward.11} parent=5 // pred_region
      // Predicated region
      $region25: #{new_bottleneck_forward.11} parent=23 // pred_check
        %p200 = pneg %p45
      $region26: #{new_bottleneck_forward.11} parent=23 // pred_check_branch
        %202 = sbr.rel (%p200) target = $region28
      $region27: #{new_bottleneck_forward.11} parent=23 // pred_region
        %s203 = smul.u32 8, %s19
        %p204 = scmp.lt.s32.totalorder %s18, 1
        %s205 = scalar_select %p204, %s18, 1
        %p206 = scmp.lt.s32.totalorder %s203, 7
        %s207 = scalar_select %p206, %s203, 7
        %s208 = smul.addr %s205, 8
        %s209 = sadd.s32 %s207, %s208
        %s210 = smul.addr %s209, 8
        %s211 = scalar_lea.vmem %s0, %s210
        %s212 = smul.u32 8, %s19
      $region28: #{new_bottleneck_forward.11} parent=23 // pred_fallthru
        _
      // Predicated region
      $region29: #{new_bottleneck_forward.11} parent=23 // pred_check
        %p213 = pneg %p73
      $region30: #{new_bottleneck_forward.11} parent=23 // pred_check_branch
        %215 = sbr.rel (%p213) target = $region32
      $region31: #{new_bottleneck_forward.11} parent=23 // pred_region
        %s216 = smul.u32 8, %s19
        %p217 = scmp.lt.s32.totalorder %s18, 1
        %s218 = scalar_select %p217, %s18, 1
        %p219 = scmp.lt.s32.totalorder %s216, 7
        %s220 = scalar_select %p219, %s216, 7
        %s221 = smul.addr %s218, 8
        %s222 = sadd.s32 %s220, %s221
        %s223 = smul.addr %s222, 8
        %s224 = scalar_lea.vmem %s1, %s223
        %s225 = smul.u32 8, %s19
      $region32: #{new_bottleneck_forward.11} parent=23 // pred_fallthru
        _
      // Predicated region
      $region33: #{new_bottleneck_forward.11} parent=23 // pred_check
        %p226 = pneg %p99
      $region34: #{new_bottleneck_forward.11} parent=23 // pred_check_branch
        %228 = sbr.rel (%p226) target = $region36
      $region35: #{new_bottleneck_forward.11} parent=23 // pred_region
        %p229 = scmp.lt.s32.totalorder %s18, 1
        %s230 = scalar_select %p229, %s18, 1
        %s231 = scalar_lea.vmem %s2, %s230
      $region36: #{new_bottleneck_forward.11} parent=23 // pred_fallthru
        _
    $region24: #{new_bottleneck_forward.11} parent=5 // pred_fallthru
      _
    %p232 = scmp.le.s32.totalorder 1, %s11
    %p233 = scmp.lt.s32.totalorder %s11, 3
    %p234 = pnand %p232, %p233
    %p235 = pneg %p234
    // Predicated region
    $region37: #{new_bottleneck_forward.11} parent=5 // pred_check
      _
    $region38: #{new_bottleneck_forward.11} parent=5 // pred_check_branch
      %237 = sbr.rel (%p234) target = $region40
    $region39: #{new_bottleneck_forward.11} parent=5 // pred_region
      %s238 = ssub.s32 %s11, 1
      %s239 = smul.u32 8, %s21
      %p240 = scmp.lt.s32.totalorder %s20, 1
      %s241 = scalar_select %p240, %s20, 1
      %p242 = scmp.lt.s32.totalorder %s239, 7
      %s243 = scalar_select %p242, %s239, 7
      %s244 = smul.addr %s241, 8
      %s245 = sadd.s32 %s243, %s244
      %s246 = smul.addr %s245, 8
      %s247 = scalar_lea.vmem %s0, %s246
      %p248 = pneg %p51
      %p249 = pneg %p48
      %s250 = smul.u32 8, %s21
      %p251 = scmp.lt.s32.totalorder %s20, 1
      %s252 = scalar_select %p251, %s20, 1
      %p253 = scmp.lt.s32.totalorder %s250, 7
      %s254 = scalar_select %p253, %s250, 7
      %s255 = smul.addr %s252, 8
      %s256 = sadd.s32 %s254, %s255
      %s257 = smul.addr %s256, 8
      %s258 = scalar_lea.vmem %s1, %s257
      %p259 = pneg %p79
      %p260 = pneg %p76
      %p261 = scmp.lt.s32.totalorder %s20, 1
      %s262 = scalar_select %p261, %s20, 1
      %s263 = scalar_lea.vmem %s2, %s262
      %p264 = pneg %p105
      %p265 = pneg %p102
      %p266 = pneg %p126
      %p267 = pneg %p123
      %p268 = pneg %p147
      %p269 = pneg %p144
      %p270 = pneg %p175
      %p271 = pneg %p172
      %s272 = smul.u32 8, %s21
      %p273 = scmp.lt.s32.totalorder %s20, 1
      %s274 = scalar_select %p273, %s20, 1
      %p275 = scmp.lt.s32.totalorder %s272, 7
      %s276 = scalar_select %p275, %s272, 7
      %s277 = smul.addr %s274, 8
      %s278 = sadd.s32 %s276, %s277
      %s279 = smul.addr %s278, 8
      %s280 = scalar_lea.vmem %s5, %s279
      %s281 = smul.u32 8, %s21
      %p282 = scmp.lt.s32.totalorder %s20, 1
      %s283 = scalar_select %p282, %s20, 1
      %p284 = scmp.lt.s32.totalorder %s281, 7
      %s285 = scalar_select %p284, %s281, 7
      %s286 = smul.addr %s283, 8
      %s287 = sadd.s32 %s285, %s286
      %s288 = smul.addr %s287, 8
      %s289 = scalar_lea.vmem %s0, %s288
      %s290 = smul.u32 8, %s21
      %s291 = smul.u32 8, %s21
      %p292 = scmp.lt.s32.totalorder %s20, 1
      %s293 = scalar_select %p292, %s20, 1
      %p294 = scmp.lt.s32.totalorder %s291, 7
      %s295 = scalar_select %p294, %s291, 7
      %s296 = smul.addr %s293, 8
      %s297 = sadd.s32 %s295, %s296
      %s298 = smul.addr %s297, 8
      %s299 = scalar_lea.vmem %s1, %s298
      %s300 = smul.u32 8, %s21
      %p301 = scmp.lt.s32.totalorder %s20, 1
      %s302 = scalar_select %p301, %s20, 1
      %s303 = scalar_lea.vmem %s2, %s302
      %s304 = smul.u32 8, %s21
      %p305 = scmp.lt.s32.totalorder %s20, 1
      %s306 = scalar_select %p305, %s20, 1
      %p307 = scmp.lt.s32.totalorder %s304, 7
      %s308 = scalar_select %p307, %s304, 7
      %s309 = smul.addr %s306, 8
      %s310 = sadd.s32 %s308, %s309
      %s311 = smul.addr %s310, 8
      %s312 = scalar_lea.vmem %s5, %s311
      %s313 = smul.u32 8, %s21
      %v314 = vld [vmem:[%s289] sm:$0xff]
      %v315 = vld [vmem:[%s289 + $0x8] sm:$0xff]
      %v316 = vld [vmem:[%s289 + $0x10] sm:$0xff]
      %v317 = vld [vmem:[%s289 + $0x18] sm:$0xff]
      %v318 = vld [vmem:[%s289 + $0x20] sm:$0xff]
      %v319 = vld [vmem:[%s289 + $0x28] sm:$0xff]
      %v320 = vld [vmem:[%s289 + $0x30] sm:$0xff]
      %v321 = vld [vmem:[%s289 + $0x38] sm:$0xff]
      %v322 = vld [vmem:[%s3] sm:$0x1]
      %v324 = vperm.slane %v322, 0
      %v326 = vmul.f32 %v324, %v314
      %v327 = vmul.f32 %v324, %v315
      %v328 = vmul.f32 %v324, %v316
      %v329 = vmul.f32 %v324, %v317
      %v330 = vmul.f32 %v324, %v318
      %v331 = vmul.f32 %v324, %v319
      %v332 = vmul.f32 %v324, %v320
      %v333 = vmul.f32 %v324, %v321
      %v334 = vld [vmem:[%s4] sm:$0x1]
      %v336 = vperm.slane %v334, 0
      %v338 = vadd.f32 %v326, %v336
      %v339 = vadd.f32 %v327, %v336
      %v340 = vadd.f32 %v328, %v336
      %v341 = vadd.f32 %v329, %v336
      %v342 = vadd.f32 %v330, %v336
      %v343 = vadd.f32 %v331, %v336
      %v344 = vadd.f32 %v332, %v336
      %v345 = vadd.f32 %v333, %v336
      %v346 = vld [vmem:[%s303] sm:$0x1]
      %v348 = vperm.slane %v346, 0
      %v350 = vmul.f32 %v338, %v348
      %v351 = vmul.f32 %v339, %v348
      %v352 = vmul.f32 %v340, %v348
      %v353 = vmul.f32 %v341, %v348
      %v354 = vmul.f32 %v342, %v348
      %v355 = vmul.f32 %v343, %v348
      %v356 = vmul.f32 %v344, %v348
      %v357 = vmul.f32 %v345, %v348
      %v358 = vld [vmem:[%s299] sm:$0xff]
      %v359 = vld [vmem:[%s299 + $0x8] sm:$0xff]
      %v360 = vld [vmem:[%s299 + $0x10] sm:$0xff]
      %v361 = vld [vmem:[%s299 + $0x18] sm:$0xff]
      %v362 = vld [vmem:[%s299 + $0x20] sm:$0xff]
      %v363 = vld [vmem:[%s299 + $0x28] sm:$0xff]
      %v364 = vld [vmem:[%s299 + $0x30] sm:$0xff]
      %v365 = vld [vmem:[%s299 + $0x38] sm:$0xff]
      %v366 = vadd.f32 %v350, %v358
      %v367 = vadd.f32 %v351, %v359
      %v368 = vadd.f32 %v352, %v360
      %v369 = vadd.f32 %v353, %v361
      %v370 = vadd.f32 %v354, %v362
      %v371 = vadd.f32 %v355, %v363
      %v372 = vadd.f32 %v356, %v364
      %v373 = vadd.f32 %v357, %v365
      %v374 = vmax.f32 %v366, 0.0
      %v375 = vmax.f32 %v367, 0.0
      %v376 = vmax.f32 %v368, 0.0
      %v377 = vmax.f32 %v369, 0.0
      %v378 = vmax.f32 %v370, 0.0
      %v379 = vmax.f32 %v371, 0.0
      %v380 = vmax.f32 %v372, 0.0
      %v381 = vmax.f32 %v373, 0.0
      %382 = vst [vmem:[%s312] sm:$0xff] %v374
      %383 = vst [vmem:[%s312 + $0x8] sm:$0xff] %v375
      %384 = vst [vmem:[%s312 + $0x10] sm:$0xff] %v376
      %385 = vst [vmem:[%s312 + $0x18] sm:$0xff] %v377
      %386 = vst [vmem:[%s312 + $0x20] sm:$0xff] %v378
      %387 = vst [vmem:[%s312 + $0x28] sm:$0xff] %v379
      %388 = vst [vmem:[%s312 + $0x30] sm:$0xff] %v380
      %389 = vst [vmem:[%s312 + $0x38] sm:$0xff] %v381
      %s390 = smul.u32 8, %s21
      %p391 = scmp.lt.s32.totalorder %s20, 1
      %s392 = scalar_select %p391, %s20, 1
      %p393 = scmp.lt.s32.totalorder %s390, 7
      %s394 = scalar_select %p393, %s390, 7
      %s395 = smul.addr %s392, 8
      %s396 = sadd.s32 %s394, %s395
      %s397 = smul.addr %s396, 8
      %s398 = scalar_lea.vmem %s5, %s397
      // Predicated region
      $region41: #{new_bottleneck_forward.11} parent=39 // pred_check
        %p399 = pneg %p172
      $region42: #{new_bottleneck_forward.11} parent=39 // pred_check_branch
        %401 = sbr.rel (%p399) target = $region44
      $region43: #{new_bottleneck_forward.11} parent=39 // pred_region
        %s402 = smul.u32 8, %s21
      $region44: #{new_bottleneck_forward.11} parent=39 // pred_fallthru
        _
    $region40: #{new_bottleneck_forward.11} parent=5 // pred_fallthru
      _
    %p403 = scmp.le.s32.totalorder 2, %s11
    // Predicated region
    $region45: #{new_bottleneck_forward.11} parent=5 // pred_check
      %p404 = pneg %p403
    $region46: #{new_bottleneck_forward.11} parent=5 // pred_check_branch
      %406 = sbr.rel (%p404) target = $region48
    $region47: #{new_bottleneck_forward.11} parent=5 // pred_region
      %s407 = ssub.s32 %s11, 2
      // Predicated region
      $region49: #{new_bottleneck_forward.11} parent=47 // pred_check
        %p408 = pneg %p178
      $region50: #{new_bottleneck_forward.11} parent=47 // pred_check_branch
        %410 = sbr.rel (%p408) target = $region52
      $region51: #{new_bottleneck_forward.11} parent=47 // pred_region
        %s411 = smul.u32 8, %s23
        %p412 = scmp.lt.s32.totalorder %s22, 1
        %s413 = scalar_select %p412, %s22, 1
        %p414 = scmp.lt.s32.totalorder %s411, 7
        %s415 = scalar_select %p414, %s411, 7
        %s416 = smul.addr %s413, 8
        %s417 = sadd.s32 %s415, %s416
        %s418 = smul.addr %s417, 8
        %s419 = scalar_lea.vmem %s5, %s418
      $region52: #{new_bottleneck_forward.11} parent=47 // pred_fallthru
        _
    $region48: #{new_bottleneck_forward.11} parent=5 // pred_fallthru
      _
  $region6: #{new_bottleneck_forward.11} parent=0 // loop_footer
    %s15 = sadd.s32 1, %s11
  $region7: #{new_bottleneck_forward.11} parent=0 // loop_footer_branch
    %10 = sbr.rel target = $region3
  $region8: #{new_bottleneck_forward.11} parent=0 // loop_exit
    _

// kernel: new_bottleneck_forward.7
$region0: #{new_bottleneck_forward.7}
  #allocation0 [shape = 'u32[]', space=smem, size = 0x4, offset = 0x4, fixed_abs, tag = 'smem constant byte address 0x4 - core index']
  #allocation1 [shape = 'u32[72,128]{1,0:T(1,128)}', space=vmem, size = 0x9000, scoped, tag = 'internal scratch']
  %s0 = inlined_call_operand.vmem [shape: f32[2,64,128], index: 0, kind: input, shape index: {}]
  %s1 = inlined_call_operand.vmem [shape: f32[1,128], index: 1, kind: input, shape index: {}]
  %s2 = inlined_call_operand.vmem [shape: f32[1,128], index: 2, kind: input, shape index: {}]
  %s3 = inlined_call_operand.vmem [shape: f32[9,128,128], index: 3, kind: input, shape index: {}]
  %s4 = inlined_call_operand.vmem [shape: f32[9,64,1], index: 4, kind: input, shape index: {}]
  %s5 = inlined_call_operand.vmem [shape: f32[2,64,128], index: 5, kind: output, shape index: {0}]
  %s6 = inlined_call_operand.vmem [shape: f32[2,1,128], index: 6, kind: output, shape index: {1}]
  %s7 = inlined_call_operand.vmem [shape: f32[2,1,128], index: 7, kind: output, shape index: {2}]
  %8 = xla_tuple %s5, %s6, %s7
  %s9 = sld [smem:[#allocation0]]
  $region69: #{new_bottleneck_forward.7} parent=0
    _
  %s11 = ssub.s32 1, %s9
  %s12 = scalar_select 0, %s11, %s9
  loop: start=0, step=1, limit=4
  $region2: #{new_bottleneck_forward.7} parent=0 // loop_pre_header
    _
  $region3: #{new_bottleneck_forward.7} parent=0 // loop_header
    %s14 = sphi 0, %s18
    %p15 = scmp.ge.s32.totalorder %s14, 4
    %s24 = sphi 0, %s26
    %s27 = sphi 0, %s24
    %s28 = sphi 0, %s27
    %s44 = sphi 0, %s28
    %s48 = sphi 0, %s48
    %s50 = sphi 0, %s48
    %s51 = sphi 0, %s50
    %s65 = sphi 0, %s51
    %s69 = sphi 0, %s69
    %s71 = sphi 0, %s69
    %s72 = sphi 0, %s71
    %s86 = sphi 0, %s72
    %s90 = sphi 0, %s90
    %s92 = sphi 0, %s90
    %s93 = sphi 0, %s92
    %s107 = sphi 0, %s93
    %s111 = sphi 0, %s111
    %s113 = sphi 0, %s111
    %s114 = sphi 0, %s113
    %s128 = sphi 0, %s114
    %s134 = sphi 0, %s136
    %s137 = sphi 0, %s134
    %s138 = sphi 0, %s137
    %s154 = sphi 0, %s138
    %s160 = sphi 0, %s162
    %s163 = sphi 0, %s160
    %s164 = sphi 0, %s163
    %s180 = sphi 0, %s164
    %s186 = sphi 0, %s188
    %s189 = sphi 0, %s186
    %s190 = sphi 0, %s189
    %s206 = sphi 0, %s190
  $region4: #{new_bottleneck_forward.7} parent=0 // loop_header_branch
    %17 = sbr.rel (%p15) target = $region8
  $region5: #{new_bottleneck_forward.7} parent=0 // loop_body
    %s19 = ssub.s32 %s14, 1
    %s20 = ssub.s32 %s14, 2
    %s21 = sadd.s32 %s14, 1
    %s22 = ssub.s32 %s14, %s21
    %p23 = scmp.eq.s32.totalorder %s22, 0
    %s25 = sadd.s32 %s24, 1
    %s26 = scalar_select %p23, %s24, %s25
    %p29 = pneg %p23
    %p30 = scmp.eq.s32.totalorder %s14, 1
    %p31 = por %p29, %p30
    %p32 = scmp.ne.s32.totalorder %s24, %s27
    %p33 = scmp.eq.s32.totalorder %s14, 0
    %p34 = por %p32, %p33
    %p35 = scmp.ne.s32.totalorder %s24, %s27
    %p36 = scmp.eq.s32.totalorder %s19, 1
    %p37 = por %p35, %p36
    %p38 = scmp.ne.s32.totalorder %s27, %s28
    %p39 = scmp.eq.s32.totalorder %s19, 0
    %p40 = por %p38, %p39
    %p41 = scmp.ne.s32.totalorder %s27, %s28
    %p42 = scmp.eq.s32.totalorder %s20, 1
    %p43 = por %p41, %p42
    %p45 = scmp.ne.s32.totalorder %s28, %s44
    %p46 = scmp.eq.s32.totalorder %s20, 0
    %p47 = por %p45, %p46
    %s49 = sadd.s32 %s48, 1
    %p52 = scmp.eq.s32.totalorder %s14, 1
    %p53 = scmp.ne.s32.totalorder %s48, %s50
    %p54 = scmp.eq.s32.totalorder %s14, 0
    %p55 = por %p53, %p54
    %p56 = scmp.ne.s32.totalorder %s48, %s50
    %p57 = scmp.eq.s32.totalorder %s19, 1
    %p58 = por %p56, %p57
    %p59 = scmp.ne.s32.totalorder %s50, %s51
    %p60 = scmp.eq.s32.totalorder %s19, 0
    %p61 = por %p59, %p60
    %p62 = scmp.ne.s32.totalorder %s50, %s51
    %p63 = scmp.eq.s32.totalorder %s20, 1
    %p64 = por %p62, %p63
    %p66 = scmp.ne.s32.totalorder %s51, %s65
    %p67 = scmp.eq.s32.totalorder %s20, 0
    %p68 = por %p66, %p67
    %s70 = sadd.s32 %s69, 1
    %p73 = scmp.eq.s32.totalorder %s14, 1
    %p74 = scmp.ne.s32.totalorder %s69, %s71
    %p75 = scmp.eq.s32.totalorder %s14, 0
    %p76 = por %p74, %p75
    %p77 = scmp.ne.s32.totalorder %s69, %s71
    %p78 = scmp.eq.s32.totalorder %s19, 1
    %p79 = por %p77, %p78
    %p80 = scmp.ne.s32.totalorder %s71, %s72
    %p81 = scmp.eq.s32.totalorder %s19, 0
    %p82 = por %p80, %p81
    %p83 = scmp.ne.s32.totalorder %s71, %s72
    %p84 = scmp.eq.s32.totalorder %s20, 1
    %p85 = por %p83, %p84
    %p87 = scmp.ne.s32.totalorder %s72, %s86
    %p88 = scmp.eq.s32.totalorder %s20, 0
    %p89 = por %p87, %p88
    %s91 = sadd.s32 %s90, 1
    %p94 = scmp.eq.s32.totalorder %s14, 1
    %p95 = scmp.ne.s32.totalorder %s90, %s92
    %p96 = scmp.eq.s32.totalorder %s14, 0
    %p97 = por %p95, %p96
    %p98 = scmp.ne.s32.totalorder %s90, %s92
    %p99 = scmp.eq.s32.totalorder %s19, 1
    %p100 = por %p98, %p99
    %p101 = scmp.ne.s32.totalorder %s92, %s93
    %p102 = scmp.eq.s32.totalorder %s19, 0
    %p103 = por %p101, %p102
    %p104 = scmp.ne.s32.totalorder %s92, %s93
    %p105 = scmp.eq.s32.totalorder %s20, 1
    %p106 = por %p104, %p105
    %p108 = scmp.ne.s32.totalorder %s93, %s107
    %p109 = scmp.eq.s32.totalorder %s20, 0
    %p110 = por %p108, %p109
    %s112 = sadd.s32 %s111, 1
    %p115 = scmp.eq.s32.totalorder %s14, 1
    %p116 = scmp.ne.s32.totalorder %s111, %s113
    %p117 = scmp.eq.s32.totalorder %s14, 0
    %p118 = por %p116, %p117
    %p119 = scmp.ne.s32.totalorder %s111, %s113
    %p120 = scmp.eq.s32.totalorder %s19, 1
    %p121 = por %p119, %p120
    %p122 = scmp.ne.s32.totalorder %s113, %s114
    %p123 = scmp.eq.s32.totalorder %s19, 0
    %p124 = por %p122, %p123
    %p125 = scmp.ne.s32.totalorder %s113, %s114
    %p126 = scmp.eq.s32.totalorder %s20, 1
    %p127 = por %p125, %p126
    %p129 = scmp.ne.s32.totalorder %s114, %s128
    %p130 = scmp.eq.s32.totalorder %s20, 0
    %p131 = por %p129, %p130
    %s132 = ssub.s32 %s14, %s21
    %p133 = scmp.eq.s32.totalorder %s132, 0
    %s135 = sadd.s32 %s134, 1
    %s136 = scalar_select %p133, %s134, %s135
    %p139 = pneg %p133
    %p140 = scmp.eq.s32.totalorder %s14, 1
    %p141 = por %p139, %p140
    %p142 = scmp.ne.s32.totalorder %s134, %s137
    %p143 = scmp.eq.s32.totalorder %s14, 0
    %p144 = por %p142, %p143
    %p145 = scmp.ne.s32.totalorder %s134, %s137
    %p146 = scmp.eq.s32.totalorder %s19, 1
    %p147 = por %p145, %p146
    %p148 = scmp.ne.s32.totalorder %s137, %s138
    %p149 = scmp.eq.s32.totalorder %s19, 0
    %p150 = por %p148, %p149
    %p151 = scmp.ne.s32.totalorder %s137, %s138
    %p152 = scmp.eq.s32.totalorder %s20, 1
    %p153 = por %p151, %p152
    %p155 = scmp.ne.s32.totalorder %s138, %s154
    %p156 = scmp.eq.s32.totalorder %s20, 0
    %p157 = por %p155, %p156
    %s158 = ssub.s32 %s14, %s21
    %p159 = scmp.eq.s32.totalorder %s158, 0
    %s161 = sadd.s32 %s160, 1
    %s162 = scalar_select %p159, %s160, %s161
    %p165 = pneg %p159
    %p166 = scmp.eq.s32.totalorder %s14, 1
    %p167 = por %p165, %p166
    %p168 = scmp.ne.s32.totalorder %s160, %s163
    %p169 = scmp.eq.s32.totalorder %s14, 0
    %p170 = por %p168, %p169
    %p171 = scmp.ne.s32.totalorder %s160, %s163
    %p172 = scmp.eq.s32.totalorder %s19, 1
    %p173 = por %p171, %p172
    %p174 = scmp.ne.s32.totalorder %s163, %s164
    %p175 = scmp.eq.s32.totalorder %s19, 0
    %p176 = por %p174, %p175
    %p177 = scmp.ne.s32.totalorder %s163, %s164
    %p178 = scmp.eq.s32.totalorder %s20, 1
    %p179 = por %p177, %p178
    %p181 = scmp.ne.s32.totalorder %s164, %s180
    %p182 = scmp.eq.s32.totalorder %s20, 0
    %p183 = por %p181, %p182
    %s184 = ssub.s32 %s14, %s21
    %p185 = scmp.eq.s32.totalorder %s184, 0
    %s187 = sadd.s32 %s186, 1
    %s188 = scalar_select %p185, %s186, %s187
    %p191 = pneg %p185
    %p192 = scmp.eq.s32.totalorder %s14, 1
    %p193 = por %p191, %p192
    %p194 = scmp.ne.s32.totalorder %s186, %s189
    %p195 = scmp.eq.s32.totalorder %s14, 0
    %p196 = por %p194, %p195
    %p197 = scmp.ne.s32.totalorder %s186, %s189
    %p198 = scmp.eq.s32.totalorder %s19, 1
    %p199 = por %p197, %p198
    %p200 = scmp.ne.s32.totalorder %s189, %s190
    %p201 = scmp.eq.s32.totalorder %s19, 0
    %p202 = por %p200, %p201
    %p203 = scmp.ne.s32.totalorder %s189, %s190
    %p204 = scmp.eq.s32.totalorder %s20, 1
    %p205 = por %p203, %p204
    %p207 = scmp.ne.s32.totalorder %s190, %s206
    %p208 = scmp.eq.s32.totalorder %s20, 0
    %p209 = por %p207, %p208
    %p210 = scmp.le.s32.totalorder 1, %s14
    %p211 = scmp.lt.s32.totalorder %s14, 3
    %p212 = pnand %p210, %p211
    %p213 = pneg %p212
    // Predicated region
    $region9: #{new_bottleneck_forward.7} parent=5 // pred_check
      _
    $region10: #{new_bottleneck_forward.7} parent=5 // pred_check_branch
      %215 = sbr.rel (%p212) target = $region12
    $region11: #{new_bottleneck_forward.7} parent=5 // pred_region
      %s216 = ssub.s32 %s14, 1
      // Predicated region
      $region13: #{new_bottleneck_forward.7} parent=11 // pred_check
        %p217 = pneg %p61
      $region14: #{new_bottleneck_forward.7} parent=11 // pred_check_branch
        %219 = sbr.rel (%p217) target = $region16
      $region15: #{new_bottleneck_forward.7} parent=11 // pred_region
        _
      $region16: #{new_bottleneck_forward.7} parent=11 // pred_fallthru
        _
      // Predicated region
      $region17: #{new_bottleneck_forward.7} parent=11 // pred_check
        %p220 = pneg %p82
      $region18: #{new_bottleneck_forward.7} parent=11 // pred_check_branch
        %222 = sbr.rel (%p220) target = $region20
      $region19: #{new_bottleneck_forward.7} parent=11 // pred_region
        _
      $region20: #{new_bottleneck_forward.7} parent=11 // pred_fallthru
        _
      // Predicated region
      $region21: #{new_bottleneck_forward.7} parent=11 // pred_check
        %p223 = pneg %p103
      $region22: #{new_bottleneck_forward.7} parent=11 // pred_check_branch
        %225 = sbr.rel (%p223) target = $region24
      $region23: #{new_bottleneck_forward.7} parent=11 // pred_region
        _
      $region24: #{new_bottleneck_forward.7} parent=11 // pred_fallthru
        _
      // Predicated region
      $region25: #{new_bottleneck_forward.7} parent=11 // pred_check
        %p226 = pneg %p124
      $region26: #{new_bottleneck_forward.7} parent=11 // pred_check_branch
        %228 = sbr.rel (%p226) target = $region28
      $region27: #{new_bottleneck_forward.7} parent=11 // pred_region
        _
      $region28: #{new_bottleneck_forward.7} parent=11 // pred_fallthru
        _
    $region12: #{new_bottleneck_forward.7} parent=5 // pred_fallthru
      _
    %p229 = scmp.lt.s32.totalorder %s14, 2
    // Predicated region
    $region29: #{new_bottleneck_forward.7} parent=5 // pred_check
      %p230 = pneg %p229
    $region30: #{new_bottleneck_forward.7} parent=5 // pred_check_branch
      %232 = sbr.rel (%p230) target = $region32
    $region31: #{new_bottleneck_forward.7} parent=5 // pred_region
      // Predicated region
      $region33: #{new_bottleneck_forward.7} parent=31 // pred_check
        %p233 = pneg %p34
      $region34: #{new_bottleneck_forward.7} parent=31 // pred_check_branch
        %235 = sbr.rel (%p233) target = $region36
      $region35: #{new_bottleneck_forward.7} parent=31 // pred_region
        %p236 = scmp.lt.s32.totalorder %s14, 1
        %s237 = scalar_select %p236, %s14, 1
        %s238 = smul.addr %s237, 8
        %s239 = smul.addr %s238, 8
        %s240 = scalar_lea.vmem %s0, %s239
      $region36: #{new_bottleneck_forward.7} parent=31 // pred_fallthru
        _
    $region32: #{new_bottleneck_forward.7} parent=5 // pred_fallthru
      _
    %p241 = scmp.le.s32.totalorder 1, %s14
    %p242 = scmp.lt.s32.totalorder %s14, 3
    %p243 = pnand %p241, %p242
    %p244 = pneg %p243
    // Predicated region
    $region37: #{new_bottleneck_forward.7} parent=5 // pred_check
      _
    $region38: #{new_bottleneck_forward.7} parent=5 // pred_check_branch
      %246 = sbr.rel (%p243) target = $region40
    $region39: #{new_bottleneck_forward.7} parent=5 // pred_region
      %s247 = ssub.s32 %s14, 1
      %p248 = scmp.lt.s32.totalorder %s19, 1
      %s249 = scalar_select %p248, %s19, 1
      %s250 = smul.addr %s249, 8
      %s251 = smul.addr %s250, 8
      %s252 = scalar_lea.vmem %s0, %s251
      %p253 = pneg %p40
      %p254 = pneg %p37
      %p255 = pneg %p61
      %p256 = pneg %p58
      %p257 = pneg %p82
      %p258 = pneg %p79
      %p259 = pneg %p103
      %p260 = pneg %p100
      %p261 = pneg %p124
      %p262 = pneg %p121
      %p263 = pneg %p150
      %p264 = pneg %p147
      %p265 = scmp.lt.s32.totalorder %s19, 1
      %s266 = scalar_select %p265, %s19, 1
      %s267 = smul.addr %s266, 8
      %s268 = smul.addr %s267, 8
      %s269 = scalar_lea.vmem %s5, %s268
      %p270 = pneg %p176
      %p271 = pneg %p173
      %p272 = scmp.lt.s32.totalorder %s19, 1
      %s273 = scalar_select %p272, %s19, 1
      %s274 = scalar_lea.vmem %s6, %s273
      %p275 = pneg %p202
      %p276 = pneg %p199
      %p277 = scmp.lt.s32.totalorder %s19, 1
      %s278 = scalar_select %p277, %s19, 1
      %s279 = scalar_lea.vmem %s7, %s278
      %p280 = scmp.lt.s32.totalorder %s19, 1
      %s281 = scalar_select %p280, %s19, 1
      %s282 = smul.addr %s281, 8
      %s283 = smul.addr %s282, 8
      %s284 = scalar_lea.vmem %s0, %s283
      %p285 = scmp.lt.s32.totalorder %s19, 1
      %s286 = scalar_select %p285, %s19, 1
      %s287 = smul.addr %s286, 8
      %s288 = smul.addr %s287, 8
      %s289 = scalar_lea.vmem %s5, %s288
      %p290 = scmp.lt.s32.totalorder %s19, 1
      %s291 = scalar_select %p290, %s19, 1
      %s292 = scalar_lea.vmem %s6, %s291
      %p293 = scmp.lt.s32.totalorder %s19, 1
      %s294 = scalar_select %p293, %s19, 1
      %s295 = scalar_lea.vmem %s7, %s294
      %v296 = vld [vmem:[%s284] sm:$0xff]
      %v297 = vld [vmem:[%s284 + $0x8] sm:$0xff]
      %v298 = vld [vmem:[%s284 + $0x10] sm:$0xff]
      %v299 = vld [vmem:[%s284 + $0x18] sm:$0xff]
      %v300 = vld [vmem:[%s284 + $0x20] sm:$0xff]
      %v301 = vld [vmem:[%s284 + $0x28] sm:$0xff]
      %v302 = vld [vmem:[%s284 + $0x30] sm:$0xff]
      %v303 = vld [vmem:[%s284 + $0x38] sm:$0xff]
      %v304 = vld [vmem:[%s1] sm:$0x1]
      %v306 = vperm.slane %v304, 0
      %v308 = vmul.f32 %v306, %v296
      %v309 = vmul.f32 %v306, %v297
      %v310 = vmul.f32 %v306, %v298
      %v311 = vmul.f32 %v306, %v299
      %v312 = vmul.f32 %v306, %v300
      %v313 = vmul.f32 %v306, %v301
      %v314 = vmul.f32 %v306, %v302
      %v315 = vmul.f32 %v306, %v303
      %v316 = vld [vmem:[%s2] sm:$0x1]
      %v318 = vperm.slane %v316, 0
      %v320 = vadd.f32 %v308, %v318
      %v321 = vadd.f32 %v309, %v318
      %v322 = vadd.f32 %v310, %v318
      %v323 = vadd.f32 %v311, %v318
      %v324 = vadd.f32 %v312, %v318
      %v325 = vadd.f32 %v313, %v318
      %v326 = vadd.f32 %v314, %v318
      %v327 = vadd.f32 %v315, %v318
      %v328 = vmax.f32 %v320, 0.0
      %v329 = vmax.f32 %v321, 0.0
      %v330 = vmax.f32 %v322, 0.0
      %v331 = vmax.f32 %v323, 0.0
      %v332 = vmax.f32 %v324, 0.0
      %v333 = vmax.f32 %v325, 0.0
      %v334 = vmax.f32 %v326, 0.0
      %v335 = vmax.f32 %v327, 0.0
      %v336 = vrot.slane %v328, 7
      %v337 = vrot.slane %v329, 7
      %v338 = vrot.slane %v330, 7
      %v339 = vrot.slane %v331, 7
      %v340 = vrot.slane %v332, 7
      %v341 = vrot.slane %v333, 7
      %v342 = vrot.slane %v334, 7
      %v343 = vrot.slane %v335, 7
      %v344 = vlaneseq
      %v345 = vshrl.u32 %v344, 7
      %vm346 = vcmp.lt.s32.totalorder %v345, 1
      %v347 = vsel %vm346, %v342, %v343
      %v348 = vsel %vm346, %v341, %v342
      %v349 = vsel %vm346, %v340, %v341
      %v350 = vsel %vm346, %v339, %v340
      %v351 = vsel %vm346, %v338, %v339
      %v352 = vsel %vm346, %v337, %v338
      %v353 = vsel %vm346, %v336, %v337
      %v354 = vsel %vm346, %v343, %v336
      %v355 = vld [vmem:[%s4] sm:$0xff]
      %v356 = vld [vmem:[%s4 + $0x8] sm:$0xff]
      %v357 = vld [vmem:[%s4 + $0x10] sm:$0xff]
      %v358 = vld [vmem:[%s4 + $0x18] sm:$0xff]
      %v359 = vld [vmem:[%s4 + $0x20] sm:$0xff]
      %v360 = vld [vmem:[%s4 + $0x28] sm:$0xff]
      %v361 = vld [vmem:[%s4 + $0x30] sm:$0xff]
      %v362 = vld [vmem:[%s4 + $0x38] sm:$0xff]
      %364 = vset.pattern.permute.xlu0 0
      %365 = vperm.xlu0 %364, %v355
      %v366 = vpop.permute.xlu0 %365
      %369 = vset.pattern.permute.xlu0 0
      %370 = vperm.xlu0 %369, %v356
      %v371 = vpop.permute.xlu0 %370
      %374 = vset.pattern.permute.xlu0 0
      %375 = vperm.xlu0 %374, %v357
      %v376 = vpop.permute.xlu0 %375
      %379 = vset.pattern.permute.xlu0 0
      %380 = vperm.xlu0 %379, %v358
      %v381 = vpop.permute.xlu0 %380
      %384 = vset.pattern.permute.xlu0 0
      %385 = vperm.xlu0 %384, %v359
      %v386 = vpop.permute.xlu0 %385
      %389 = vset.pattern.permute.xlu0 0
      %390 = vperm.xlu0 %389, %v360
      %v391 = vpop.permute.xlu0 %390
      %394 = vset.pattern.permute.xlu0 0
      %395 = vperm.xlu0 %394, %v361
      %v396 = vpop.permute.xlu0 %395
      %399 = vset.pattern.permute.xlu0 0
      %400 = vperm.xlu0 %399, %v362
      %v401 = vpop.permute.xlu0 %400
      %v403 = vmul.f32 %v347, %v366
      %v404 = vmul.f32 %v354, %v371
      %v405 = vmul.f32 %v353, %v376
      %v406 = vmul.f32 %v352, %v381
      %v407 = vmul.f32 %v351, %v386
      %v408 = vmul.f32 %v350, %v391
      %v409 = vmul.f32 %v349, %v396
      %v410 = vmul.f32 %v348, %v401
      %v411 = vld [vmem:[%s3] sm:$0xff]
      %v412 = vld [vmem:[%s3 + $0x8] sm:$0xff]
      %v413 = vld [vmem:[%s3 + $0x10] sm:$0xff]
      %v414 = vld [vmem:[%s3 + $0x18] sm:$0xff]
      %v415 = vld [vmem:[%s3 + $0x20] sm:$0xff]
      %v416 = vld [vmem:[%s3 + $0x28] sm:$0xff]
      %v417 = vld [vmem:[%s3 + $0x30] sm:$0xff]
      %v418 = vld [vmem:[%s3 + $0x38] sm:$0xff]
      %v419 = vld [vmem:[%s3 + $0x40] sm:$0xff]
      %v420 = vld [vmem:[%s3 + $0x48] sm:$0xff]
      %v421 = vld [vmem:[%s3 + $0x50] sm:$0xff]
      %v422 = vld [vmem:[%s3 + $0x58] sm:$0xff]
      %v423 = vld [vmem:[%s3 + $0x60] sm:$0xff]
      %v424 = vld [vmem:[%s3 + $0x68] sm:$0xff]
      %v425 = vld [vmem:[%s3 + $0x70] sm:$0xff]
      %v426 = vld [vmem:[%s3 + $0x78] sm:$0xff]
      %s427 = scalar_lea.vmem %s4, 64
      %v428 = vld [vmem:[%s427] sm:$0xff]
      %v429 = vld [vmem:[%s427 + $0x8] sm:$0xff]
      %v430 = vld [vmem:[%s427 + $0x10] sm:$0xff]
      %v431 = vld [vmem:[%s427 + $0x18] sm:$0xff]
      %v432 = vld [vmem:[%s427 + $0x20] sm:$0xff]
      %v433 = vld [vmem:[%s427 + $0x28] sm:$0xff]
      %v434 = vld [vmem:[%s427 + $0x30] sm:$0xff]
      %v435 = vld [vmem:[%s427 + $0x38] sm:$0xff]
      %437 = vset.pattern.permute.xlu0 0
      %438 = vperm.xlu0 %437, %v428
      %v439 = vpop.permute.xlu0 %438
      %442 = vset.pattern.permute.xlu0 0
      %443 = vperm.xlu0 %442, %v429
      %v444 = vpop.permute.xlu0 %443
      %447 = vset.pattern.permute.xlu0 0
      %448 = vperm.xlu0 %447, %v430
      %v449 = vpop.permute.xlu0 %448
      %452 = vset.pattern.permute.xlu0 0
      %453 = vperm.xlu0 %452, %v431
      %v454 = vpop.permute.xlu0 %453
      %457 = vset.pattern.permute.xlu0 0
      %458 = vperm.xlu0 %457, %v432
      %v459 = vpop.permute.xlu0 %458
      %462 = vset.pattern.permute.xlu0 0
      %463 = vperm.xlu0 %462, %v433
      %v464 = vpop.permute.xlu0 %463
      %467 = vset.pattern.permute.xlu0 0
      %468 = vperm.xlu0 %467, %v434
      %v469 = vpop.permute.xlu0 %468
      %472 = vset.pattern.permute.xlu0 0
      %473 = vperm.xlu0 %472, %v435
      %v474 = vpop.permute.xlu0 %473
      %v476 = vmul.f32 %v335, %v439
      %v477 = vmul.f32 %v328, %v444
      %v478 = vmul.f32 %v329, %v449
      %v479 = vmul.f32 %v330, %v454
      %v480 = vmul.f32 %v331, %v459
      %v481 = vmul.f32 %v332, %v464
      %v482 = vmul.f32 %v333, %v469
      %v483 = vmul.f32 %v334, %v474
      %s484 = scalar_lea.vmem %s3, 128
      %v485 = vld [vmem:[%s484] sm:$0xff]
      %v486 = vld [vmem:[%s484 + $0x8] sm:$0xff]
      %v487 = vld [vmem:[%s484 + $0x10] sm:$0xff]
      %v488 = vld [vmem:[%s484 + $0x18] sm:$0xff]
      %v489 = vld [vmem:[%s484 + $0x20] sm:$0xff]
      %v490 = vld [vmem:[%s484 + $0x28] sm:$0xff]
      %v491 = vld [vmem:[%s484 + $0x30] sm:$0xff]
      %v492 = vld [vmem:[%s484 + $0x38] sm:$0xff]
      %v493 = vld [vmem:[%s484 + $0x40] sm:$0xff]
      %v494 = vld [vmem:[%s484 + $0x48] sm:$0xff]
      %v495 = vld [vmem:[%s484 + $0x50] sm:$0xff]
      %v496 = vld [vmem:[%s484 + $0x58] sm:$0xff]
      %v497 = vld [vmem:[%s484 + $0x60] sm:$0xff]
      %v498 = vld [vmem:[%s484 + $0x68] sm:$0xff]
      %v499 = vld [vmem:[%s484 + $0x70] sm:$0xff]
      %v500 = vld [vmem:[%s484 + $0x78] sm:$0xff]
      %501 = vmatpush.msra.mxu0 %v500
      %502 = vmatpush.msra.mxu0 %v499
      %503 = vmatpush.msra.mxu0 %v498
      %504 = vmatpush.msra.mxu0 %v497
      %505 = vmatpush.msra.mxu0 %v496
      %506 = vmatpush.msra.mxu0 %v495
      %507 = vmatpush.msra.mxu0 %v494
      %508 = vmatpush.msra.mxu0 %v493
      %509 = vmatpush.msra.mxu0 %v492
      %510 = vmatpush.msra.mxu0 %v491
      %511 = vmatpush.msra.mxu0 %v490
      %512 = vmatpush.msra.mxu0 %v489
      %513 = vmatpush.msra.mxu0 %v488
      %514 = vmatpush.msra.mxu0 %v487
      %515 = vmatpush.msra.mxu0 %v486
      %516 = vmatpush.msra.mxu0 %v485
      %517 = vmatmul.f32.gmra.mxu0 %v476
      %v518 = vpop.f32.mrf.mxu0
      %v519 = vadd.f32 0.0, %v518
      %520 = vmatmul.f32.gmra.mxu0 %v477
      %v521 = vpop.f32.mrf.mxu0
      %v522 = vadd.f32 0.0, %v521
      %523 = vmatmul.f32.gmra.mxu0 %v478
      %v524 = vpop.f32.mrf.mxu0
      %v525 = vadd.f32 0.0, %v524
      %526 = vmatmul.f32.gmra.mxu0 %v479
      %v527 = vpop.f32.mrf.mxu0
      %v528 = vadd.f32 0.0, %v527
      %529 = vmatmul.f32.gmra.mxu0 %v480
      %v530 = vpop.f32.mrf.mxu0
      %v531 = vadd.f32 0.0, %v530
      %532 = vmatmul.f32.gmra.mxu0 %v481
      %v533 = vpop.f32.mrf.mxu0
      %v534 = vadd.f32 0.0, %v533
      %535 = vmatmul.f32.gmra.mxu0 %v482
      %v536 = vpop.f32.mrf.mxu0
      %v537 = vadd.f32 0.0, %v536
      %538 = vmatmul.f32.gmra.mxu0 %v483
      %v539 = vpop.f32.mrf.mxu0
      %v540 = vadd.f32 0.0, %v539
      %541 = vdwg.mxu0
      %542 = vmatpush.msra.mxu0 %v426
      %543 = vmatpush.msra.mxu0 %v425
      %544 = vmatpush.msra.mxu0 %v424
      %545 = vmatpush.msra.mxu0 %v423
      %546 = vmatpush.msra.mxu0 %v422
      %547 = vmatpush.msra.mxu0 %v421
      %548 = vmatpush.msra.mxu0 %v420
      %549 = vmatpush.msra.mxu0 %v419
      %550 = vmatpush.msra.mxu0 %v418
      %551 = vmatpush.msra.mxu0 %v417
      %552 = vmatpush.msra.mxu0 %v416
      %553 = vmatpush.msra.mxu0 %v415
      %554 = vmatpush.msra.mxu0 %v414
      %555 = vmatpush.msra.mxu0 %v413
      %556 = vmatpush.msra.mxu0 %v412
      %557 = vmatpush.msra.mxu0 %v411
      %558 = vmatmul.f32.gmra.mxu0 %v403
      %v559 = vpop.f32.mrf.mxu0
      %v560 = vadd.f32 %v519, %v559
      %561 = vmatmul.f32.gmra.mxu0 %v404
      %v562 = vpop.f32.mrf.mxu0
      %v563 = vadd.f32 %v522, %v562
      %564 = vmatmul.f32.gmra.mxu0 %v405
      %v565 = vpop.f32.mrf.mxu0
      %v566 = vadd.f32 %v525, %v565
      %567 = vmatmul.f32.gmra.mxu0 %v406
      %v568 = vpop.f32.mrf.mxu0
      %v569 = vadd.f32 %v528, %v568
      %570 = vmatmul.f32.gmra.mxu0 %v407
      %v571 = vpop.f32.mrf.mxu0
      %v572 = vadd.f32 %v531, %v571
      %573 = vmatmul.f32.gmra.mxu0 %v408
      %v574 = vpop.f32.mrf.mxu0
      %v575 = vadd.f32 %v534, %v574
      %576 = vmatmul.f32.gmra.mxu0 %v409
      %v577 = vpop.f32.mrf.mxu0
      %v578 = vadd.f32 %v537, %v577
      %579 = vmatmul.f32.gmra.mxu0 %v410
      %v580 = vpop.f32.mrf.mxu0
      %v581 = vadd.f32 %v540, %v580
      %582 = vdwg.mxu0
      %v583 = vrot.slane %v328, 1
      %v584 = vrot.slane %v329, 1
      %v585 = vrot.slane %v330, 1
      %v586 = vrot.slane %v331, 1
      %v587 = vrot.slane %v332, 1
      %v588 = vrot.slane %v333, 1
      %v589 = vrot.slane %v334, 1
      %v590 = vrot.slane %v335, 1
      %vm591 = vcmp.lt.s32.totalorder %v345, 7
      %v592 = vsel %vm591, %v589, %v590
      %v593 = vsel %vm591, %v588, %v589
      %v594 = vsel %vm591, %v587, %v588
      %v595 = vsel %vm591, %v586, %v587
      %v596 = vsel %vm591, %v585, %v586
      %v597 = vsel %vm591, %v584, %v585
      %v598 = vsel %vm591, %v583, %v584
      %v599 = vsel %vm591, %v590, %v583
      %s600 = scalar_lea.vmem %s4, 128
      %v601 = vld [vmem:[%s600] sm:$0xff]
      %v602 = vld [vmem:[%s600 + $0x8] sm:$0xff]
      %v603 = vld [vmem:[%s600 + $0x10] sm:$0xff]
      %v604 = vld [vmem:[%s600 + $0x18] sm:$0xff]
      %v605 = vld [vmem:[%s600 + $0x20] sm:$0xff]
      %v606 = vld [vmem:[%s600 + $0x28] sm:$0xff]
      %v607 = vld [vmem:[%s600 + $0x30] sm:$0xff]
      %v608 = vld [vmem:[%s600 + $0x38] sm:$0xff]
      %610 = vset.pattern.permute.xlu0 0
      %611 = vperm.xlu0 %610, %v601
      %v612 = vpop.permute.xlu0 %611
      %615 = vset.pattern.permute.xlu0 0
      %616 = vperm.xlu0 %615, %v602
      %v617 = vpop.permute.xlu0 %616
      %620 = vset.pattern.permute.xlu0 0
      %621 = vperm.xlu0 %620, %v603
      %v622 = vpop.permute.xlu0 %621
      %625 = vset.pattern.permute.xlu0 0
      %626 = vperm.xlu0 %625, %v604
      %v627 = vpop.permute.xlu0 %626
      %630 = vset.pattern.permute.xlu0 0
      %631 = vperm.xlu0 %630, %v605
      %v632 = vpop.permute.xlu0 %631
      %635 = vset.pattern.permute.xlu0 0
      %636 = vperm.xlu0 %635, %v606
      %v637 = vpop.permute.xlu0 %636
      %640 = vset.pattern.permute.xlu0 0
      %641 = vperm.xlu0 %640, %v607
      %v642 = vpop.permute.xlu0 %641
      %645 = vset.pattern.permute.xlu0 0
      %646 = vperm.xlu0 %645, %v608
      %v647 = vpop.permute.xlu0 %646
      %v649 = vmul.f32 %v599, %v612
      %v650 = vmul.f32 %v598, %v617
      %v651 = vmul.f32 %v597, %v622
      %v652 = vmul.f32 %v596, %v627
      %v653 = vmul.f32 %v595, %v632
      %v654 = vmul.f32 %v594, %v637
      %v655 = vmul.f32 %v593, %v642
      %v656 = vmul.f32 %v592, %v647
      %s657 = scalar_lea.vmem %s3, 256
      %v658 = vld [vmem:[%s657] sm:$0xff]
      %v659 = vld [vmem:[%s657 + $0x8] sm:$0xff]
      %v660 = vld [vmem:[%s657 + $0x10] sm:$0xff]
      %v661 = vld [vmem:[%s657 + $0x18] sm:$0xff]
      %v662 = vld [vmem:[%s657 + $0x20] sm:$0xff]
      %v663 = vld [vmem:[%s657 + $0x28] sm:$0xff]
      %v664 = vld [vmem:[%s657 + $0x30] sm:$0xff]
      %v665 = vld [vmem:[%s657 + $0x38] sm:$0xff]
      %v666 = vld [vmem:[%s657 + $0x40] sm:$0xff]
      %v667 = vld [vmem:[%s657 + $0x48] sm:$0xff]
      %v668 = vld [vmem:[%s657 + $0x50] sm:$0xff]
      %v669 = vld [vmem:[%s657 + $0x58] sm:$0xff]
      %v670 = vld [vmem:[%s657 + $0x60] sm:$0xff]
      %v671 = vld [vmem:[%s657 + $0x68] sm:$0xff]
      %v672 = vld [vmem:[%s657 + $0x70] sm:$0xff]
      %v673 = vld [vmem:[%s657 + $0x78] sm:$0xff]
      %674 = vmatpush.msra.mxu0 %v673
      %675 = vmatpush.msra.mxu0 %v672
      %676 = vmatpush.msra.mxu0 %v671
      %677 = vmatpush.msra.mxu0 %v670
      %678 = vmatpush.msra.mxu0 %v669
      %679 = vmatpush.msra.mxu0 %v668
      %680 = vmatpush.msra.mxu0 %v667
      %681 = vmatpush.msra.mxu0 %v666
      %682 = vmatpush.msra.mxu0 %v665
      %683 = vmatpush.msra.mxu0 %v664
      %684 = vmatpush.msra.mxu0 %v663
      %685 = vmatpush.msra.mxu0 %v662
      %686 = vmatpush.msra.mxu0 %v661
      %687 = vmatpush.msra.mxu0 %v660
      %688 = vmatpush.msra.mxu0 %v659
      %689 = vmatpush.msra.mxu0 %v658
      %690 = vmatmul.f32.gmra.mxu0 %v649
      %v691 = vpop.f32.mrf.mxu0
      %v692 = vadd.f32 0.0, %v691
      %693 = vmatmul.f32.gmra.mxu0 %v650
      %v694 = vpop.f32.mrf.mxu0
      %v695 = vadd.f32 0.0, %v694
      %696 = vmatmul.f32.gmra.mxu0 %v651
      %v697 = vpop.f32.mrf.mxu0
      %v698 = vadd.f32 0.0, %v697
      %699 = vmatmul.f32.gmra.mxu0 %v652
      %v700 = vpop.f32.mrf.mxu0
      %v701 = vadd.f32 0.0, %v700
      %702 = vmatmul.f32.gmra.mxu0 %v653
      %v703 = vpop.f32.mrf.mxu0
      %v704 = vadd.f32 0.0, %v703
      %705 = vmatmul.f32.gmra.mxu0 %v654
      %v706 = vpop.f32.mrf.mxu0
      %v707 = vadd.f32 0.0, %v706
      %708 = vmatmul.f32.gmra.mxu0 %v655
      %v709 = vpop.f32.mrf.mxu0
      %v710 = vadd.f32 0.0, %v709
      %711 = vmatmul.f32.gmra.mxu0 %v656
      %v712 = vpop.f32.mrf.mxu0
      %v713 = vadd.f32 0.0, %v712
      %714 = vdwg.mxu0
      %v715 = vadd.f32 %v560, %v692
      %v716 = vadd.f32 %v563, %v695
      %v717 = vadd.f32 %v566, %v698
      %v718 = vadd.f32 %v569, %v701
      %v719 = vadd.f32 %v572, %v704
      %v720 = vadd.f32 %v575, %v707
      %v721 = vadd.f32 %v578, %v710
      %v722 = vadd.f32 %v581, %v713
      %s723 = scalar_lea.vmem %s4, 192
      %v724 = vld [vmem:[%s723] sm:$0xff]
      %v725 = vld [vmem:[%s723 + $0x8] sm:$0xff]
      %v726 = vld [vmem:[%s723 + $0x10] sm:$0xff]
      %v727 = vld [vmem:[%s723 + $0x18] sm:$0xff]
      %v728 = vld [vmem:[%s723 + $0x20] sm:$0xff]
      %v729 = vld [vmem:[%s723 + $0x28] sm:$0xff]
      %v730 = vld [vmem:[%s723 + $0x30] sm:$0xff]
      %v731 = vld [vmem:[%s723 + $0x38] sm:$0xff]
      %733 = vset.pattern.permute.xlu0 0
      %734 = vperm.xlu0 %733, %v724
      %v735 = vpop.permute.xlu0 %734
      %738 = vset.pattern.permute.xlu0 0
      %739 = vperm.xlu0 %738, %v725
      %v740 = vpop.permute.xlu0 %739
      %743 = vset.pattern.permute.xlu0 0
      %744 = vperm.xlu0 %743, %v726
      %v745 = vpop.permute.xlu0 %744
      %748 = vset.pattern.permute.xlu0 0
      %749 = vperm.xlu0 %748, %v727
      %v750 = vpop.permute.xlu0 %749
      %753 = vset.pattern.permute.xlu0 0
      %754 = vperm.xlu0 %753, %v728
      %v755 = vpop.permute.xlu0 %754
      %758 = vset.pattern.permute.xlu0 0
      %759 = vperm.xlu0 %758, %v729
      %v760 = vpop.permute.xlu0 %759
      %763 = vset.pattern.permute.xlu0 0
      %764 = vperm.xlu0 %763, %v730
      %v765 = vpop.permute.xlu0 %764
      %768 = vset.pattern.permute.xlu0 0
      %769 = vperm.xlu0 %768, %v731
      %v770 = vpop.permute.xlu0 %769
      %v772 = vmul.f32 %v354, %v735
      %v773 = vmul.f32 %v353, %v740
      %v774 = vmul.f32 %v352, %v745
      %v775 = vmul.f32 %v351, %v750
      %v776 = vmul.f32 %v350, %v755
      %v777 = vmul.f32 %v349, %v760
      %v778 = vmul.f32 %v348, %v765
      %v779 = vmul.f32 %v347, %v770
      %s780 = scalar_lea.vmem %s3, 384
      %v781 = vld [vmem:[%s780] sm:$0xff]
      %v782 = vld [vmem:[%s780 + $0x8] sm:$0xff]
      %v783 = vld [vmem:[%s780 + $0x10] sm:$0xff]
      %v784 = vld [vmem:[%s780 + $0x18] sm:$0xff]
      %v785 = vld [vmem:[%s780 + $0x20] sm:$0xff]
      %v786 = vld [vmem:[%s780 + $0x28] sm:$0xff]
      %v787 = vld [vmem:[%s780 + $0x30] sm:$0xff]
      %v788 = vld [vmem:[%s780 + $0x38] sm:$0xff]
      %v789 = vld [vmem:[%s780 + $0x40] sm:$0xff]
      %v790 = vld [vmem:[%s780 + $0x48] sm:$0xff]
      %v791 = vld [vmem:[%s780 + $0x50] sm:$0xff]
      %v792 = vld [vmem:[%s780 + $0x58] sm:$0xff]
      %v793 = vld [vmem:[%s780 + $0x60] sm:$0xff]
      %v794 = vld [vmem:[%s780 + $0x68] sm:$0xff]
      %v795 = vld [vmem:[%s780 + $0x70] sm:$0xff]
      %v796 = vld [vmem:[%s780 + $0x78] sm:$0xff]
      %797 = vmatpush.msra.mxu0 %v796
      %798 = vmatpush.msra.mxu0 %v795
      %799 = vmatpush.msra.mxu0 %v794
      %800 = vmatpush.msra.mxu0 %v793
      %801 = vmatpush.msra.mxu0 %v792
      %802 = vmatpush.msra.mxu0 %v791
      %803 = vmatpush.msra.mxu0 %v790
      %804 = vmatpush.msra.mxu0 %v789
      %805 = vmatpush.msra.mxu0 %v788
      %806 = vmatpush.msra.mxu0 %v787
      %807 = vmatpush.msra.mxu0 %v786
      %808 = vmatpush.msra.mxu0 %v785
      %809 = vmatpush.msra.mxu0 %v784
      %810 = vmatpush.msra.mxu0 %v783
      %811 = vmatpush.msra.mxu0 %v782
      %812 = vmatpush.msra.mxu0 %v781
      %813 = vmatmul.f32.gmra.mxu0 %v772
      %v814 = vpop.f32.mrf.mxu0
      %v815 = vadd.f32 0.0, %v814
      %816 = vmatmul.f32.gmra.mxu0 %v773
      %v817 = vpop.f32.mrf.mxu0
      %v818 = vadd.f32 0.0, %v817
      %819 = vmatmul.f32.gmra.mxu0 %v774
      %v820 = vpop.f32.mrf.mxu0
      %v821 = vadd.f32 0.0, %v820
      %822 = vmatmul.f32.gmra.mxu0 %v775
      %v823 = vpop.f32.mrf.mxu0
      %v824 = vadd.f32 0.0, %v823
      %825 = vmatmul.f32.gmra.mxu0 %v776
      %v826 = vpop.f32.mrf.mxu0
      %v827 = vadd.f32 0.0, %v826
      %828 = vmatmul.f32.gmra.mxu0 %v777
      %v829 = vpop.f32.mrf.mxu0
      %v830 = vadd.f32 0.0, %v829
      %831 = vmatmul.f32.gmra.mxu0 %v778
      %v832 = vpop.f32.mrf.mxu0
      %v833 = vadd.f32 0.0, %v832
      %834 = vmatmul.f32.gmra.mxu0 %v779
      %v835 = vpop.f32.mrf.mxu0
      %v836 = vadd.f32 0.0, %v835
      %837 = vdwg.mxu0
      %v838 = vadd.f32 %v715, %v815
      %v839 = vadd.f32 %v716, %v818
      %v840 = vadd.f32 %v717, %v821
      %v841 = vadd.f32 %v718, %v824
      %v842 = vadd.f32 %v719, %v827
      %v843 = vadd.f32 %v720, %v830
      %v844 = vadd.f32 %v721, %v833
      %v845 = vadd.f32 %v722, %v836
      %s846 = scalar_lea.vmem %s4, 256
      %v847 = vld [vmem:[%s846] sm:$0xff]
      %v848 = vld [vmem:[%s846 + $0x8] sm:$0xff]
      %v849 = vld [vmem:[%s846 + $0x10] sm:$0xff]
      %v850 = vld [vmem:[%s846 + $0x18] sm:$0xff]
      %v851 = vld [vmem:[%s846 + $0x20] sm:$0xff]
      %v852 = vld [vmem:[%s846 + $0x28] sm:$0xff]
      %v853 = vld [vmem:[%s846 + $0x30] sm:$0xff]
      %v854 = vld [vmem:[%s846 + $0x38] sm:$0xff]
      %856 = vset.pattern.permute.xlu0 0
      %857 = vperm.xlu0 %856, %v847
      %v858 = vpop.permute.xlu0 %857
      %861 = vset.pattern.permute.xlu0 0
      %862 = vperm.xlu0 %861, %v848
      %v863 = vpop.permute.xlu0 %862
      %866 = vset.pattern.permute.xlu0 0
      %867 = vperm.xlu0 %866, %v849
      %v868 = vpop.permute.xlu0 %867
      %871 = vset.pattern.permute.xlu0 0
      %872 = vperm.xlu0 %871, %v850
      %v873 = vpop.permute.xlu0 %872
      %876 = vset.pattern.permute.xlu0 0
      %877 = vperm.xlu0 %876, %v851
      %v878 = vpop.permute.xlu0 %877
      %881 = vset.pattern.permute.xlu0 0
      %882 = vperm.xlu0 %881, %v852
      %v883 = vpop.permute.xlu0 %882
      %886 = vset.pattern.permute.xlu0 0
      %887 = vperm.xlu0 %886, %v853
      %v888 = vpop.permute.xlu0 %887
      %891 = vset.pattern.permute.xlu0 0
      %892 = vperm.xlu0 %891, %v854
      %v893 = vpop.permute.xlu0 %892
      %v895 = vmul.f32 %v328, %v858
      %v896 = vmul.f32 %v329, %v863
      %v897 = vmul.f32 %v330, %v868
      %v898 = vmul.f32 %v331, %v873
      %v899 = vmul.f32 %v332, %v878
      %v900 = vmul.f32 %v333, %v883
      %v901 = vmul.f32 %v334, %v888
      %v902 = vmul.f32 %v335, %v893
      %s903 = scalar_lea.vmem %s3, 512
      %v904 = vld [vmem:[%s903] sm:$0xff]
      %v905 = vld [vmem:[%s903 + $0x8] sm:$0xff]
      %v906 = vld [vmem:[%s903 + $0x10] sm:$0xff]
      %v907 = vld [vmem:[%s903 + $0x18] sm:$0xff]
      %v908 = vld [vmem:[%s903 + $0x20] sm:$0xff]
      %v909 = vld [vmem:[%s903 + $0x28] sm:$0xff]
      %v910 = vld [vmem:[%s903 + $0x30] sm:$0xff]
      %v911 = vld [vmem:[%s903 + $0x38] sm:$0xff]
      %v912 = vld [vmem:[%s903 + $0x40] sm:$0xff]
      %v913 = vld [vmem:[%s903 + $0x48] sm:$0xff]
      %v914 = vld [vmem:[%s903 + $0x50] sm:$0xff]
      %v915 = vld [vmem:[%s903 + $0x58] sm:$0xff]
      %v916 = vld [vmem:[%s903 + $0x60] sm:$0xff]
      %v917 = vld [vmem:[%s903 + $0x68] sm:$0xff]
      %v918 = vld [vmem:[%s903 + $0x70] sm:$0xff]
      %v919 = vld [vmem:[%s903 + $0x78] sm:$0xff]
      %920 = vmatpush.msra.mxu0 %v919
      %921 = vmatpush.msra.mxu0 %v918
      %922 = vmatpush.msra.mxu0 %v917
      %923 = vmatpush.msra.mxu0 %v916
      %924 = vmatpush.msra.mxu0 %v915
      %925 = vmatpush.msra.mxu0 %v914
      %926 = vmatpush.msra.mxu0 %v913
      %927 = vmatpush.msra.mxu0 %v912
      %928 = vmatpush.msra.mxu0 %v911
      %929 = vmatpush.msra.mxu0 %v910
      %930 = vmatpush.msra.mxu0 %v909
      %931 = vmatpush.msra.mxu0 %v908
      %932 = vmatpush.msra.mxu0 %v907
      %933 = vmatpush.msra.mxu0 %v906
      %934 = vmatpush.msra.mxu0 %v905
      %935 = vmatpush.msra.mxu0 %v904
      %936 = vmatmul.f32.gmra.mxu0 %v895
      %v937 = vpop.f32.mrf.mxu0
      %v938 = vadd.f32 0.0, %v937
      %939 = vmatmul.f32.gmra.mxu0 %v896
      %v940 = vpop.f32.mrf.mxu0
      %v941 = vadd.f32 0.0, %v940
      %942 = vmatmul.f32.gmra.mxu0 %v897
      %v943 = vpop.f32.mrf.mxu0
      %v944 = vadd.f32 0.0, %v943
      %945 = vmatmul.f32.gmra.mxu0 %v898
      %v946 = vpop.f32.mrf.mxu0
      %v947 = vadd.f32 0.0, %v946
      %948 = vmatmul.f32.gmra.mxu0 %v899
      %v949 = vpop.f32.mrf.mxu0
      %v950 = vadd.f32 0.0, %v949
      %951 = vmatmul.f32.gmra.mxu0 %v900
      %v952 = vpop.f32.mrf.mxu0
      %v953 = vadd.f32 0.0, %v952
      %954 = vmatmul.f32.gmra.mxu0 %v901
      %v955 = vpop.f32.mrf.mxu0
      %v956 = vadd.f32 0.0, %v955
      %957 = vmatmul.f32.gmra.mxu0 %v902
      %v958 = vpop.f32.mrf.mxu0
      %v959 = vadd.f32 0.0, %v958
      %960 = vdwg.mxu0
      %v961 = vadd.f32 %v838, %v938
      %v962 = vadd.f32 %v839, %v941
      %v963 = vadd.f32 %v840, %v944
      %v964 = vadd.f32 %v841, %v947
      %v965 = vadd.f32 %v842, %v950
      %v966 = vadd.f32 %v843, %v953
      %v967 = vadd.f32 %v844, %v956
      %v968 = vadd.f32 %v845, %v959
      %s969 = scalar_lea.vmem %s4, 320
      %v970 = vld [vmem:[%s969] sm:$0xff]
      %v971 = vld [vmem:[%s969 + $0x8] sm:$0xff]
      %v972 = vld [vmem:[%s969 + $0x10] sm:$0xff]
      %v973 = vld [vmem:[%s969 + $0x18] sm:$0xff]
      %v974 = vld [vmem:[%s969 + $0x20] sm:$0xff]
      %v975 = vld [vmem:[%s969 + $0x28] sm:$0xff]
      %v976 = vld [vmem:[%s969 + $0x30] sm:$0xff]
      %v977 = vld [vmem:[%s969 + $0x38] sm:$0xff]
      %979 = vset.pattern.permute.xlu0 0
      %980 = vperm.xlu0 %979, %v970
      %v981 = vpop.permute.xlu0 %980
      %984 = vset.pattern.permute.xlu0 0
      %985 = vperm.xlu0 %984, %v971
      %v986 = vpop.permute.xlu0 %985
      %989 = vset.pattern.permute.xlu0 0
      %990 = vperm.xlu0 %989, %v972
      %v991 = vpop.permute.xlu0 %990
      %994 = vset.pattern.permute.xlu0 0
      %995 = vperm.xlu0 %994, %v973
      %v996 = vpop.permute.xlu0 %995
      %999 = vset.pattern.permute.xlu0 0
      %1000 = vperm.xlu0 %999, %v974
      %v1001 = vpop.permute.xlu0 %1000
      %1004 = vset.pattern.permute.xlu0 0
      %1005 = vperm.xlu0 %1004, %v975
      %v1006 = vpop.permute.xlu0 %1005
      %1009 = vset.pattern.permute.xlu0 0
      %1010 = vperm.xlu0 %1009, %v976
      %v1011 = vpop.permute.xlu0 %1010
      %1014 = vset.pattern.permute.xlu0 0
      %1015 = vperm.xlu0 %1014, %v977
      %v1016 = vpop.permute.xlu0 %1015
      %v1018 = vmul.f32 %v598, %v981
      %v1019 = vmul.f32 %v597, %v986
      %v1020 = vmul.f32 %v596, %v991
      %v1021 = vmul.f32 %v595, %v996
      %v1022 = vmul.f32 %v594, %v1001
      %v1023 = vmul.f32 %v593, %v1006
      %v1024 = vmul.f32 %v592, %v1011
      %v1025 = vmul.f32 %v599, %v1016
      %s1026 = scalar_lea.vmem %s3, 640
      %v1027 = vld [vmem:[%s1026] sm:$0xff]
      %v1028 = vld [vmem:[%s1026 + $0x8] sm:$0xff]
      %v1029 = vld [vmem:[%s1026 + $0x10] sm:$0xff]
      %v1030 = vld [vmem:[%s1026 + $0x18] sm:$0xff]
      %v1031 = vld [vmem:[%s1026 + $0x20] sm:$0xff]
      %v1032 = vld [vmem:[%s1026 + $0x28] sm:$0xff]
      %v1033 = vld [vmem:[%s1026 + $0x30] sm:$0xff]
      %v1034 = vld [vmem:[%s1026 + $0x38] sm:$0xff]
      %v1035 = vld [vmem:[%s1026 + $0x40] sm:$0xff]
      %v1036 = vld [vmem:[%s1026 + $0x48] sm:$0xff]
      %v1037 = vld [vmem:[%s1026 + $0x50] sm:$0xff]
      %v1038 = vld [vmem:[%s1026 + $0x58] sm:$0xff]
      %v1039 = vld [vmem:[%s1026 + $0x60] sm:$0xff]
      %v1040 = vld [vmem:[%s1026 + $0x68] sm:$0xff]
      %v1041 = vld [vmem:[%s1026 + $0x70] sm:$0xff]
      %v1042 = vld [vmem:[%s1026 + $0x78] sm:$0xff]
      %1043 = vmatpush.msra.mxu0 %v1042
      %1044 = vmatpush.msra.mxu0 %v1041
      %1045 = vmatpush.msra.mxu0 %v1040
      %1046 = vmatpush.msra.mxu0 %v1039
      %1047 = vmatpush.msra.mxu0 %v1038
      %1048 = vmatpush.msra.mxu0 %v1037
      %1049 = vmatpush.msra.mxu0 %v1036
      %1050 = vmatpush.msra.mxu0 %v1035
      %1051 = vmatpush.msra.mxu0 %v1034
      %1052 = vmatpush.msra.mxu0 %v1033
      %1053 = vmatpush.msra.mxu0 %v1032
      %1054 = vmatpush.msra.mxu0 %v1031
      %1055 = vmatpush.msra.mxu0 %v1030
      %1056 = vmatpush.msra.mxu0 %v1029
      %1057 = vmatpush.msra.mxu0 %v1028
      %1058 = vmatpush.msra.mxu0 %v1027
      %1059 = vmatmul.f32.gmra.mxu0 %v1018
      %v1060 = vpop.f32.mrf.mxu0
      %v1061 = vadd.f32 0.0, %v1060
      %1062 = vmatmul.f32.gmra.mxu0 %v1019
      %v1063 = vpop.f32.mrf.mxu0
      %v1064 = vadd.f32 0.0, %v1063
      %1065 = vmatmul.f32.gmra.mxu0 %v1020
      %v1066 = vpop.f32.mrf.mxu0
      %v1067 = vadd.f32 0.0, %v1066
      %1068 = vmatmul.f32.gmra.mxu0 %v1021
      %v1069 = vpop.f32.mrf.mxu0
      %v1070 = vadd.f32 0.0, %v1069
      %1071 = vmatmul.f32.gmra.mxu0 %v1022
      %v1072 = vpop.f32.mrf.mxu0
      %v1073 = vadd.f32 0.0, %v1072
      %1074 = vmatmul.f32.gmra.mxu0 %v1023
      %v1075 = vpop.f32.mrf.mxu0
      %v1076 = vadd.f32 0.0, %v1075
      %1077 = vmatmul.f32.gmra.mxu0 %v1024
      %v1078 = vpop.f32.mrf.mxu0
      %v1079 = vadd.f32 0.0, %v1078
      %1080 = vmatmul.f32.gmra.mxu0 %v1025
      %v1081 = vpop.f32.mrf.mxu0
      %v1082 = vadd.f32 0.0, %v1081
      %1083 = vdwg.mxu0
      %v1084 = vadd.f32 %v961, %v1061
      %v1085 = vadd.f32 %v962, %v1064
      %v1086 = vadd.f32 %v963, %v1067
      %v1087 = vadd.f32 %v964, %v1070
      %v1088 = vadd.f32 %v965, %v1073
      %v1089 = vadd.f32 %v966, %v1076
      %v1090 = vadd.f32 %v967, %v1079
      %v1091 = vadd.f32 %v968, %v1082
      %s1092 = scalar_lea.vmem %s4, 384
      %v1093 = vld [vmem:[%s1092] sm:$0xff]
      %v1094 = vld [vmem:[%s1092 + $0x8] sm:$0xff]
      %v1095 = vld [vmem:[%s1092 + $0x10] sm:$0xff]
      %v1096 = vld [vmem:[%s1092 + $0x18] sm:$0xff]
      %v1097 = vld [vmem:[%s1092 + $0x20] sm:$0xff]
      %v1098 = vld [vmem:[%s1092 + $0x28] sm:$0xff]
      %v1099 = vld [vmem:[%s1092 + $0x30] sm:$0xff]
      %v1100 = vld [vmem:[%s1092 + $0x38] sm:$0xff]
      %1102 = vset.pattern.permute.xlu0 0
      %1103 = vperm.xlu0 %1102, %v1093
      %v1104 = vpop.permute.xlu0 %1103
      %1107 = vset.pattern.permute.xlu0 0
      %1108 = vperm.xlu0 %1107, %v1094
      %v1109 = vpop.permute.xlu0 %1108
      %1112 = vset.pattern.permute.xlu0 0
      %1113 = vperm.xlu0 %1112, %v1095
      %v1114 = vpop.permute.xlu0 %1113
      %1117 = vset.pattern.permute.xlu0 0
      %1118 = vperm.xlu0 %1117, %v1096
      %v1119 = vpop.permute.xlu0 %1118
      %1122 = vset.pattern.permute.xlu0 0
      %1123 = vperm.xlu0 %1122, %v1097
      %v1124 = vpop.permute.xlu0 %1123
      %1127 = vset.pattern.permute.xlu0 0
      %1128 = vperm.xlu0 %1127, %v1098
      %v1129 = vpop.permute.xlu0 %1128
      %1132 = vset.pattern.permute.xlu0 0
      %1133 = vperm.xlu0 %1132, %v1099
      %v1134 = vpop.permute.xlu0 %1133
      %1137 = vset.pattern.permute.xlu0 0
      %1138 = vperm.xlu0 %1137, %v1100
      %v1139 = vpop.permute.xlu0 %1138
      %v1141 = vmul.f32 %v353, %v1104
      %v1142 = vmul.f32 %v352, %v1109
      %v1143 = vmul.f32 %v351, %v1114
      %v1144 = vmul.f32 %v350, %v1119
      %v1145 = vmul.f32 %v349, %v1124
      %v1146 = vmul.f32 %v348, %v1129
      %v1147 = vmul.f32 %v347, %v1134
      %v1148 = vmul.f32 %v354, %v1139
      %s1149 = scalar_lea.vmem %s3, 768
      %v1150 = vld [vmem:[%s1149] sm:$0xff]
      %v1151 = vld [vmem:[%s1149 + $0x8] sm:$0xff]
      %v1152 = vld [vmem:[%s1149 + $0x10] sm:$0xff]
      %v1153 = vld [vmem:[%s1149 + $0x18] sm:$0xff]
      %v1154 = vld [vmem:[%s1149 + $0x20] sm:$0xff]
      %v1155 = vld [vmem:[%s1149 + $0x28] sm:$0xff]
      %v1156 = vld [vmem:[%s1149 + $0x30] sm:$0xff]
      %v1157 = vld [vmem:[%s1149 + $0x38] sm:$0xff]
      %v1158 = vld [vmem:[%s1149 + $0x40] sm:$0xff]
      %v1159 = vld [vmem:[%s1149 + $0x48] sm:$0xff]
      %v1160 = vld [vmem:[%s1149 + $0x50] sm:$0xff]
      %v1161 = vld [vmem:[%s1149 + $0x58] sm:$0xff]
      %v1162 = vld [vmem:[%s1149 + $0x60] sm:$0xff]
      %v1163 = vld [vmem:[%s1149 + $0x68] sm:$0xff]
      %v1164 = vld [vmem:[%s1149 + $0x70] sm:$0xff]
      %v1165 = vld [vmem:[%s1149 + $0x78] sm:$0xff]
      %1166 = vmatpush.msra.mxu0 %v1165
      %1167 = vmatpush.msra.mxu0 %v1164
      %1168 = vmatpush.msra.mxu0 %v1163
      %1169 = vmatpush.msra.mxu0 %v1162
      %1170 = vmatpush.msra.mxu0 %v1161
      %1171 = vmatpush.msra.mxu0 %v1160
      %1172 = vmatpush.msra.mxu0 %v1159
      %1173 = vmatpush.msra.mxu0 %v1158
      %1174 = vmatpush.msra.mxu0 %v1157
      %1175 = vmatpush.msra.mxu0 %v1156
      %1176 = vmatpush.msra.mxu0 %v1155
      %1177 = vmatpush.msra.mxu0 %v1154
      %1178 = vmatpush.msra.mxu0 %v1153
      %1179 = vmatpush.msra.mxu0 %v1152
      %1180 = vmatpush.msra.mxu0 %v1151
      %1181 = vmatpush.msra.mxu0 %v1150
      %1182 = vmatmul.f32.gmra.mxu0 %v1141
      %v1183 = vpop.f32.mrf.mxu0
      %v1184 = vadd.f32 0.0, %v1183
      %1185 = vmatmul.f32.gmra.mxu0 %v1142
      %v1186 = vpop.f32.mrf.mxu0
      %v1187 = vadd.f32 0.0, %v1186
      %1188 = vmatmul.f32.gmra.mxu0 %v1143
      %v1189 = vpop.f32.mrf.mxu0
      %v1190 = vadd.f32 0.0, %v1189
      %1191 = vmatmul.f32.gmra.mxu0 %v1144
      %v1192 = vpop.f32.mrf.mxu0
      %v1193 = vadd.f32 0.0, %v1192
      %1194 = vmatmul.f32.gmra.mxu0 %v1145
      %v1195 = vpop.f32.mrf.mxu0
      %v1196 = vadd.f32 0.0, %v1195
      %1197 = vmatmul.f32.gmra.mxu0 %v1146
      %v1198 = vpop.f32.mrf.mxu0
      %v1199 = vadd.f32 0.0, %v1198
      %1200 = vmatmul.f32.gmra.mxu0 %v1147
      %v1201 = vpop.f32.mrf.mxu0
      %v1202 = vadd.f32 0.0, %v1201
      %1203 = vmatmul.f32.gmra.mxu0 %v1148
      %v1204 = vpop.f32.mrf.mxu0
      %v1205 = vadd.f32 0.0, %v1204
      %1206 = vdwg.mxu0
      %v1207 = vadd.f32 %v1084, %v1184
      %v1208 = vadd.f32 %v1085, %v1187
      %v1209 = vadd.f32 %v1086, %v1190
      %v1210 = vadd.f32 %v1087, %v1193
      %v1211 = vadd.f32 %v1088, %v1196
      %v1212 = vadd.f32 %v1089, %v1199
      %v1213 = vadd.f32 %v1090, %v1202
      %v1214 = vadd.f32 %v1091, %v1205
      %s1215 = scalar_lea.vmem %s4, 448
      %v1216 = vld [vmem:[%s1215] sm:$0xff]
      %v1217 = vld [vmem:[%s1215 + $0x8] sm:$0xff]
      %v1218 = vld [vmem:[%s1215 + $0x10] sm:$0xff]
      %v1219 = vld [vmem:[%s1215 + $0x18] sm:$0xff]
      %v1220 = vld [vmem:[%s1215 + $0x20] sm:$0xff]
      %v1221 = vld [vmem:[%s1215 + $0x28] sm:$0xff]
      %v1222 = vld [vmem:[%s1215 + $0x30] sm:$0xff]
      %v1223 = vld [vmem:[%s1215 + $0x38] sm:$0xff]
      %1225 = vset.pattern.permute.xlu0 0
      %1226 = vperm.xlu0 %1225, %v1216
      %v1227 = vpop.permute.xlu0 %1226
      %1230 = vset.pattern.permute.xlu0 0
      %1231 = vperm.xlu0 %1230, %v1217
      %v1232 = vpop.permute.xlu0 %1231
      %1235 = vset.pattern.permute.xlu0 0
      %1236 = vperm.xlu0 %1235, %v1218
      %v1237 = vpop.permute.xlu0 %1236
      %1240 = vset.pattern.permute.xlu0 0
      %1241 = vperm.xlu0 %1240, %v1219
      %v1242 = vpop.permute.xlu0 %1241
      %1245 = vset.pattern.permute.xlu0 0
      %1246 = vperm.xlu0 %1245, %v1220
      %v1247 = vpop.permute.xlu0 %1246
      %1250 = vset.pattern.permute.xlu0 0
      %1251 = vperm.xlu0 %1250, %v1221
      %v1252 = vpop.permute.xlu0 %1251
      %1255 = vset.pattern.permute.xlu0 0
      %1256 = vperm.xlu0 %1255, %v1222
      %v1257 = vpop.permute.xlu0 %1256
      %1260 = vset.pattern.permute.xlu0 0
      %1261 = vperm.xlu0 %1260, %v1223
      %v1262 = vpop.permute.xlu0 %1261
      %v1264 = vmul.f32 %v329, %v1227
      %v1265 = vmul.f32 %v330, %v1232
      %v1266 = vmul.f32 %v331, %v1237
      %v1267 = vmul.f32 %v332, %v1242
      %v1268 = vmul.f32 %v333, %v1247
      %v1269 = vmul.f32 %v334, %v1252
      %v1270 = vmul.f32 %v335, %v1257
      %v1271 = vmul.f32 %v328, %v1262
      %s1272 = scalar_lea.vmem %s3, 896
      %v1273 = vld [vmem:[%s1272] sm:$0xff]
      %v1274 = vld [vmem:[%s1272 + $0x8] sm:$0xff]
      %v1275 = vld [vmem:[%s1272 + $0x10] sm:$0xff]
      %v1276 = vld [vmem:[%s1272 + $0x18] sm:$0xff]
      %v1277 = vld [vmem:[%s1272 + $0x20] sm:$0xff]
      %v1278 = vld [vmem:[%s1272 + $0x28] sm:$0xff]
      %v1279 = vld [vmem:[%s1272 + $0x30] sm:$0xff]
      %v1280 = vld [vmem:[%s1272 + $0x38] sm:$0xff]
      %v1281 = vld [vmem:[%s1272 + $0x40] sm:$0xff]
      %v1282 = vld [vmem:[%s1272 + $0x48] sm:$0xff]
      %v1283 = vld [vmem:[%s1272 + $0x50] sm:$0xff]
      %v1284 = vld [vmem:[%s1272 + $0x58] sm:$0xff]
      %v1285 = vld [vmem:[%s1272 + $0x60] sm:$0xff]
      %v1286 = vld [vmem:[%s1272 + $0x68] sm:$0xff]
      %v1287 = vld [vmem:[%s1272 + $0x70] sm:$0xff]
      %v1288 = vld [vmem:[%s1272 + $0x78] sm:$0xff]
      %1289 = vmatpush.msra.mxu0 %v1288
      %1290 = vmatpush.msra.mxu0 %v1287
      %1291 = vmatpush.msra.mxu0 %v1286
      %1292 = vmatpush.msra.mxu0 %v1285
      %1293 = vmatpush.msra.mxu0 %v1284
      %1294 = vmatpush.msra.mxu0 %v1283
      %1295 = vmatpush.msra.mxu0 %v1282
      %1296 = vmatpush.msra.mxu0 %v1281
      %1297 = vmatpush.msra.mxu0 %v1280
      %1298 = vmatpush.msra.mxu0 %v1279
      %1299 = vmatpush.msra.mxu0 %v1278
      %1300 = vmatpush.msra.mxu0 %v1277
      %1301 = vmatpush.msra.mxu0 %v1276
      %1302 = vmatpush.msra.mxu0 %v1275
      %1303 = vmatpush.msra.mxu0 %v1274
      %1304 = vmatpush.msra.mxu0 %v1273
      %1305 = vmatmul.f32.gmra.mxu0 %v1264
      %v1306 = vpop.f32.mrf.mxu0
      %v1307 = vadd.f32 0.0, %v1306
      %1308 = vmatmul.f32.gmra.mxu0 %v1265
      %v1309 = vpop.f32.mrf.mxu0
      %v1310 = vadd.f32 0.0, %v1309
      %1311 = vmatmul.f32.gmra.mxu0 %v1266
      %v1312 = vpop.f32.mrf.mxu0
      %v1313 = vadd.f32 0.0, %v1312
      %1314 = vmatmul.f32.gmra.mxu0 %v1267
      %v1315 = vpop.f32.mrf.mxu0
      %v1316 = vadd.f32 0.0, %v1315
      %1317 = vmatmul.f32.gmra.mxu0 %v1268
      %v1318 = vpop.f32.mrf.mxu0
      %v1319 = vadd.f32 0.0, %v1318
      %1320 = vmatmul.f32.gmra.mxu0 %v1269
      %v1321 = vpop.f32.mrf.mxu0
      %v1322 = vadd.f32 0.0, %v1321
      %1323 = vmatmul.f32.gmra.mxu0 %v1270
      %v1324 = vpop.f32.mrf.mxu0
      %v1325 = vadd.f32 0.0, %v1324
      %1326 = vmatmul.f32.gmra.mxu0 %v1271
      %v1327 = vpop.f32.mrf.mxu0
      %v1328 = vadd.f32 0.0, %v1327
      %1329 = vdwg.mxu0
      %v1330 = vadd.f32 %v1207, %v1307
      %v1331 = vadd.f32 %v1208, %v1310
      %v1332 = vadd.f32 %v1209, %v1313
      %v1333 = vadd.f32 %v1210, %v1316
      %v1334 = vadd.f32 %v1211, %v1319
      %v1335 = vadd.f32 %v1212, %v1322
      %v1336 = vadd.f32 %v1213, %v1325
      %v1337 = vadd.f32 %v1214, %v1328
      %s1338 = scalar_lea.vmem %s4, 512
      %v1339 = vld [vmem:[%s1338] sm:$0xff]
      %v1340 = vld [vmem:[%s1338 + $0x8] sm:$0xff]
      %v1341 = vld [vmem:[%s1338 + $0x10] sm:$0xff]
      %v1342 = vld [vmem:[%s1338 + $0x18] sm:$0xff]
      %v1343 = vld [vmem:[%s1338 + $0x20] sm:$0xff]
      %v1344 = vld [vmem:[%s1338 + $0x28] sm:$0xff]
      %v1345 = vld [vmem:[%s1338 + $0x30] sm:$0xff]
      %v1346 = vld [vmem:[%s1338 + $0x38] sm:$0xff]
      %1348 = vset.pattern.permute.xlu0 0
      %1349 = vperm.xlu0 %1348, %v1339
      %v1350 = vpop.permute.xlu0 %1349
      %1353 = vset.pattern.permute.xlu0 0
      %1354 = vperm.xlu0 %1353, %v1340
      %v1355 = vpop.permute.xlu0 %1354
      %1358 = vset.pattern.permute.xlu0 0
      %1359 = vperm.xlu0 %1358, %v1341
      %v1360 = vpop.permute.xlu0 %1359
      %1363 = vset.pattern.permute.xlu0 0
      %1364 = vperm.xlu0 %1363, %v1342
      %v1365 = vpop.permute.xlu0 %1364
      %1368 = vset.pattern.permute.xlu0 0
      %1369 = vperm.xlu0 %1368, %v1343
      %v1370 = vpop.permute.xlu0 %1369
      %1373 = vset.pattern.permute.xlu0 0
      %1374 = vperm.xlu0 %1373, %v1344
      %v1375 = vpop.permute.xlu0 %1374
      %1378 = vset.pattern.permute.xlu0 0
      %1379 = vperm.xlu0 %1378, %v1345
      %v1380 = vpop.permute.xlu0 %1379
      %1383 = vset.pattern.permute.xlu0 0
      %1384 = vperm.xlu0 %1383, %v1346
      %v1385 = vpop.permute.xlu0 %1384
      %v1387 = vmul.f32 %v597, %v1350
      %v1388 = vmul.f32 %v596, %v1355
      %v1389 = vmul.f32 %v595, %v1360
      %v1390 = vmul.f32 %v594, %v1365
      %v1391 = vmul.f32 %v593, %v1370
      %v1392 = vmul.f32 %v592, %v1375
      %v1393 = vmul.f32 %v599, %v1380
      %v1394 = vmul.f32 %v598, %v1385
      %s1395 = scalar_lea.vmem %s3, 1024
      %v1396 = vld [vmem:[%s1395] sm:$0xff]
      %v1397 = vld [vmem:[%s1395 + $0x8] sm:$0xff]
      %v1398 = vld [vmem:[%s1395 + $0x10] sm:$0xff]
      %v1399 = vld [vmem:[%s1395 + $0x18] sm:$0xff]
      %v1400 = vld [vmem:[%s1395 + $0x20] sm:$0xff]
      %v1401 = vld [vmem:[%s1395 + $0x28] sm:$0xff]
      %v1402 = vld [vmem:[%s1395 + $0x30] sm:$0xff]
      %v1403 = vld [vmem:[%s1395 + $0x38] sm:$0xff]
      %v1404 = vld [vmem:[%s1395 + $0x40] sm:$0xff]
      %v1405 = vld [vmem:[%s1395 + $0x48] sm:$0xff]
      %v1406 = vld [vmem:[%s1395 + $0x50] sm:$0xff]
      %v1407 = vld [vmem:[%s1395 + $0x58] sm:$0xff]
      %v1408 = vld [vmem:[%s1395 + $0x60] sm:$0xff]
      %v1409 = vld [vmem:[%s1395 + $0x68] sm:$0xff]
      %v1410 = vld [vmem:[%s1395 + $0x70] sm:$0xff]
      %v1411 = vld [vmem:[%s1395 + $0x78] sm:$0xff]
      %1412 = vmatpush.msra.mxu0 %v1411
      %1413 = vmatpush.msra.mxu0 %v1410
      %1414 = vmatpush.msra.mxu0 %v1409
      %1415 = vmatpush.msra.mxu0 %v1408
      %1416 = vmatpush.msra.mxu0 %v1407
      %1417 = vmatpush.msra.mxu0 %v1406
      %1418 = vmatpush.msra.mxu0 %v1405
      %1419 = vmatpush.msra.mxu0 %v1404
      %1420 = vmatpush.msra.mxu0 %v1403
      %1421 = vmatpush.msra.mxu0 %v1402
      %1422 = vmatpush.msra.mxu0 %v1401
      %1423 = vmatpush.msra.mxu0 %v1400
      %1424 = vmatpush.msra.mxu0 %v1399
      %1425 = vmatpush.msra.mxu0 %v1398
      %1426 = vmatpush.msra.mxu0 %v1397
      %1427 = vmatpush.msra.mxu0 %v1396
      %1428 = vmatmul.f32.gmra.mxu0 %v1387
      %v1429 = vpop.f32.mrf.mxu0
      %v1430 = vadd.f32 0.0, %v1429
      %1431 = vmatmul.f32.gmra.mxu0 %v1388
      %v1432 = vpop.f32.mrf.mxu0
      %v1433 = vadd.f32 0.0, %v1432
      %1434 = vmatmul.f32.gmra.mxu0 %v1389
      %v1435 = vpop.f32.mrf.mxu0
      %v1436 = vadd.f32 0.0, %v1435
      %1437 = vmatmul.f32.gmra.mxu0 %v1390
      %v1438 = vpop.f32.mrf.mxu0
      %v1439 = vadd.f32 0.0, %v1438
      %1440 = vmatmul.f32.gmra.mxu0 %v1391
      %v1441 = vpop.f32.mrf.mxu0
      %v1442 = vadd.f32 0.0, %v1441
      %1443 = vmatmul.f32.gmra.mxu0 %v1392
      %v1444 = vpop.f32.mrf.mxu0
      %v1445 = vadd.f32 0.0, %v1444
      %1446 = vmatmul.f32.gmra.mxu0 %v1393
      %v1447 = vpop.f32.mrf.mxu0
      %v1448 = vadd.f32 0.0, %v1447
      %1449 = vmatmul.f32.gmra.mxu0 %v1394
      %v1450 = vpop.f32.mrf.mxu0
      %v1451 = vadd.f32 0.0, %v1450
      %1452 = vdwg.mxu0
      %v1453 = vadd.f32 %v1330, %v1430
      %v1454 = vadd.f32 %v1331, %v1433
      %v1455 = vadd.f32 %v1332, %v1436
      %v1456 = vadd.f32 %v1333, %v1439
      %v1457 = vadd.f32 %v1334, %v1442
      %v1458 = vadd.f32 %v1335, %v1445
      %v1459 = vadd.f32 %v1336, %v1448
      %v1460 = vadd.f32 %v1337, %v1451
      %1461 = vst [vmem:[%s289] sm:$0xff] %v1453
      %1462 = vst [vmem:[%s289 + $0x8] sm:$0xff] %v1454
      %1463 = vst [vmem:[%s289 + $0x10] sm:$0xff] %v1455
      %1464 = vst [vmem:[%s289 + $0x18] sm:$0xff] %v1456
      %1465 = vst [vmem:[%s289 + $0x20] sm:$0xff] %v1457
      %1466 = vst [vmem:[%s289 + $0x28] sm:$0xff] %v1458
      %1467 = vst [vmem:[%s289 + $0x30] sm:$0xff] %v1459
      %1468 = vst [vmem:[%s289 + $0x38] sm:$0xff] %v1460
      %v1469 = vadd.f32 %v1453, %v1454
      %v1470 = vadd.f32 %v1469, %v1455
      %v1471 = vadd.f32 %v1470, %v1456
      %v1472 = vadd.f32 %v1471, %v1457
      %v1473 = vadd.f32 %v1472, %v1458
      %v1474 = vadd.f32 %v1473, %v1459
      %v1475 = vadd.f32 %v1474, %v1460
      %v1476 = vrot.slane %v1475, 4
      %v1477 = vadd.f32 %v1475, %v1476
      %v1478 = vrot.slane %v1477, 2
      %v1479 = vadd.f32 %v1477, %v1478
      %v1480 = vrot.slane %v1479, 1
      %v1481 = vadd.f32 %v1479, %v1480
      %1482 = vst [vmem:[%s292] sm:$0x1] %v1481
      %v1483 = vmul.f32 %v1453, %v1453
      %v1484 = vmul.f32 %v1454, %v1454
      %v1485 = vmul.f32 %v1455, %v1455
      %v1486 = vmul.f32 %v1456, %v1456
      %v1487 = vmul.f32 %v1457, %v1457
      %v1488 = vmul.f32 %v1458, %v1458
      %v1489 = vmul.f32 %v1459, %v1459
      %v1490 = vmul.f32 %v1460, %v1460
      %v1491 = vadd.f32 %v1483, %v1484
      %v1492 = vadd.f32 %v1491, %v1485
      %v1493 = vadd.f32 %v1492, %v1486
      %v1494 = vadd.f32 %v1493, %v1487
      %v1495 = vadd.f32 %v1494, %v1488
      %v1496 = vadd.f32 %v1495, %v1489
      %v1497 = vadd.f32 %v1496, %v1490
      %v1498 = vrot.slane %v1497, 4
      %v1499 = vadd.f32 %v1497, %v1498
      %v1500 = vrot.slane %v1499, 2
      %v1501 = vadd.f32 %v1499, %v1500
      %v1502 = vrot.slane %v1501, 1
      %v1503 = vadd.f32 %v1501, %v1502
      %1504 = vst [vmem:[%s295] sm:$0x1] %v1503
      %p1505 = scmp.lt.s32.totalorder %s19, 1
      %s1506 = scalar_select %p1505, %s19, 1
      %s1507 = smul.addr %s1506, 8
      %s1508 = smul.addr %s1507, 8
      %s1509 = scalar_lea.vmem %s5, %s1508
      %p1510 = scmp.lt.s32.totalorder %s19, 1
      %s1511 = scalar_select %p1510, %s19, 1
      %s1512 = scalar_lea.vmem %s6, %s1511
      %p1513 = scmp.lt.s32.totalorder %s19, 1
      %s1514 = scalar_select %p1513, %s19, 1
      %s1515 = scalar_lea.vmem %s7, %s1514
      // Predicated region
      $region41: #{new_bottleneck_forward.7} parent=39 // pred_check
        %p1516 = pneg %p147
      $region42: #{new_bottleneck_forward.7} parent=39 // pred_check_branch
        %1518 = sbr.rel (%p1516) target = $region44
      $region43: #{new_bottleneck_forward.7} parent=39 // pred_region
        _
      $region44: #{new_bottleneck_forward.7} parent=39 // pred_fallthru
        _
      // Predicated region
      $region45: #{new_bottleneck_forward.7} parent=39 // pred_check
        %p1519 = pneg %p173
      $region46: #{new_bottleneck_forward.7} parent=39 // pred_check_branch
        %1521 = sbr.rel (%p1519) target = $region48
      $region47: #{new_bottleneck_forward.7} parent=39 // pred_region
        _
      $region48: #{new_bottleneck_forward.7} parent=39 // pred_fallthru
        _
      // Predicated region
      $region49: #{new_bottleneck_forward.7} parent=39 // pred_check
        %p1522 = pneg %p199
      $region50: #{new_bottleneck_forward.7} parent=39 // pred_check_branch
        %1524 = sbr.rel (%p1522) target = $region52
      $region51: #{new_bottleneck_forward.7} parent=39 // pred_region
        _
      $region52: #{new_bottleneck_forward.7} parent=39 // pred_fallthru
        _
    $region40: #{new_bottleneck_forward.7} parent=5 // pred_fallthru
      _
    %p1525 = scmp.le.s32.totalorder 2, %s14
    // Predicated region
    $region53: #{new_bottleneck_forward.7} parent=5 // pred_check
      %p1526 = pneg %p1525
    $region54: #{new_bottleneck_forward.7} parent=5 // pred_check_branch
      %1528 = sbr.rel (%p1526) target = $region56
    $region55: #{new_bottleneck_forward.7} parent=5 // pred_region
      %s1529 = ssub.s32 %s14, 2
      // Predicated region
      $region57: #{new_bottleneck_forward.7} parent=55 // pred_check
        %p1530 = pneg %p153
      $region58: #{new_bottleneck_forward.7} parent=55 // pred_check_branch
        %1532 = sbr.rel (%p1530) target = $region60
      $region59: #{new_bottleneck_forward.7} parent=55 // pred_region
        %p1533 = scmp.lt.s32.totalorder %s20, 1
        %s1534 = scalar_select %p1533, %s20, 1
        %s1535 = smul.addr %s1534, 8
        %s1536 = smul.addr %s1535, 8
        %s1537 = scalar_lea.vmem %s5, %s1536
      $region60: #{new_bottleneck_forward.7} parent=55 // pred_fallthru
        _
      // Predicated region
      $region61: #{new_bottleneck_forward.7} parent=55 // pred_check
        %p1538 = pneg %p179
      $region62: #{new_bottleneck_forward.7} parent=55 // pred_check_branch
        %1540 = sbr.rel (%p1538) target = $region64
      $region63: #{new_bottleneck_forward.7} parent=55 // pred_region
        %p1541 = scmp.lt.s32.totalorder %s20, 1
        %s1542 = scalar_select %p1541, %s20, 1
        %s1543 = scalar_lea.vmem %s6, %s1542
      $region64: #{new_bottleneck_forward.7} parent=55 // pred_fallthru
        _
      // Predicated region
      $region65: #{new_bottleneck_forward.7} parent=55 // pred_check
        %p1544 = pneg %p205
      $region66: #{new_bottleneck_forward.7} parent=55 // pred_check_branch
        %1546 = sbr.rel (%p1544) target = $region68
      $region67: #{new_bottleneck_forward.7} parent=55 // pred_region
        %p1547 = scmp.lt.s32.totalorder %s20, 1
        %s1548 = scalar_select %p1547, %s20, 1
        %s1549 = scalar_lea.vmem %s7, %s1548
      $region68: #{new_bottleneck_forward.7} parent=55 // pred_fallthru
        _
    $region56: #{new_bottleneck_forward.7} parent=5 // pred_fallthru
      _
  $region6: #{new_bottleneck_forward.7} parent=0 // loop_footer
    %s18 = sadd.s32 1, %s14
  $region7: #{new_bottleneck_forward.7} parent=0 // loop_footer_branch
    %13 = sbr.rel target = $region3
  $region8: #{new_bottleneck_forward.7} parent=0 // loop_exit
    _

</llo_original>
